<compile_context>
chip_gen: v6e
topology: v6e:2x2x1
jax: 0.10.0
libtpu: 0.0.40
codegen_flags: <defaults>
</compile_context>

<pallas_src>
import functools

import jax
import jax.numpy as jnp
from jax import lax
from jax.experimental import pallas as pl
from jax.experimental.pallas import tpu as pltpu

LANE = 128
SUBLANE = 8


def _round_up(x, m):
    return (x + m - 1) // m * m


def _pick_time_block(T, Bp, d_max, Hp, budget_bytes=8 * 1024 * 1024):
    """Largest K (<=16) whose double-buffered blocks + scratch fit a VMEM budget
    that is comfortably under the default scoped limit on every TPU generation."""
    G = 4 * Hp
    weight_bytes = 2 * 2 * (d_max * G + Hp * G)              # bf16 weights (x2 buffers)
    for K in (16, 8, 4, 2, 1):
        need = weight_bytes + 4 * (2 * K * Bp * d_max        # x block (f32, dbl-buffered)
                                   + 2 * K * Bp * Hp         # out block
                                   + K * Bp * G)             # gates_x scratch
        if need <= budget_bytes:
            return max(1, min(K, T))
    return 1


# ---------------------------------------------------------------------------
# Kernels
# ---------------------------------------------------------------------------

def _cell_update(gates, c, Hp):
    """LSTM cell from pre-activations; lane-aligned gate order (i, f, o, g)."""
    sig = jax.nn.sigmoid(gates[:, :3 * Hp])       # one contiguous sigmoid for i,f,o
    i_g = sig[:, 0 * Hp:1 * Hp]
    f_g = sig[:, 1 * Hp:2 * Hp]
    o_g = sig[:, 2 * Hp:3 * Hp]
    g_g = jnp.tanh(gates[:, 3 * Hp:4 * Hp])
    c_new = f_g * c + i_g * g_g
    h_new = o_g * jnp.tanh(c_new)
    return h_new, c_new


def _lstm_layer_seq_kernel(x_ref, wih_ref, whh_ref, b_ref, out_ref,
                           h_sc, c_sc, gx_sc):
    """Non-top layer: fused input projection + recurrence over K timesteps.
    Writes the full hidden sequence block (consumed by the next layer)."""
    tb = pl.program_id(0)

    @pl.when(tb == 0)
    def _():
        h_sc[...] = jnp.zeros_like(h_sc)
        c_sc[...] = jnp.zeros_like(c_sc)

    Bp, Hp = h_sc.shape
    K = x_ref.shape[0] // Bp

    # gates_x for all K timesteps of this block: one MXU matmul
    # (bf16 operands, f32 accumulation), bias folded in.
    gx_sc[...] = (jnp.dot(x_ref[...].astype(jnp.bfloat16), wih_ref[...],
                          preferred_element_type=jnp.float32)
                  + b_ref[...])

    def step(t, carry):
        h, c = carry
        r0 = pl.multiple_of(t * Bp, Bp)
        gates = gx_sc[pl.ds(r0, Bp), :] + jnp.dot(
            h.astype(jnp.bfloat16), whh_ref[...],
            preferred_element_type=jnp.float32)
        h, c = _cell_update(gates, c, Hp)
        out_ref[pl.ds(r0, Bp), :] = h.astype(out_ref.dtype)
        return h, c

    h, c = lax.fori_loop(0, K, step, (h_sc[...], c_sc[...]),
                         unroll=min(K, 8))
    h_sc[...] = h
    c_sc[...] = c


def _lstm_layer_final_kernel(x_ref, wih_ref, whh_ref, b_ref, fcw_ref, fcb_ref,
                             out_ref, h_sc, c_sc, gx_sc, *, r_last):
    """Top layer: fused projection + recurrence + final Linear.  Only the
    (Bp, Op) FC result is ever written to HBM.  `r_last` (static) is the
    in-block index of the true last timestep (handles T padded up to K)."""
    tb = pl.program_id(0)

    @pl.when(tb == 0)
    def _():
        h_sc[...] = jnp.zeros_like(h_sc)
        c_sc[...] = jnp.zeros_like(c_sc)

    Bp, Hp = h_sc.shape
    K = x_ref.shape[0] // Bp

    gx_sc[...] = (jnp.dot(x_ref[...].astype(jnp.bfloat16), wih_ref[...],
                          preferred_element_type=jnp.float32)
                  + b_ref[...])

    def step(t, carry):
        h, c, h_at = carry
        r0 = pl.multiple_of(t * Bp, Bp)
        gates = gx_sc[pl.ds(r0, Bp), :] + jnp.dot(
            h.astype(jnp.bfloat16), whh_ref[...],
            preferred_element_type=jnp.float32)
        h, c = _cell_update(gates, c, Hp)
        if r_last == K - 1:                 # static: no time padding
            h_at = h
        else:                               # capture h at the true last step
            h_at = jnp.where(t == r_last, h, h_at)
        return h, c, h_at

    h, c, h_at = lax.fori_loop(0, K, step,
                               (h_sc[...], c_sc[...], h_sc[...]),
                               unroll=min(K, 8))
    h_sc[...] = h
    c_sc[...] = c

    @pl.when(tb == pl.num_programs(0) - 1)
    def _():
        out_ref[...] = (jnp.dot(h_at.astype(jnp.bfloat16), fcw_ref[...],
                                preferred_element_type=jnp.float32)
                        + fcb_ref[...]).astype(out_ref.dtype)


# ---------------------------------------------------------------------------
# pallas_call wrappers
# ---------------------------------------------------------------------------

def lstm_layer_seq(x2d, w_ih_t, w_hh_t, b, *, K, Bp):
    """x2d: (Tp*Bp, Din) f32 -> hidden sequence (Tp*Bp, Hp) f32."""
    R, Din = x2d.shape
    Hp, G = w_hh_t.shape
    n_blk = R // (K * Bp)
    return pl.pallas_call(
        _lstm_layer_seq_kernel,
        out_shape=jax.ShapeDtypeStruct((R, Hp), jnp.float32),
        grid_spec=pltpu.PrefetchScalarGridSpec(
            num_scalar_prefetch=0,
            grid=(n_blk,),
            in_specs=[
                pl.BlockSpec((K * Bp, Din), lambda i: (i, 0)),
                pl.BlockSpec((Din, G), lambda i: (0, 0)),
                pl.BlockSpec((Hp, G), lambda i: (0, 0)),
                pl.BlockSpec((1, G), lambda i: (0, 0)),
            ],
            out_specs=pl.BlockSpec((K * Bp, Hp), lambda i: (i, 0)),
            scratch_shapes=[
                pltpu.VMEM((Bp, Hp), jnp.float32),        # h state
                pltpu.VMEM((Bp, Hp), jnp.float32),        # c state
                pltpu.VMEM((K * Bp, G), jnp.float32),     # gates_x for the block
            ]),
        compiler_params=pltpu.CompilerParams(
            dimension_semantics=("arbitrary",)),           # serial recurrence over time
    )(x2d, w_ih_t, w_hh_t, b)


def lstm_layer_final(x2d, w_ih_t, w_hh_t, b, fc_w_t, fc_b, *, K, Bp, r_last):
    """Top layer: x2d (Tp*Bp, Din) -> fc(h at true last step) of shape (Bp, Op)."""
    R, Din = x2d.shape
    Hp, G = w_hh_t.shape
    Op = fc_w_t.shape[1]
    n_blk = R // (K * Bp)
    kernel = functools.partial(_lstm_layer_final_kernel, r_last=r_last)
    return pl.pallas_call(
        kernel,
        out_shape=jax.ShapeDtypeStruct((Bp, Op), jnp.float32),
        grid_spec=pltpu.PrefetchScalarGridSpec(
            num_scalar_prefetch=0,
            grid=(n_blk,),
            in_specs=[
                pl.BlockSpec((K * Bp, Din), lambda i: (i, 0)),
                pl.BlockSpec((Din, G), lambda i: (0, 0)),
                pl.BlockSpec((Hp, G), lambda i: (0, 0)),
                pl.BlockSpec((1, G), lambda i: (0, 0)),
                pl.BlockSpec((Hp, Op), lambda i: (0, 0)),
                pl.BlockSpec((1, Op), lambda i: (0, 0)),
            ],
            out_specs=pl.BlockSpec((Bp, Op), lambda i: (0, 0)),
            scratch_shapes=[
                pltpu.VMEM((Bp, Hp), jnp.float32),
                pltpu.VMEM((Bp, Hp), jnp.float32),
                pltpu.VMEM((K * Bp, G), jnp.float32),
            ]),
        compiler_params=pltpu.CompilerParams(
            dimension_semantics=("arbitrary",)),
    )(x2d, w_ih_t, w_hh_t, b, fc_w_t, fc_b)


# ---------------------------------------------------------------------------
# Parameters (PyTorch layout -> padded / permuted / bf16 kernel layout)
# ---------------------------------------------------------------------------

def init_raw_params(key, input_size, hidden_size, num_layers, output_size):
    """PyTorch-style params: U(-1/sqrt(H), 1/sqrt(H)), gate order (i,f,g,o)."""
    bound = 1.0 / jnp.sqrt(jnp.float32(hidden_size))
    layers = []
    for layer in range(num_layers):
        d_in = input_size if layer == 0 else hidden_size
        key, k1, k2, k3, k4 = jax.random.split(key, 5)
        layers.append({
            "w_ih": jax.random.uniform(k1, (4 * hidden_size, d_in),
                                       jnp.float32, -bound, bound),
            "w_hh": jax.random.uniform(k2, (4 * hidden_size, hidden_size),
                                       jnp.float32, -bound, bound),
            "b_ih": jax.random.uniform(k3, (4 * hidden_size,),
                                       jnp.float32, -bound, bound),
            "b_hh": jax.random.uniform(k4, (4 * hidden_size,),
                                       jnp.float32, -bound, bound),
        })
    key, k5, k6 = jax.random.split(key, 3)
    fc_w = jax.random.uniform(k5, (output_size, hidden_size),
                              jnp.float32, -bound, bound)
    fc_b = jax.random.uniform(k6, (output_size,), jnp.float32, -bound, bound)
    return {"layers": layers, "fc_w": fc_w, "fc_b": fc_b}


def _prep_gate_matrix(w, H, Hp):
    """Torch layout (4H, D), gate rows (i,f,g,o) -> (D, 4*Hp) with zero-lane-padded
    gate column blocks in order (i,f,o,g)."""
    wi, wf, wg, wo = jnp.split(w, 4, axis=0)              # each (H, D)
    w4 = jnp.stack([wi, wf, wo, wg], axis=0)              # (4, H, D)
    w4 = jnp.pad(w4, ((0, 0), (0, Hp - H), (0, 0)))       # (4, Hp, D)
    D = w4.shape[2]
    return jnp.transpose(w4, (2, 0, 1)).reshape(D, 4 * Hp)


def prepare_params(raw, hidden_size):
    """Pre-transpose, gate-permute, lane-pad and bf16-cast the weights.
    Zero padding guarantees padded hidden lanes never affect real outputs."""
    H = hidden_size
    Hp = _round_up(H, LANE)
    layers = []
    for li, lp in enumerate(raw["layers"]):
        w_ih_t = _prep_gate_matrix(lp["w_ih"], H, Hp)                  # (Din, 4Hp)
        if li > 0:                                                     # input is padded h
            w_ih_t = jnp.pad(w_ih_t, ((0, Hp - H), (0, 0)))            # (Hp, 4Hp)
        w_hh_t = _prep_gate_matrix(lp["w_hh"], H, Hp)
        w_hh_t = jnp.pad(w_hh_t, ((0, Hp - H), (0, 0)))                # (Hp, 4Hp)
        b = _prep_gate_matrix((lp["b_ih"] + lp["b_hh"]).reshape(4 * H, 1), H, Hp)
        layers.append({
            "w_ih_t": w_ih_t.astype(jnp.bfloat16),     # bf16 MXU operand
            "w_hh_t": w_hh_t.astype(jnp.bfloat16),
            "b": b.astype(jnp.float32),                # folded into f32 gates_x
        })
    O = raw["fc_w"].shape[0]
    Op = _round_up(O, LANE)
    fc_w_t = jnp.pad(raw["fc_w"].T, ((0, Hp - H), (0, Op - O)))        # (Hp, Op)
    fc_b = jnp.pad(raw["fc_b"].reshape(1, -1), ((0, 0), (0, Op - O)))  # (1, Op)
    return {"layers": layers,
            "fc_w_t": fc_w_t.astype(jnp.bfloat16),
            "fc_b": fc_b.astype(jnp.float32)}


# ---------------------------------------------------------------------------
# Forward
# ---------------------------------------------------------------------------

@functools.partial(jax.jit, static_argnames=("output_size",))
def lstm_forward(params, x_btd, output_size):
    """x_btd: (B, T, input_size) -> (B, output_size). Matches PyTorch forward."""
    x = jnp.transpose(x_btd, (1, 0, 2)).astype(jnp.float32)   # (T, B, Din)
    T, B, Din = x.shape
    Hp = params["layers"][0]["w_hh_t"].shape[0]
    Bp = _round_up(B, SUBLANE)                                 # sublane-dense batch
    K = _pick_time_block(T, Bp, max(Din, Hp), Hp)              # VMEM-budgeted time block
    Tp = _round_up(T, K)                                       # pad T up to a K multiple
    r_last = (T - 1) % K
    xp = jnp.pad(x, ((0, Tp - T), (0, Bp - B), (0, 0)))        # zero-pad time & batch
    seq2d = xp.reshape(Tp * Bp, Din)                           # 2-D lane/sublane-dense layout

    n_layers = len(params["layers"])
    out_p = None
    # TODO(synk): on v6e/v7x, store the inter-layer hidden sequence in bf16 to halve
    # HBM traffic, and add a parallel batch-tile grid axis for v7x's 2nd TensorCore.
    for li, lp in enumerate(params["layers"]):
        if li < n_layers - 1:
            seq2d = lstm_layer_seq(seq2d, lp["w_ih_t"], lp["w_hh_t"], lp["b"],
                                   K=K, Bp=Bp)                 # (Tp*Bp, Hp)
        else:
            out_p = lstm_layer_final(seq2d, lp["w_ih_t"], lp["w_hh_t"], lp["b"],
                                     params["fc_w_t"], params["fc_b"],
                                     K=K, Bp=Bp, r_last=r_last)  # (Bp, Op)
    return out_p[:B, :output_size]


# ---------------------------------------------------------------------------
# Pure-JAX reference (unpadded, f32, PyTorch semantics)
# ---------------------------------------------------------------------------

def lstm_forward_ref(raw, x_btd, hidden_size):
    x = jnp.transpose(x_btd, (1, 0, 2)).astype(jnp.float32)
    T, B, _ = x.shape
    H = hidden_size
    for lp in raw["layers"]:
        w_ih_t = lp["w_ih"].T
        w_hh_t = lp["w_hh"].T
        b = (lp["b_ih"] + lp["b_hh"]).reshape(1, 4 * H)
        h = jnp.zeros((B, H), jnp.float32)
        c = jnp.zeros((B, H), jnp.float32)
        outs = []
        for t in range(T):
            gates = x[t] @ w_ih_t + h @ w_hh_t + b
            i = jax.nn.sigmoid(gates[:, 0 * H:1 * H])
            f = jax.nn.sigmoid(gates[:, 1 * H:2 * H])
            g = jnp.tanh(gates[:, 2 * H:3 * H])
            o = jax.nn.sigmoid(gates[:, 3 * H:4 * H])
            c = f * c + i * g
            h = o * jnp.tanh(c)
            outs.append(h)
        x = jnp.stack(outs, axis=0)
    return x[-1] @ raw["fc_w"].T + raw["fc_b"].reshape(1, -1)


# ---------------------------------------------------------------------------

if __name__ == "__main__":
    batch, seq_len = 2, 8
    input_size, hidden_size, num_layers, output_size = 16, 32, 2, 8

    key = jax.random.PRNGKey(0)
    key, xk = jax.random.split(key)
    x = jax.random.normal(xk, (batch, seq_len, input_size), jnp.float32)

    raw = init_raw_params(key, input_size, hidden_size, num_layers, output_size)
    params = prepare_params(raw, hidden_size)

    out = lstm_forward(params, x, output_size=output_size)
    out = jax.block_until_ready(out)

    ref = lstm_forward_ref(raw, x, hidden_size)
    assert out.shape == (batch, output_size)
    # bf16 MXU operands (f32 accumulation / f32 cell math) -> relaxed tolerance
    # vs. the exact-f32 reference.
    assert jnp.allclose(out, ref, atol=5e-2, rtol=5e-2), (out, ref)

    print("KERNEL_OK")
</pallas_src>

<mosaic_0001>
module attributes {stable_mosaic.version = 11 : i64} {
  func.func @_lstm_layer_final_kernel(%arg0: i32, %arg1: memref<64x128xf32, #tpu.memory_space<vmem>>, %arg2: memref<128x512xbf16, #tpu.memory_space<vmem>>, %arg3: memref<128x512xbf16, #tpu.memory_space<vmem>>, %arg4: memref<1x512xf32, #tpu.memory_space<vmem>>, %arg5: memref<128x128xbf16, #tpu.memory_space<vmem>>, %arg6: memref<1x128xf32, #tpu.memory_space<vmem>>, %arg7: memref<8x128xf32, #tpu.memory_space<vmem>>, %arg8: memref<8x128xf32, #tpu.memory_space<vmem>>, %arg9: memref<8x128xf32, #tpu.memory_space<vmem>>, %arg10: memref<64x512xf32, #tpu.memory_space<vmem>>) attributes {dimension_semantics = [#tpu.dimension_semantics<arbitrary>], iteration_bounds = array<i64: 1>, scalar_prefetch = 0 : i64, scratch_operands = 3 : i64, tpu.core_type = #tpu.core_type<tc>, window_params = [{transform_indices = @transform_0, window_bounds = array<i64: 64, 128>}, {pipeline_mode = #tpu.pipeline_mode<synchronous>, transform_indices = @transform_1, window_bounds = array<i64: 128, 512>}, {pipeline_mode = #tpu.pipeline_mode<synchronous>, transform_indices = @transform_2, window_bounds = array<i64: 128, 512>}, {pipeline_mode = #tpu.pipeline_mode<synchronous>, transform_indices = @transform_3, window_bounds = array<i64: 1, 512>}, {pipeline_mode = #tpu.pipeline_mode<synchronous>, transform_indices = @transform_4, window_bounds = array<i64: 128, 128>}, {pipeline_mode = #tpu.pipeline_mode<synchronous>, transform_indices = @transform_5, window_bounds = array<i64: 1, 128>}, {pipeline_mode = #tpu.pipeline_mode<synchronous>, transform_indices = @transform_6, window_bounds = array<i64: 8, 128>}]} {
    %c0_i32 = arith.constant 0 : i32
    %0 = arith.cmpi eq, %arg0, %c0_i32 : i32
    %1 = arith.extui %0 : i1 to i32
    %c0_i32_0 = arith.constant 0 : i32
    %2 = arith.cmpi ne, %1, %c0_i32_0 : i32
    scf.if %2 {
      %cst_69 = arith.constant 0.000000e+00 : f32
      %211 = vector.broadcast %cst_69 : f32 to vector<8x128xf32>
      %c0_70 = arith.constant 0 : index
      %c0_71 = arith.constant 0 : index
      %212 = vector.load %arg8[%c0_70, %c0_71] : memref<8x128xf32, #tpu.memory_space<vmem>>, vector<8x128xf32>
      tpu.vector_store %arg8[%c0_70, %c0_71], %211 {strides = array<i32>} : memref<8x128xf32, #tpu.memory_space<vmem>>, vector<8x128xf32>,
      %cst_72 = arith.constant 0.000000e+00 : f32
      %213 = vector.broadcast %cst_72 : f32 to vector<8x128xf32>
      %c0_73 = arith.constant 0 : index
      %c0_74 = arith.constant 0 : index
      %214 = vector.load %arg9[%c0_73, %c0_74] : memref<8x128xf32, #tpu.memory_space<vmem>>, vector<8x128xf32>
      tpu.vector_store %arg9[%c0_73, %c0_74], %213 {strides = array<i32>} : memref<8x128xf32, #tpu.memory_space<vmem>>, vector<8x128xf32>,
    } else {
    }
    %c0 = arith.constant 0 : index
    %c0_1 = arith.constant 0 : index
    %3 = vector.load %arg1[%c0, %c0_1] : memref<64x128xf32, #tpu.memory_space<vmem>>, vector<64x128xf32>
    %4 = arith.truncf %3 : vector<64x128xf32> to vector<64x128xbf16>
    %c0_2 = arith.constant 0 : index
    %c0_3 = arith.constant 0 : index
    %5 = vector.load %arg2[%c0_2, %c0_3] : memref<128x512xbf16, #tpu.memory_space<vmem>>, vector<128x512xbf16>
    %cst = arith.constant dense<0.000000e+00> : vector<64x512xf32>
    %6 = tpu.matmul %4, %5, %cst {dimension_numbers = #tpu.dot_dimension_numbers<[1], [0], [0], [1], [0, 0, 1, 1], [], []>} : vector<64x128xbf16>, vector<128x512xbf16>, vector<64x512xf32> -> vector<64x512xf32>
    %c0_4 = arith.constant 0 : index
    %c0_5 = arith.constant 0 : index
    %7 = vector.load %arg4[%c0_4, %c0_5] : memref<1x512xf32, #tpu.memory_space<vmem>>, vector<1x512xf32>
    %8 = vector.broadcast %7 : vector<1x512xf32> to vector<64x512xf32>
    %9 = arith.addf %6, %8 : vector<64x512xf32>
    %c0_6 = arith.constant 0 : index
    %c0_7 = arith.constant 0 : index
    %10 = vector.load %arg10[%c0_6, %c0_7] : memref<64x512xf32, #tpu.memory_space<vmem>>, vector<64x512xf32>
    tpu.vector_store %arg10[%c0_6, %c0_7], %9 {strides = array<i32>} : memref<64x512xf32, #tpu.memory_space<vmem>>, vector<64x512xf32>,
    %c0_8 = arith.constant 0 : index
    %c0_9 = arith.constant 0 : index
    %11 = vector.load %arg8[%c0_8, %c0_9] : memref<8x128xf32, #tpu.memory_space<vmem>>, vector<8x128xf32>
    %c0_10 = arith.constant 0 : index
    %c0_11 = arith.constant 0 : index
    %12 = vector.load %arg9[%c0_10, %c0_11] : memref<8x128xf32, #tpu.memory_space<vmem>>, vector<8x128xf32>
    %c0_12 = arith.constant 0 : index
    %c0_13 = arith.constant 0 : index
    %13 = vector.load %arg8[%c0_12, %c0_13] : memref<8x128xf32, #tpu.memory_space<vmem>>, vector<8x128xf32>
    %c0_i32_14 = arith.constant 0 : i32
    %c8_i32 = arith.constant 8 : i32
    %14 = arith.muli %c0_i32_14, %c8_i32 : i32
    %15 = tpu.assume_multiple %14, 8 : i32
    %16 = arith.index_cast %15 : i32 to index
    %c0_15 = arith.constant 0 : index
    %17 = vector.load %arg10[%16, %c0_15] : memref<64x512xf32, #tpu.memory_space<vmem>>, vector<8x512xf32>
    %18 = arith.truncf %11 : vector<8x128xf32> to vector<8x128xbf16>
    %c0_16 = arith.constant 0 : index
    %c0_17 = arith.constant 0 : index
    %19 = vector.load %arg3[%c0_16, %c0_17] : memref<128x512xbf16, #tpu.memory_space<vmem>>, vector<128x512xbf16>
    %cst_18 = arith.constant dense<0.000000e+00> : vector<8x512xf32>
    %20 = tpu.matmul %18, %19, %cst_18 {dimension_numbers = #tpu.dot_dimension_numbers<[1], [0], [0], [1], [0, 0, 1, 1], [], []>} : vector<8x128xbf16>, vector<128x512xbf16>, vector<8x512xf32> -> vector<8x512xf32>
    %21 = arith.addf %17, %20 : vector<8x512xf32>
    %22 = vector.extract_strided_slice %21 {offsets = [0, 0], sizes = [8, 384], strides = [1, 1]} : vector<8x512xf32> to vector<8x384xf32>
    %23 = arith.negf %22 : vector<8x384xf32>
    %24 = math.exp %23 : vector<8x384xf32>
    %cst_19 = arith.constant 1.000000e+00 : f32
    %25 = vector.broadcast %cst_19 : f32 to vector<8x384xf32>
    %26 = arith.addf %25, %24 : vector<8x384xf32>
    %27 = arith.divf %25, %26 : vector<8x384xf32>
    %28 = vector.extract_strided_slice %27 {offsets = [0, 0], sizes = [8, 128], strides = [1, 1]} : vector<8x384xf32> to vector<8x128xf32>
    %29 = vector.extract_strided_slice %27 {offsets = [0, 128], sizes = [8, 128], strides = [1, 1]} : vector<8x384xf32> to vector<8x128xf32>
    %30 = vector.extract_strided_slice %27 {offsets = [0, 256], sizes = [8, 128], strides = [1, 1]} : vector<8x384xf32> to vector<8x128xf32>
    %31 = vector.extract_strided_slice %21 {offsets = [0, 384], sizes = [8, 128], strides = [1, 1]} : vector<8x512xf32> to vector<8x128xf32>
    %32 = math.tanh %31 : vector<8x128xf32>
    %33 = arith.mulf %29, %12 : vector<8x128xf32>
    %34 = arith.mulf %28, %32 : vector<8x128xf32>
    %35 = arith.addf %33, %34 : vector<8x128xf32>
    %36 = math.tanh %35 : vector<8x128xf32>
    %37 = arith.mulf %30, %36 : vector<8x128xf32>
    %c1_i32 = arith.constant 1 : i32
    %c8_i32_20 = arith.constant 8 : i32
    %38 = arith.muli %c1_i32, %c8_i32_20 : i32
    %39 = tpu.assume_multiple %38, 8 : i32
    %40 = arith.index_cast %39 : i32 to index
    %c0_21 = arith.constant 0 : index
    %41 = vector.load %arg10[%40, %c0_21] : memref<64x512xf32, #tpu.memory_space<vmem>>, vector<8x512xf32>
    %42 = arith.truncf %37 : vector<8x128xf32> to vector<8x128xbf16>
    %c0_22 = arith.constant 0 : index
    %c0_23 = arith.constant 0 : index
    %43 = vector.load %arg3[%c0_22, %c0_23] : memref<128x512xbf16, #tpu.memory_space<vmem>>, vector<128x512xbf16>
    %cst_24 = arith.constant dense<0.000000e+00> : vector<8x512xf32>
    %44 = tpu.matmul %42, %43, %cst_24 {dimension_numbers = #tpu.dot_dimension_numbers<[1], [0], [0], [1], [0, 0, 1, 1], [], []>} : vector<8x128xbf16>, vector<128x512xbf16>, vector<8x512xf32> -> vector<8x512xf32>
    %45 = arith.addf %41, %44 : vector<8x512xf32>
    %46 = vector.extract_strided_slice %45 {offsets = [0, 0], sizes = [8, 384], strides = [1, 1]} : vector<8x512xf32> to vector<8x384xf32>
    %47 = arith.negf %46 : vector<8x384xf32>
    %48 = math.exp %47 : vector<8x384xf32>
    %cst_25 = arith.constant 1.000000e+00 : f32
    %49 = vector.broadcast %cst_25 : f32 to vector<8x384xf32>
    %50 = arith.addf %49, %48 : vector<8x384xf32>
    %51 = arith.divf %49, %50 : vector<8x384xf32>
    %52 = vector.extract_strided_slice %51 {offsets = [0, 0], sizes = [8, 128], strides = [1, 1]} : vector<8x384xf32> to vector<8x128xf32>
    %53 = vector.extract_strided_slice %51 {offsets = [0, 128], sizes = [8, 128], strides = [1, 1]} : vector<8x384xf32> to vector<8x128xf32>
    %54 = vector.extract_strided_slice %51 {offsets = [0, 256], sizes = [8, 128], strides = [1, 1]} : vector<8x384xf32> to vector<8x128xf32>
    %55 = vector.extract_strided_slice %45 {offsets = [0, 384], sizes = [8, 128], strides = [1, 1]} : vector<8x512xf32> to vector<8x128xf32>
    %56 = math.tanh %55 : vector<8x128xf32>
    %57 = arith.mulf %53, %35 : vector<8x128xf32>
    %58 = arith.mulf %52, %56 : vector<8x128xf32>
    %59 = arith.addf %57, %58 : vector<8x128xf32>
    %60 = math.tanh %59 : vector<8x128xf32>
    %61 = arith.mulf %54, %60 : vector<8x128xf32>
    %c2_i32 = arith.constant 2 : i32
    %c8_i32_26 = arith.constant 8 : i32
    %62 = arith.muli %c2_i32, %c8_i32_26 : i32
    %63 = tpu.assume_multiple %62, 8 : i32
    %64 = arith.index_cast %63 : i32 to index
    %c0_27 = arith.constant 0 : index
    %65 = vector.load %arg10[%64, %c0_27] : memref<64x512xf32, #tpu.memory_space<vmem>>, vector<8x512xf32>
    %66 = arith.truncf %61 : vector<8x128xf32> to vector<8x128xbf16>
    %c0_28 = arith.constant 0 : index
    %c0_29 = arith.constant 0 : index
    %67 = vector.load %arg3[%c0_28, %c0_29] : memref<128x512xbf16, #tpu.memory_space<vmem>>, vector<128x512xbf16>
    %cst_30 = arith.constant dense<0.000000e+00> : vector<8x512xf32>
    %68 = tpu.matmul %66, %67, %cst_30 {dimension_numbers = #tpu.dot_dimension_numbers<[1], [0], [0], [1], [0, 0, 1, 1], [], []>} : vector<8x128xbf16>, vector<128x512xbf16>, vector<8x512xf32> -> vector<8x512xf32>
    %69 = arith.addf %65, %68 : vector<8x512xf32>
    %70 = vector.extract_strided_slice %69 {offsets = [0, 0], sizes = [8, 384], strides = [1, 1]} : vector<8x512xf32> to vector<8x384xf32>
    %71 = arith.negf %70 : vector<8x384xf32>
    %72 = math.exp %71 : vector<8x384xf32>
    %cst_31 = arith.constant 1.000000e+00 : f32
    %73 = vector.broadcast %cst_31 : f32 to vector<8x384xf32>
    %74 = arith.addf %73, %72 : vector<8x384xf32>
    %75 = arith.divf %73, %74 : vector<8x384xf32>
    %76 = vector.extract_strided_slice %75 {offsets = [0, 0], sizes = [8, 128], strides = [1, 1]} : vector<8x384xf32> to vector<8x128xf32>
    %77 = vector.extract_strided_slice %75 {offsets = [0, 128], sizes = [8, 128], strides = [1, 1]} : vector<8x384xf32> to vector<8x128xf32>
    %78 = vector.extract_strided_slice %75 {offsets = [0, 256], sizes = [8, 128], strides = [1, 1]} : vector<8x384xf32> to vector<8x128xf32>
    %79 = vector.extract_strided_slice %69 {offsets = [0, 384], sizes = [8, 128], strides = [1, 1]} : vector<8x512xf32> to vector<8x128xf32>
    %80 = math.tanh %79 : vector<8x128xf32>
    %81 = arith.mulf %77, %59 : vector<8x128xf32>
    %82 = arith.mulf %76, %80 : vector<8x128xf32>
    %83 = arith.addf %81, %82 : vector<8x128xf32>
    %84 = math.tanh %83 : vector<8x128xf32>
    %85 = arith.mulf %78, %84 : vector<8x128xf32>
    %c3_i32 = arith.constant 3 : i32
    %c8_i32_32 = arith.constant 8 : i32
    %86 = arith.muli %c3_i32, %c8_i32_32 : i32
    %87 = tpu.assume_multiple %86, 8 : i32
    %88 = arith.index_cast %87 : i32 to index
    %c0_33 = arith.constant 0 : index
    %89 = vector.load %arg10[%88, %c0_33] : memref<64x512xf32, #tpu.memory_space<vmem>>, vector<8x512xf32>
    %90 = arith.truncf %85 : vector<8x128xf32> to vector<8x128xbf16>
    %c0_34 = arith.constant 0 : index
    %c0_35 = arith.constant 0 : index
    %91 = vector.load %arg3[%c0_34, %c0_35] : memref<128x512xbf16, #tpu.memory_space<vmem>>, vector<128x512xbf16>
    %cst_36 = arith.constant dense<0.000000e+00> : vector<8x512xf32>
    %92 = tpu.matmul %90, %91, %cst_36 {dimension_numbers = #tpu.dot_dimension_numbers<[1], [0], [0], [1], [0, 0, 1, 1], [], []>} : vector<8x128xbf16>, vector<128x512xbf16>, vector<8x512xf32> -> vector<8x512xf32>
    %93 = arith.addf %89, %92 : vector<8x512xf32>
    %94 = vector.extract_strided_slice %93 {offsets = [0, 0], sizes = [8, 384], strides = [1, 1]} : vector<8x512xf32> to vector<8x384xf32>
    %95 = arith.negf %94 : vector<8x384xf32>
    %96 = math.exp %95 : vector<8x384xf32>
    %cst_37 = arith.constant 1.000000e+00 : f32
    %97 = vector.broadcast %cst_37 : f32 to vector<8x384xf32>
    %98 = arith.addf %97, %96 : vector<8x384xf32>
    %99 = arith.divf %97, %98 : vector<8x384xf32>
    %100 = vector.extract_strided_slice %99 {offsets = [0, 0], sizes = [8, 128], strides = [1, 1]} : vector<8x384xf32> to vector<8x128xf32>
    %101 = vector.extract_strided_slice %99 {offsets = [0, 128], sizes = [8, 128], strides = [1, 1]} : vector<8x384xf32> to vector<8x128xf32>
    %102 = vector.extract_strided_slice %99 {offsets = [0, 256], sizes = [8, 128], strides = [1, 1]} : vector<8x384xf32> to vector<8x128xf32>
    %103 = vector.extract_strided_slice %93 {offsets = [0, 384], sizes = [8, 128], strides = [1, 1]} : vector<8x512xf32> to vector<8x128xf32>
    %104 = math.tanh %103 : vector<8x128xf32>
    %105 = arith.mulf %101, %83 : vector<8x128xf32>
    %106 = arith.mulf %100, %104 : vector<8x128xf32>
    %107 = arith.addf %105, %106 : vector<8x128xf32>
    %108 = math.tanh %107 : vector<8x128xf32>
    %109 = arith.mulf %102, %108 : vector<8x128xf32>
    %c4_i32 = arith.constant 4 : i32
    %c8_i32_38 = arith.constant 8 : i32
    %110 = arith.muli %c4_i32, %c8_i32_38 : i32
    %111 = tpu.assume_multiple %110, 8 : i32
    %112 = arith.index_cast %111 : i32 to index
    %c0_39 = arith.constant 0 : index
    %113 = vector.load %arg10[%112, %c0_39] : memref<64x512xf32, #tpu.memory_space<vmem>>, vector<8x512xf32>
    %114 = arith.truncf %109 : vector<8x128xf32> to vector<8x128xbf16>
    %c0_40 = arith.constant 0 : index
    %c0_41 = arith.constant 0 : index
    %115 = vector.load %arg3[%c0_40, %c0_41] : memref<128x512xbf16, #tpu.memory_space<vmem>>, vector<128x512xbf16>
    %cst_42 = arith.constant dense<0.000000e+00> : vector<8x512xf32>
    %116 = tpu.matmul %114, %115, %cst_42 {dimension_numbers = #tpu.dot_dimension_numbers<[1], [0], [0], [1], [0, 0, 1, 1], [], []>} : vector<8x128xbf16>, vector<128x512xbf16>, vector<8x512xf32> -> vector<8x512xf32>
    %117 = arith.addf %113, %116 : vector<8x512xf32>
    %118 = vector.extract_strided_slice %117 {offsets = [0, 0], sizes = [8, 384], strides = [1, 1]} : vector<8x512xf32> to vector<8x384xf32>
    %119 = arith.negf %118 : vector<8x384xf32>
    %120 = math.exp %119 : vector<8x384xf32>
    %cst_43 = arith.constant 1.000000e+00 : f32
    %121 = vector.broadcast %cst_43 : f32 to vector<8x384xf32>
    %122 = arith.addf %121, %120 : vector<8x384xf32>
    %123 = arith.divf %121, %122 : vector<8x384xf32>
    %124 = vector.extract_strided_slice %123 {offsets = [0, 0], sizes = [8, 128], strides = [1, 1]} : vector<8x384xf32> to vector<8x128xf32>
    %125 = vector.extract_strided_slice %123 {offsets = [0, 128], sizes = [8, 128], strides = [1, 1]} : vector<8x384xf32> to vector<8x128xf32>
    %126 = vector.extract_strided_slice %123 {offsets = [0, 256], sizes = [8, 128], strides = [1, 1]} : vector<8x384xf32> to vector<8x128xf32>
    %127 = vector.extract_strided_slice %117 {offsets = [0, 384], sizes = [8, 128], strides = [1, 1]} : vector<8x512xf32> to vector<8x128xf32>
    %128 = math.tanh %127 : vector<8x128xf32>
    %129 = arith.mulf %125, %107 : vector<8x128xf32>
    %130 = arith.mulf %124, %128 : vector<8x128xf32>
    %131 = arith.addf %129, %130 : vector<8x128xf32>
    %132 = math.tanh %131 : vector<8x128xf32>
    %133 = arith.mulf %126, %132 : vector<8x128xf32>
    %c5_i32 = arith.constant 5 : i32
    %c8_i32_44 = arith.constant 8 : i32
    %134 = arith.muli %c5_i32, %c8_i32_44 : i32
    %135 = tpu.assume_multiple %134, 8 : i32
    %136 = arith.index_cast %135 : i32 to index
    %c0_45 = arith.constant 0 : index
    %137 = vector.load %arg10[%136, %c0_45] : memref<64x512xf32, #tpu.memory_space<vmem>>, vector<8x512xf32>
    %138 = arith.truncf %133 : vector<8x128xf32> to vector<8x128xbf16>
    %c0_46 = arith.constant 0 : index
    %c0_47 = arith.constant 0 : index
    %139 = vector.load %arg3[%c0_46, %c0_47] : memref<128x512xbf16, #tpu.memory_space<vmem>>, vector<128x512xbf16>
    %cst_48 = arith.constant dense<0.000000e+00> : vector<8x512xf32>
    %140 = tpu.matmul %138, %139, %cst_48 {dimension_numbers = #tpu.dot_dimension_numbers<[1], [0], [0], [1], [0, 0, 1, 1], [], []>} : vector<8x128xbf16>, vector<128x512xbf16>, vector<8x512xf32> -> vector<8x512xf32>
    %141 = arith.addf %137, %140 : vector<8x512xf32>
    %142 = vector.extract_strided_slice %141 {offsets = [0, 0], sizes = [8, 384], strides = [1, 1]} : vector<8x512xf32> to vector<8x384xf32>
    %143 = arith.negf %142 : vector<8x384xf32>
    %144 = math.exp %143 : vector<8x384xf32>
    %cst_49 = arith.constant 1.000000e+00 : f32
    %145 = vector.broadcast %cst_49 : f32 to vector<8x384xf32>
    %146 = arith.addf %145, %144 : vector<8x384xf32>
    %147 = arith.divf %145, %146 : vector<8x384xf32>
    %148 = vector.extract_strided_slice %147 {offsets = [0, 0], sizes = [8, 128], strides = [1, 1]} : vector<8x384xf32> to vector<8x128xf32>
    %149 = vector.extract_strided_slice %147 {offsets = [0, 128], sizes = [8, 128], strides = [1, 1]} : vector<8x384xf32> to vector<8x128xf32>
    %150 = vector.extract_strided_slice %147 {offsets = [0, 256], sizes = [8, 128], strides = [1, 1]} : vector<8x384xf32> to vector<8x128xf32>
    %151 = vector.extract_strided_slice %141 {offsets = [0, 384], sizes = [8, 128], strides = [1, 1]} : vector<8x512xf32> to vector<8x128xf32>
    %152 = math.tanh %151 : vector<8x128xf32>
    %153 = arith.mulf %149, %131 : vector<8x128xf32>
    %154 = arith.mulf %148, %152 : vector<8x128xf32>
    %155 = arith.addf %153, %154 : vector<8x128xf32>
    %156 = math.tanh %155 : vector<8x128xf32>
    %157 = arith.mulf %150, %156 : vector<8x128xf32>
    %c6_i32 = arith.constant 6 : i32
    %c8_i32_50 = arith.constant 8 : i32
    %158 = arith.muli %c6_i32, %c8_i32_50 : i32
    %159 = tpu.assume_multiple %158, 8 : i32
    %160 = arith.index_cast %159 : i32 to index
    %c0_51 = arith.constant 0 : index
    %161 = vector.load %arg10[%160, %c0_51] : memref<64x512xf32, #tpu.memory_space<vmem>>, vector<8x512xf32>
    %162 = arith.truncf %157 : vector<8x128xf32> to vector<8x128xbf16>
    %c0_52 = arith.constant 0 : index
    %c0_53 = arith.constant 0 : index
    %163 = vector.load %arg3[%c0_52, %c0_53] : memref<128x512xbf16, #tpu.memory_space<vmem>>, vector<128x512xbf16>
    %cst_54 = arith.constant dense<0.000000e+00> : vector<8x512xf32>
    %164 = tpu.matmul %162, %163, %cst_54 {dimension_numbers = #tpu.dot_dimension_numbers<[1], [0], [0], [1], [0, 0, 1, 1], [], []>} : vector<8x128xbf16>, vector<128x512xbf16>, vector<8x512xf32> -> vector<8x512xf32>
    %165 = arith.addf %161, %164 : vector<8x512xf32>
    %166 = vector.extract_strided_slice %165 {offsets = [0, 0], sizes = [8, 384], strides = [1, 1]} : vector<8x512xf32> to vector<8x384xf32>
    %167 = arith.negf %166 : vector<8x384xf32>
    %168 = math.exp %167 : vector<8x384xf32>
    %cst_55 = arith.constant 1.000000e+00 : f32
    %169 = vector.broadcast %cst_55 : f32 to vector<8x384xf32>
    %170 = arith.addf %169, %168 : vector<8x384xf32>
    %171 = arith.divf %169, %170 : vector<8x384xf32>
    %172 = vector.extract_strided_slice %171 {offsets = [0, 0], sizes = [8, 128], strides = [1, 1]} : vector<8x384xf32> to vector<8x128xf32>
    %173 = vector.extract_strided_slice %171 {offsets = [0, 128], sizes = [8, 128], strides = [1, 1]} : vector<8x384xf32> to vector<8x128xf32>
    %174 = vector.extract_strided_slice %171 {offsets = [0, 256], sizes = [8, 128], strides = [1, 1]} : vector<8x384xf32> to vector<8x128xf32>
    %175 = vector.extract_strided_slice %165 {offsets = [0, 384], sizes = [8, 128], strides = [1, 1]} : vector<8x512xf32> to vector<8x128xf32>
    %176 = math.tanh %175 : vector<8x128xf32>
    %177 = arith.mulf %173, %155 : vector<8x128xf32>
    %178 = arith.mulf %172, %176 : vector<8x128xf32>
    %179 = arith.addf %177, %178 : vector<8x128xf32>
    %180 = math.tanh %179 : vector<8x128xf32>
    %181 = arith.mulf %174, %180 : vector<8x128xf32>
    %c7_i32 = arith.constant 7 : i32
    %c8_i32_56 = arith.constant 8 : i32
    %182 = arith.muli %c7_i32, %c8_i32_56 : i32
    %183 = tpu.assume_multiple %182, 8 : i32
    %184 = arith.index_cast %183 : i32 to index
    %c0_57 = arith.constant 0 : index
    %185 = vector.load %arg10[%184, %c0_57] : memref<64x512xf32, #tpu.memory_space<vmem>>, vector<8x512xf32>
    %186 = arith.truncf %181 : vector<8x128xf32> to vector<8x128xbf16>
    %c0_58 = arith.constant 0 : index
    %c0_59 = arith.constant 0 : index
    %187 = vector.load %arg3[%c0_58, %c0_59] : memref<128x512xbf16, #tpu.memory_space<vmem>>, vector<128x512xbf16>
    %cst_60 = arith.constant dense<0.000000e+00> : vector<8x512xf32>
    %188 = tpu.matmul %186, %187, %cst_60 {dimension_numbers = #tpu.dot_dimension_numbers<[1], [0], [0], [1], [0, 0, 1, 1], [], []>} : vector<8x128xbf16>, vector<128x512xbf16>, vector<8x512xf32> -> vector<8x512xf32>
    %189 = arith.addf %185, %188 : vector<8x512xf32>
    %190 = vector.extract_strided_slice %189 {offsets = [0, 0], sizes = [8, 384], strides = [1, 1]} : vector<8x512xf32> to vector<8x384xf32>
    %191 = arith.negf %190 : vector<8x384xf32>
    %192 = math.exp %191 : vector<8x384xf32>
    %cst_61 = arith.constant 1.000000e+00 : f32
    %193 = vector.broadcast %cst_61 : f32 to vector<8x384xf32>
    %194 = arith.addf %193, %192 : vector<8x384xf32>
    %195 = arith.divf %193, %194 : vector<8x384xf32>
    %196 = vector.extract_strided_slice %195 {offsets = [0, 0], sizes = [8, 128], strides = [1, 1]} : vector<8x384xf32> to vector<8x128xf32>
    %197 = vector.extract_strided_slice %195 {offsets = [0, 128], sizes = [8, 128], strides = [1, 1]} : vector<8x384xf32> to vector<8x128xf32>
    %198 = vector.extract_strided_slice %195 {offsets = [0, 256], sizes = [8, 128], strides = [1, 1]} : vector<8x384xf32> to vector<8x128xf32>
    %199 = vector.extract_strided_slice %189 {offsets = [0, 384], sizes = [8, 128], strides = [1, 1]} : vector<8x512xf32> to vector<8x128xf32>
    %200 = math.tanh %199 : vector<8x128xf32>
    %201 = arith.mulf %197, %179 : vector<8x128xf32>
    %202 = arith.mulf %196, %200 : vector<8x128xf32>
    %203 = arith.addf %201, %202 : vector<8x128xf32>
    %204 = math.tanh %203 : vector<8x128xf32>
    %205 = arith.mulf %198, %204 : vector<8x128xf32>
    %c8_i32_62 = arith.constant 8 : i32
    %c0_63 = arith.constant 0 : index
    %c0_64 = arith.constant 0 : index
    %206 = vector.load %arg8[%c0_63, %c0_64] : memref<8x128xf32, #tpu.memory_space<vmem>>, vector<8x128xf32>
    tpu.vector_store %arg8[%c0_63, %c0_64], %205 {strides = array<i32>} : memref<8x128xf32, #tpu.memory_space<vmem>>, vector<8x128xf32>,
    %c0_65 = arith.constant 0 : index
    %c0_66 = arith.constant 0 : index
    %207 = vector.load %arg9[%c0_65, %c0_66] : memref<8x128xf32, #tpu.memory_space<vmem>>, vector<8x128xf32>
    tpu.vector_store %arg9[%c0_65, %c0_66], %203 {strides = array<i32>} : memref<8x128xf32, #tpu.memory_space<vmem>>, vector<8x128xf32>,
    %c0_i32_67 = arith.constant 0 : i32
    %208 = arith.cmpi eq, %arg0, %c0_i32_67 : i32
    %209 = arith.extui %208 : i1 to i32
    %c0_i32_68 = arith.constant 0 : i32
    %210 = arith.cmpi ne, %209, %c0_i32_68 : i32
    scf.if %210 {
      %211 = arith.truncf %205 : vector<8x128xf32> to vector<8x128xbf16>
      %c0_69 = arith.constant 0 : index
      %c0_70 = arith.constant 0 : index
      %212 = vector.load %arg5[%c0_69, %c0_70] : memref<128x128xbf16, #tpu.memory_space<vmem>>, vector<128x128xbf16>
      %cst_71 = arith.constant dense<0.000000e+00> : vector<8x128xf32>
      %213 = tpu.matmul %211, %212, %cst_71 {dimension_numbers = #tpu.dot_dimension_numbers<[1], [0], [0], [1], [0, 0, 1, 1], [], []>} : vector<8x128xbf16>, vector<128x128xbf16>, vector<8x128xf32> -> vector<8x128xf32>
      %c0_72 = arith.constant 0 : index
      %c0_73 = arith.constant 0 : index
      %214 = vector.load %arg6[%c0_72, %c0_73] : memref<1x128xf32, #tpu.memory_space<vmem>>, vector<1x128xf32>
      %215 = vector.broadcast %214 : vector<1x128xf32> to vector<8x128xf32>
      %216 = arith.addf %213, %215 : vector<8x128xf32>
      %c0_74 = arith.constant 0 : index
      %c0_75 = arith.constant 0 : index
      %217 = vector.load %arg7[%c0_74, %c0_75] : memref<8x128xf32, #tpu.memory_space<vmem>>, vector<8x128xf32>
      tpu.vector_store %arg7[%c0_74, %c0_75], %216 {strides = array<i32>} : memref<8x128xf32, #tpu.memory_space<vmem>>, vector<8x128xf32>,
    } else {
    }
    return
  }
  func.func @transform_0(%arg0: i32) -> (i32, i32) {
    %c0_i32 = arith.constant 0 : i32
    %c0_i32_0 = arith.constant 0 : i32
    return %arg0, %c0_i32 : i32, i32
  }
  func.func @transform_1(%arg0: i32) -> (i32, i32) {
    %c0_i32 = arith.constant 0 : i32
    %c0_i32_0 = arith.constant 0 : i32
    %c0_i32_1 = arith.constant 0 : i32
    return %c0_i32, %c0_i32_0 : i32, i32
  }
  func.func @transform_2(%arg0: i32) -> (i32, i32) {
    %c0_i32 = arith.constant 0 : i32
    %c0_i32_0 = arith.constant 0 : i32
    %c0_i32_1 = arith.constant 0 : i32
    return %c0_i32, %c0_i32_0 : i32, i32
  }
  func.func @transform_3(%arg0: i32) -> (i32, i32) {
    %c0_i32 = arith.constant 0 : i32
    %c0_i32_0 = arith.constant 0 : i32
    %c0_i32_1 = arith.constant 0 : i32
    return %c0_i32, %c0_i32_0 : i32, i32
  }
  func.func @transform_4(%arg0: i32) -> (i32, i32) {
    %c0_i32 = arith.constant 0 : i32
    %c0_i32_0 = arith.constant 0 : i32
    %c0_i32_1 = arith.constant 0 : i32
    return %c0_i32, %c0_i32_0 : i32, i32
  }
  func.func @transform_5(%arg0: i32) -> (i32, i32) {
    %c0_i32 = arith.constant 0 : i32
    %c0_i32_0 = arith.constant 0 : i32
    %c0_i32_1 = arith.constant 0 : i32
    return %c0_i32, %c0_i32_0 : i32, i32
  }
  func.func @transform_6(%arg0: i32) -> (i32, i32) {
    %c0_i32 = arith.constant 0 : i32
    %c0_i32_0 = arith.constant 0 : i32
    %c0_i32_1 = arith.constant 0 : i32
    return %c0_i32, %c0_i32_0 : i32, i32
  }
}

module attributes {stable_mosaic.version = 11 : i64} {
  func.func @_lstm_layer_seq_kernel(%arg0: i32, %arg1: memref<64x16xf32, #tpu.memory_space<vmem>>, %arg2: memref<16x512xbf16, #tpu.memory_space<vmem>>, %arg3: memref<128x512xbf16, #tpu.memory_space<vmem>>, %arg4: memref<1x512xf32, #tpu.memory_space<vmem>>, %arg5: memref<64x128xf32, #tpu.memory_space<vmem>>, %arg6: memref<8x128xf32, #tpu.memory_space<vmem>>, %arg7: memref<8x128xf32, #tpu.memory_space<vmem>>, %arg8: memref<64x512xf32, #tpu.memory_space<vmem>>) attributes {dimension_semantics = [#tpu.dimension_semantics<arbitrary>], iteration_bounds = array<i64: 1>, scalar_prefetch = 0 : i64, scratch_operands = 3 : i64, tpu.core_type = #tpu.core_type<tc>, window_params = [{transform_indices = @transform_0, window_bounds = array<i64: 64, 16>}, {pipeline_mode = #tpu.pipeline_mode<synchronous>, transform_indices = @transform_1, window_bounds = array<i64: 16, 512>}, {pipeline_mode = #tpu.pipeline_mode<synchronous>, transform_indices = @transform_2, window_bounds = array<i64: 128, 512>}, {pipeline_mode = #tpu.pipeline_mode<synchronous>, transform_indices = @transform_3, window_bounds = array<i64: 1, 512>}, {transform_indices = @transform_4, window_bounds = array<i64: 64, 128>}]} {
    %c0_i32 = arith.constant 0 : i32
    %0 = arith.cmpi eq, %arg0, %c0_i32 : i32
    %1 = arith.extui %0 : i1 to i32
    %c0_i32_0 = arith.constant 0 : i32
    %2 = arith.cmpi ne, %1, %c0_i32_0 : i32
    scf.if %2 {
      %cst_73 = arith.constant 0.000000e+00 : f32
      %223 = vector.broadcast %cst_73 : f32 to vector<8x128xf32>
      %c0_74 = arith.constant 0 : index
      %c0_75 = arith.constant 0 : index
      %224 = vector.load %arg6[%c0_74, %c0_75] : memref<8x128xf32, #tpu.memory_space<vmem>>, vector<8x128xf32>
      tpu.vector_store %arg6[%c0_74, %c0_75], %223 {strides = array<i32>} : memref<8x128xf32, #tpu.memory_space<vmem>>, vector<8x128xf32>,
      %cst_76 = arith.constant 0.000000e+00 : f32
      %225 = vector.broadcast %cst_76 : f32 to vector<8x128xf32>
      %c0_77 = arith.constant 0 : index
      %c0_78 = arith.constant 0 : index
      %226 = vector.load %arg7[%c0_77, %c0_78] : memref<8x128xf32, #tpu.memory_space<vmem>>, vector<8x128xf32>
      tpu.vector_store %arg7[%c0_77, %c0_78], %225 {strides = array<i32>} : memref<8x128xf32, #tpu.memory_space<vmem>>, vector<8x128xf32>,
    } else {
    }
    %c0 = arith.constant 0 : index
    %c0_1 = arith.constant 0 : index
    %3 = vector.load %arg1[%c0, %c0_1] : memref<64x16xf32, #tpu.memory_space<vmem>>, vector<64x16xf32>
    %4 = arith.truncf %3 : vector<64x16xf32> to vector<64x16xbf16>
    %c0_2 = arith.constant 0 : index
    %c0_3 = arith.constant 0 : index
    %5 = vector.load %arg2[%c0_2, %c0_3] : memref<16x512xbf16, #tpu.memory_space<vmem>>, vector<16x512xbf16>
    %cst = arith.constant dense<0.000000e+00> : vector<64x512xf32>
    %6 = tpu.matmul %4, %5, %cst {dimension_numbers = #tpu.dot_dimension_numbers<[1], [0], [0], [1], [0, 0, 1, 1], [], []>} : vector<64x16xbf16>, vector<16x512xbf16>, vector<64x512xf32> -> vector<64x512xf32>
    %c0_4 = arith.constant 0 : index
    %c0_5 = arith.constant 0 : index
    %7 = vector.load %arg4[%c0_4, %c0_5] : memref<1x512xf32, #tpu.memory_space<vmem>>, vector<1x512xf32>
    %8 = vector.broadcast %7 : vector<1x512xf32> to vector<64x512xf32>
    %9 = arith.addf %6, %8 : vector<64x512xf32>
    %c0_6 = arith.constant 0 : index
    %c0_7 = arith.constant 0 : index
    %10 = vector.load %arg8[%c0_6, %c0_7] : memref<64x512xf32, #tpu.memory_space<vmem>>, vector<64x512xf32>
    tpu.vector_store %arg8[%c0_6, %c0_7], %9 {strides = array<i32>} : memref<64x512xf32, #tpu.memory_space<vmem>>, vector<64x512xf32>,
    %c0_8 = arith.constant 0 : index
    %c0_9 = arith.constant 0 : index
    %11 = vector.load %arg6[%c0_8, %c0_9] : memref<8x128xf32, #tpu.memory_space<vmem>>, vector<8x128xf32>
    %c0_10 = arith.constant 0 : index
    %c0_11 = arith.constant 0 : index
    %12 = vector.load %arg7[%c0_10, %c0_11] : memref<8x128xf32, #tpu.memory_space<vmem>>, vector<8x128xf32>
    %c0_i32_12 = arith.constant 0 : i32
    %c8_i32 = arith.constant 8 : i32
    %13 = arith.muli %c0_i32_12, %c8_i32 : i32
    %14 = tpu.assume_multiple %13, 8 : i32
    %15 = arith.index_cast %14 : i32 to index
    %c0_13 = arith.constant 0 : index
    %16 = vector.load %arg8[%15, %c0_13] : memref<64x512xf32, #tpu.memory_space<vmem>>, vector<8x512xf32>
    %17 = arith.truncf %11 : vector<8x128xf32> to vector<8x128xbf16>
    %c0_14 = arith.constant 0 : index
    %c0_15 = arith.constant 0 : index
    %18 = vector.load %arg3[%c0_14, %c0_15] : memref<128x512xbf16, #tpu.memory_space<vmem>>, vector<128x512xbf16>
    %cst_16 = arith.constant dense<0.000000e+00> : vector<8x512xf32>
    %19 = tpu.matmul %17, %18, %cst_16 {dimension_numbers = #tpu.dot_dimension_numbers<[1], [0], [0], [1], [0, 0, 1, 1], [], []>} : vector<8x128xbf16>, vector<128x512xbf16>, vector<8x512xf32> -> vector<8x512xf32>
    %20 = arith.addf %16, %19 : vector<8x512xf32>
    %21 = vector.extract_strided_slice %20 {offsets = [0, 0], sizes = [8, 384], strides = [1, 1]} : vector<8x512xf32> to vector<8x384xf32>
    %22 = arith.negf %21 : vector<8x384xf32>
    %23 = math.exp %22 : vector<8x384xf32>
    %cst_17 = arith.constant 1.000000e+00 : f32
    %24 = vector.broadcast %cst_17 : f32 to vector<8x384xf32>
    %25 = arith.addf %24, %23 : vector<8x384xf32>
    %26 = arith.divf %24, %25 : vector<8x384xf32>
    %27 = vector.extract_strided_slice %26 {offsets = [0, 0], sizes = [8, 128], strides = [1, 1]} : vector<8x384xf32> to vector<8x128xf32>
    %28 = vector.extract_strided_slice %26 {offsets = [0, 128], sizes = [8, 128], strides = [1, 1]} : vector<8x384xf32> to vector<8x128xf32>
    %29 = vector.extract_strided_slice %26 {offsets = [0, 256], sizes = [8, 128], strides = [1, 1]} : vector<8x384xf32> to vector<8x128xf32>
    %30 = vector.extract_strided_slice %20 {offsets = [0, 384], sizes = [8, 128], strides = [1, 1]} : vector<8x512xf32> to vector<8x128xf32>
    %31 = math.tanh %30 : vector<8x128xf32>
    %32 = arith.mulf %28, %12 : vector<8x128xf32>
    %33 = arith.mulf %27, %31 : vector<8x128xf32>
    %34 = arith.addf %32, %33 : vector<8x128xf32>
    %35 = math.tanh %34 : vector<8x128xf32>
    %36 = arith.mulf %29, %35 : vector<8x128xf32>
    %37 = arith.index_cast %14 : i32 to index
    %c0_18 = arith.constant 0 : index
    %38 = vector.load %arg5[%37, %c0_18] : memref<64x128xf32, #tpu.memory_space<vmem>>, vector<8x128xf32>
    tpu.vector_store %arg5[%37, %c0_18], %36 {strides = array<i32>} : memref<64x128xf32, #tpu.memory_space<vmem>>, vector<8x128xf32>,
    %c1_i32 = arith.constant 1 : i32
    %c8_i32_19 = arith.constant 8 : i32
    %39 = arith.muli %c1_i32, %c8_i32_19 : i32
    %40 = tpu.assume_multiple %39, 8 : i32
    %41 = arith.index_cast %40 : i32 to index
    %c0_20 = arith.constant 0 : index
    %42 = vector.load %arg8[%41, %c0_20] : memref<64x512xf32, #tpu.memory_space<vmem>>, vector<8x512xf32>
    %43 = arith.truncf %36 : vector<8x128xf32> to vector<8x128xbf16>
    %c0_21 = arith.constant 0 : index
    %c0_22 = arith.constant 0 : index
    %44 = vector.load %arg3[%c0_21, %c0_22] : memref<128x512xbf16, #tpu.memory_space<vmem>>, vector<128x512xbf16>
    %cst_23 = arith.constant dense<0.000000e+00> : vector<8x512xf32>
    %45 = tpu.matmul %43, %44, %cst_23 {dimension_numbers = #tpu.dot_dimension_numbers<[1], [0], [0], [1], [0, 0, 1, 1], [], []>} : vector<8x128xbf16>, vector<128x512xbf16>, vector<8x512xf32> -> vector<8x512xf32>
    %46 = arith.addf %42, %45 : vector<8x512xf32>
    %47 = vector.extract_strided_slice %46 {offsets = [0, 0], sizes = [8, 384], strides = [1, 1]} : vector<8x512xf32> to vector<8x384xf32>
    %48 = arith.negf %47 : vector<8x384xf32>
    %49 = math.exp %48 : vector<8x384xf32>
    %cst_24 = arith.constant 1.000000e+00 : f32
    %50 = vector.broadcast %cst_24 : f32 to vector<8x384xf32>
    %51 = arith.addf %50, %49 : vector<8x384xf32>
    %52 = arith.divf %50, %51 : vector<8x384xf32>
    %53 = vector.extract_strided_slice %52 {offsets = [0, 0], sizes = [8, 128], strides = [1, 1]} : vector<8x384xf32> to vector<8x128xf32>
    %54 = vector.extract_strided_slice %52 {offsets = [0, 128], sizes = [8, 128], strides = [1, 1]} : vector<8x384xf32> to vector<8x128xf32>
    %55 = vector.extract_strided_slice %52 {offsets = [0, 256], sizes = [8, 128], strides = [1, 1]} : vector<8x384xf32> to vector<8x128xf32>
    %56 = vector.extract_strided_slice %46 {offsets = [0, 384], sizes = [8, 128], strides = [1, 1]} : vector<8x512xf32> to vector<8x128xf32>
    %57 = math.tanh %56 : vector<8x128xf32>
    %58 = arith.mulf %54, %34 : vector<8x128xf32>
    %59 = arith.mulf %53, %57 : vector<8x128xf32>
    %60 = arith.addf %58, %59 : vector<8x128xf32>
    %61 = math.tanh %60 : vector<8x128xf32>
    %62 = arith.mulf %55, %61 : vector<8x128xf32>
    %63 = arith.index_cast %40 : i32 to index
    %c0_25 = arith.constant 0 : index
    %64 = vector.load %arg5[%63, %c0_25] : memref<64x128xf32, #tpu.memory_space<vmem>>, vector<8x128xf32>
    tpu.vector_store %arg5[%63, %c0_25], %62 {strides = array<i32>} : memref<64x128xf32, #tpu.memory_space<vmem>>, vector<8x128xf32>,
    %c2_i32 = arith.constant 2 : i32
    %c8_i32_26 = arith.constant 8 : i32
    %65 = arith.muli %c2_i32, %c8_i32_26 : i32
    %66 = tpu.assume_multiple %65, 8 : i32
    %67 = arith.index_cast %66 : i32 to index
    %c0_27 = arith.constant 0 : index
    %68 = vector.load %arg8[%67, %c0_27] : memref<64x512xf32, #tpu.memory_space<vmem>>, vector<8x512xf32>
    %69 = arith.truncf %62 : vector<8x128xf32> to vector<8x128xbf16>
    %c0_28 = arith.constant 0 : index
    %c0_29 = arith.constant 0 : index
    %70 = vector.load %arg3[%c0_28, %c0_29] : memref<128x512xbf16, #tpu.memory_space<vmem>>, vector<128x512xbf16>
    %cst_30 = arith.constant dense<0.000000e+00> : vector<8x512xf32>
    %71 = tpu.matmul %69, %70, %cst_30 {dimension_numbers = #tpu.dot_dimension_numbers<[1], [0], [0], [1], [0, 0, 1, 1], [], []>} : vector<8x128xbf16>, vector<128x512xbf16>, vector<8x512xf32> -> vector<8x512xf32>
    %72 = arith.addf %68, %71 : vector<8x512xf32>
    %73 = vector.extract_strided_slice %72 {offsets = [0, 0], sizes = [8, 384], strides = [1, 1]} : vector<8x512xf32> to vector<8x384xf32>
    %74 = arith.negf %73 : vector<8x384xf32>
    %75 = math.exp %74 : vector<8x384xf32>
    %cst_31 = arith.constant 1.000000e+00 : f32
    %76 = vector.broadcast %cst_31 : f32 to vector<8x384xf32>
    %77 = arith.addf %76, %75 : vector<8x384xf32>
    %78 = arith.divf %76, %77 : vector<8x384xf32>
    %79 = vector.extract_strided_slice %78 {offsets = [0, 0], sizes = [8, 128], strides = [1, 1]} : vector<8x384xf32> to vector<8x128xf32>
    %80 = vector.extract_strided_slice %78 {offsets = [0, 128], sizes = [8, 128], strides = [1, 1]} : vector<8x384xf32> to vector<8x128xf32>
    %81 = vector.extract_strided_slice %78 {offsets = [0, 256], sizes = [8, 128], strides = [1, 1]} : vector<8x384xf32> to vector<8x128xf32>
    %82 = vector.extract_strided_slice %72 {offsets = [0, 384], sizes = [8, 128], strides = [1, 1]} : vector<8x512xf32> to vector<8x128xf32>
    %83 = math.tanh %82 : vector<8x128xf32>
    %84 = arith.mulf %80, %60 : vector<8x128xf32>
    %85 = arith.mulf %79, %83 : vector<8x128xf32>
    %86 = arith.addf %84, %85 : vector<8x128xf32>
    %87 = math.tanh %86 : vector<8x128xf32>
    %88 = arith.mulf %81, %87 : vector<8x128xf32>
    %89 = arith.index_cast %66 : i32 to index
    %c0_32 = arith.constant 0 : index
    %90 = vector.load %arg5[%89, %c0_32] : memref<64x128xf32, #tpu.memory_space<vmem>>, vector<8x128xf32>
    tpu.vector_store %arg5[%89, %c0_32], %88 {strides = array<i32>} : memref<64x128xf32, #tpu.memory_space<vmem>>, vector<8x128xf32>,
    %c3_i32 = arith.constant 3 : i32
    %c8_i32_33 = arith.constant 8 : i32
    %91 = arith.muli %c3_i32, %c8_i32_33 : i32
    %92 = tpu.assume_multiple %91, 8 : i32
    %93 = arith.index_cast %92 : i32 to index
    %c0_34 = arith.constant 0 : index
    %94 = vector.load %arg8[%93, %c0_34] : memref<64x512xf32, #tpu.memory_space<vmem>>, vector<8x512xf32>
    %95 = arith.truncf %88 : vector<8x128xf32> to vector<8x128xbf16>
    %c0_35 = arith.constant 0 : index
    %c0_36 = arith.constant 0 : index
    %96 = vector.load %arg3[%c0_35, %c0_36] : memref<128x512xbf16, #tpu.memory_space<vmem>>, vector<128x512xbf16>
    %cst_37 = arith.constant dense<0.000000e+00> : vector<8x512xf32>
    %97 = tpu.matmul %95, %96, %cst_37 {dimension_numbers = #tpu.dot_dimension_numbers<[1], [0], [0], [1], [0, 0, 1, 1], [], []>} : vector<8x128xbf16>, vector<128x512xbf16>, vector<8x512xf32> -> vector<8x512xf32>
    %98 = arith.addf %94, %97 : vector<8x512xf32>
    %99 = vector.extract_strided_slice %98 {offsets = [0, 0], sizes = [8, 384], strides = [1, 1]} : vector<8x512xf32> to vector<8x384xf32>
    %100 = arith.negf %99 : vector<8x384xf32>
    %101 = math.exp %100 : vector<8x384xf32>
    %cst_38 = arith.constant 1.000000e+00 : f32
    %102 = vector.broadcast %cst_38 : f32 to vector<8x384xf32>
    %103 = arith.addf %102, %101 : vector<8x384xf32>
    %104 = arith.divf %102, %103 : vector<8x384xf32>
    %105 = vector.extract_strided_slice %104 {offsets = [0, 0], sizes = [8, 128], strides = [1, 1]} : vector<8x384xf32> to vector<8x128xf32>
    %106 = vector.extract_strided_slice %104 {offsets = [0, 128], sizes = [8, 128], strides = [1, 1]} : vector<8x384xf32> to vector<8x128xf32>
    %107 = vector.extract_strided_slice %104 {offsets = [0, 256], sizes = [8, 128], strides = [1, 1]} : vector<8x384xf32> to vector<8x128xf32>
    %108 = vector.extract_strided_slice %98 {offsets = [0, 384], sizes = [8, 128], strides = [1, 1]} : vector<8x512xf32> to vector<8x128xf32>
    %109 = math.tanh %108 : vector<8x128xf32>
    %110 = arith.mulf %106, %86 : vector<8x128xf32>
    %111 = arith.mulf %105, %109 : vector<8x128xf32>
    %112 = arith.addf %110, %111 : vector<8x128xf32>
    %113 = math.tanh %112 : vector<8x128xf32>
    %114 = arith.mulf %107, %113 : vector<8x128xf32>
    %115 = arith.index_cast %92 : i32 to index
    %c0_39 = arith.constant 0 : index
    %116 = vector.load %arg5[%115, %c0_39] : memref<64x128xf32, #tpu.memory_space<vmem>>, vector<8x128xf32>
    tpu.vector_store %arg5[%115, %c0_39], %114 {strides = array<i32>} : memref<64x128xf32, #tpu.memory_space<vmem>>, vector<8x128xf32>,
    %c4_i32 = arith.constant 4 : i32
    %c8_i32_40 = arith.constant 8 : i32
    %117 = arith.muli %c4_i32, %c8_i32_40 : i32
    %118 = tpu.assume_multiple %117, 8 : i32
    %119 = arith.index_cast %118 : i32 to index
    %c0_41 = arith.constant 0 : index
    %120 = vector.load %arg8[%119, %c0_41] : memref<64x512xf32, #tpu.memory_space<vmem>>, vector<8x512xf32>
    %121 = arith.truncf %114 : vector<8x128xf32> to vector<8x128xbf16>
    %c0_42 = arith.constant 0 : index
    %c0_43 = arith.constant 0 : index
    %122 = vector.load %arg3[%c0_42, %c0_43] : memref<128x512xbf16, #tpu.memory_space<vmem>>, vector<128x512xbf16>
    %cst_44 = arith.constant dense<0.000000e+00> : vector<8x512xf32>
    %123 = tpu.matmul %121, %122, %cst_44 {dimension_numbers = #tpu.dot_dimension_numbers<[1], [0], [0], [1], [0, 0, 1, 1], [], []>} : vector<8x128xbf16>, vector<128x512xbf16>, vector<8x512xf32> -> vector<8x512xf32>
    %124 = arith.addf %120, %123 : vector<8x512xf32>
    %125 = vector.extract_strided_slice %124 {offsets = [0, 0], sizes = [8, 384], strides = [1, 1]} : vector<8x512xf32> to vector<8x384xf32>
    %126 = arith.negf %125 : vector<8x384xf32>
    %127 = math.exp %126 : vector<8x384xf32>
    %cst_45 = arith.constant 1.000000e+00 : f32
    %128 = vector.broadcast %cst_45 : f32 to vector<8x384xf32>
    %129 = arith.addf %128, %127 : vector<8x384xf32>
    %130 = arith.divf %128, %129 : vector<8x384xf32>
    %131 = vector.extract_strided_slice %130 {offsets = [0, 0], sizes = [8, 128], strides = [1, 1]} : vector<8x384xf32> to vector<8x128xf32>
    %132 = vector.extract_strided_slice %130 {offsets = [0, 128], sizes = [8, 128], strides = [1, 1]} : vector<8x384xf32> to vector<8x128xf32>
    %133 = vector.extract_strided_slice %130 {offsets = [0, 256], sizes = [8, 128], strides = [1, 1]} : vector<8x384xf32> to vector<8x128xf32>
    %134 = vector.extract_strided_slice %124 {offsets = [0, 384], sizes = [8, 128], strides = [1, 1]} : vector<8x512xf32> to vector<8x128xf32>
    %135 = math.tanh %134 : vector<8x128xf32>
    %136 = arith.mulf %132, %112 : vector<8x128xf32>
    %137 = arith.mulf %131, %135 : vector<8x128xf32>
    %138 = arith.addf %136, %137 : vector<8x128xf32>
    %139 = math.tanh %138 : vector<8x128xf32>
    %140 = arith.mulf %133, %139 : vector<8x128xf32>
    %141 = arith.index_cast %118 : i32 to index
    %c0_46 = arith.constant 0 : index
    %142 = vector.load %arg5[%141, %c0_46] : memref<64x128xf32, #tpu.memory_space<vmem>>, vector<8x128xf32>
    tpu.vector_store %arg5[%141, %c0_46], %140 {strides = array<i32>} : memref<64x128xf32, #tpu.memory_space<vmem>>, vector<8x128xf32>,
    %c5_i32 = arith.constant 5 : i32
    %c8_i32_47 = arith.constant 8 : i32
    %143 = arith.muli %c5_i32, %c8_i32_47 : i32
    %144 = tpu.assume_multiple %143, 8 : i32
    %145 = arith.index_cast %144 : i32 to index
    %c0_48 = arith.constant 0 : index
    %146 = vector.load %arg8[%145, %c0_48] : memref<64x512xf32, #tpu.memory_space<vmem>>, vector<8x512xf32>
    %147 = arith.truncf %140 : vector<8x128xf32> to vector<8x128xbf16>
    %c0_49 = arith.constant 0 : index
    %c0_50 = arith.constant 0 : index
    %148 = vector.load %arg3[%c0_49, %c0_50] : memref<128x512xbf16, #tpu.memory_space<vmem>>, vector<128x512xbf16>
    %cst_51 = arith.constant dense<0.000000e+00> : vector<8x512xf32>
    %149 = tpu.matmul %147, %148, %cst_51 {dimension_numbers = #tpu.dot_dimension_numbers<[1], [0], [0], [1], [0, 0, 1, 1], [], []>} : vector<8x128xbf16>, vector<128x512xbf16>, vector<8x512xf32> -> vector<8x512xf32>
    %150 = arith.addf %146, %149 : vector<8x512xf32>
    %151 = vector.extract_strided_slice %150 {offsets = [0, 0], sizes = [8, 384], strides = [1, 1]} : vector<8x512xf32> to vector<8x384xf32>
    %152 = arith.negf %151 : vector<8x384xf32>
    %153 = math.exp %152 : vector<8x384xf32>
    %cst_52 = arith.constant 1.000000e+00 : f32
    %154 = vector.broadcast %cst_52 : f32 to vector<8x384xf32>
    %155 = arith.addf %154, %153 : vector<8x384xf32>
    %156 = arith.divf %154, %155 : vector<8x384xf32>
    %157 = vector.extract_strided_slice %156 {offsets = [0, 0], sizes = [8, 128], strides = [1, 1]} : vector<8x384xf32> to vector<8x128xf32>
    %158 = vector.extract_strided_slice %156 {offsets = [0, 128], sizes = [8, 128], strides = [1, 1]} : vector<8x384xf32> to vector<8x128xf32>
    %159 = vector.extract_strided_slice %156 {offsets = [0, 256], sizes = [8, 128], strides = [1, 1]} : vector<8x384xf32> to vector<8x128xf32>
    %160 = vector.extract_strided_slice %150 {offsets = [0, 384], sizes = [8, 128], strides = [1, 1]} : vector<8x512xf32> to vector<8x128xf32>
    %161 = math.tanh %160 : vector<8x128xf32>
    %162 = arith.mulf %158, %138 : vector<8x128xf32>
    %163 = arith.mulf %157, %161 : vector<8x128xf32>
    %164 = arith.addf %162, %163 : vector<8x128xf32>
    %165 = math.tanh %164 : vector<8x128xf32>
    %166 = arith.mulf %159, %165 : vector<8x128xf32>
    %167 = arith.index_cast %144 : i32 to index
    %c0_53 = arith.constant 0 : index
    %168 = vector.load %arg5[%167, %c0_53] : memref<64x128xf32, #tpu.memory_space<vmem>>, vector<8x128xf32>
    tpu.vector_store %arg5[%167, %c0_53], %166 {strides = array<i32>} : memref<64x128xf32, #tpu.memory_space<vmem>>, vector<8x128xf32>,
    %c6_i32 = arith.constant 6 : i32
    %c8_i32_54 = arith.constant 8 : i32
    %169 = arith.muli %c6_i32, %c8_i32_54 : i32
    %170 = tpu.assume_multiple %169, 8 : i32
    %171 = arith.index_cast %170 : i32 to index
    %c0_55 = arith.constant 0 : index
    %172 = vector.load %arg8[%171, %c0_55] : memref<64x512xf32, #tpu.memory_space<vmem>>, vector<8x512xf32>
    %173 = arith.truncf %166 : vector<8x128xf32> to vector<8x128xbf16>
    %c0_56 = arith.constant 0 : index
    %c0_57 = arith.constant 0 : index
    %174 = vector.load %arg3[%c0_56, %c0_57] : memref<128x512xbf16, #tpu.memory_space<vmem>>, vector<128x512xbf16>
    %cst_58 = arith.constant dense<0.000000e+00> : vector<8x512xf32>
    %175 = tpu.matmul %173, %174, %cst_58 {dimension_numbers = #tpu.dot_dimension_numbers<[1], [0], [0], [1], [0, 0, 1, 1], [], []>} : vector<8x128xbf16>, vector<128x512xbf16>, vector<8x512xf32> -> vector<8x512xf32>
    %176 = arith.addf %172, %175 : vector<8x512xf32>
    %177 = vector.extract_strided_slice %176 {offsets = [0, 0], sizes = [8, 384], strides = [1, 1]} : vector<8x512xf32> to vector<8x384xf32>
    %178 = arith.negf %177 : vector<8x384xf32>
    %179 = math.exp %178 : vector<8x384xf32>
    %cst_59 = arith.constant 1.000000e+00 : f32
    %180 = vector.broadcast %cst_59 : f32 to vector<8x384xf32>
    %181 = arith.addf %180, %179 : vector<8x384xf32>
    %182 = arith.divf %180, %181 : vector<8x384xf32>
    %183 = vector.extract_strided_slice %182 {offsets = [0, 0], sizes = [8, 128], strides = [1, 1]} : vector<8x384xf32> to vector<8x128xf32>
    %184 = vector.extract_strided_slice %182 {offsets = [0, 128], sizes = [8, 128], strides = [1, 1]} : vector<8x384xf32> to vector<8x128xf32>
    %185 = vector.extract_strided_slice %182 {offsets = [0, 256], sizes = [8, 128], strides = [1, 1]} : vector<8x384xf32> to vector<8x128xf32>
    %186 = vector.extract_strided_slice %176 {offsets = [0, 384], sizes = [8, 128], strides = [1, 1]} : vector<8x512xf32> to vector<8x128xf32>
    %187 = math.tanh %186 : vector<8x128xf32>
    %188 = arith.mulf %184, %164 : vector<8x128xf32>
    %189 = arith.mulf %183, %187 : vector<8x128xf32>
    %190 = arith.addf %188, %189 : vector<8x128xf32>
    %191 = math.tanh %190 : vector<8x128xf32>
    %192 = arith.mulf %185, %191 : vector<8x128xf32>
    %193 = arith.index_cast %170 : i32 to index
    %c0_60 = arith.constant 0 : index
    %194 = vector.load %arg5[%193, %c0_60] : memref<64x128xf32, #tpu.memory_space<vmem>>, vector<8x128xf32>
    tpu.vector_store %arg5[%193, %c0_60], %192 {strides = array<i32>} : memref<64x128xf32, #tpu.memory_space<vmem>>, vector<8x128xf32>,
    %c7_i32 = arith.constant 7 : i32
    %c8_i32_61 = arith.constant 8 : i32
    %195 = arith.muli %c7_i32, %c8_i32_61 : i32
    %196 = tpu.assume_multiple %195, 8 : i32
    %197 = arith.index_cast %196 : i32 to index
    %c0_62 = arith.constant 0 : index
    %198 = vector.load %arg8[%197, %c0_62] : memref<64x512xf32, #tpu.memory_space<vmem>>, vector<8x512xf32>
    %199 = arith.truncf %192 : vector<8x128xf32> to vector<8x128xbf16>
    %c0_63 = arith.constant 0 : index
    %c0_64 = arith.constant 0 : index
    %200 = vector.load %arg3[%c0_63, %c0_64] : memref<128x512xbf16, #tpu.memory_space<vmem>>, vector<128x512xbf16>
    %cst_65 = arith.constant dense<0.000000e+00> : vector<8x512xf32>
    %201 = tpu.matmul %199, %200, %cst_65 {dimension_numbers = #tpu.dot_dimension_numbers<[1], [0], [0], [1], [0, 0, 1, 1], [], []>} : vector<8x128xbf16>, vector<128x512xbf16>, vector<8x512xf32> -> vector<8x512xf32>
    %202 = arith.addf %198, %201 : vector<8x512xf32>
    %203 = vector.extract_strided_slice %202 {offsets = [0, 0], sizes = [8, 384], strides = [1, 1]} : vector<8x512xf32> to vector<8x384xf32>
    %204 = arith.negf %203 : vector<8x384xf32>
    %205 = math.exp %204 : vector<8x384xf32>
    %cst_66 = arith.constant 1.000000e+00 : f32
    %206 = vector.broadcast %cst_66 : f32 to vector<8x384xf32>
    %207 = arith.addf %206, %205 : vector<8x384xf32>
    %208 = arith.divf %206, %207 : vector<8x384xf32>
    %209 = vector.extract_strided_slice %208 {offsets = [0, 0], sizes = [8, 128], strides = [1, 1]} : vector<8x384xf32> to vector<8x128xf32>
    %210 = vector.extract_strided_slice %208 {offsets = [0, 128], sizes = [8, 128], strides = [1, 1]} : vector<8x384xf32> to vector<8x128xf32>
    %211 = vector.extract_strided_slice %208 {offsets = [0, 256], sizes = [8, 128], strides = [1, 1]} : vector<8x384xf32> to vector<8x128xf32>
    %212 = vector.extract_strided_slice %202 {offsets = [0, 384], sizes = [8, 128], strides = [1, 1]} : vector<8x512xf32> to vector<8x128xf32>
    %213 = math.tanh %212 : vector<8x128xf32>
    %214 = arith.mulf %210, %190 : vector<8x128xf32>
    %215 = arith.mulf %209, %213 : vector<8x128xf32>
    %216 = arith.addf %214, %215 : vector<8x128xf32>
    %217 = math.tanh %216 : vector<8x128xf32>
    %218 = arith.mulf %211, %217 : vector<8x128xf32>
    %219 = arith.index_cast %196 : i32 to index
    %c0_67 = arith.constant 0 : index
    %220 = vector.load %arg5[%219, %c0_67] : memref<64x128xf32, #tpu.memory_space<vmem>>, vector<8x128xf32>
    tpu.vector_store %arg5[%219, %c0_67], %218 {strides = array<i32>} : memref<64x128xf32, #tpu.memory_space<vmem>>, vector<8x128xf32>,
    %c8_i32_68 = arith.constant 8 : i32
    %c0_69 = arith.constant 0 : index
    %c0_70 = arith.constant 0 : index
    %221 = vector.load %arg6[%c0_69, %c0_70] : memref<8x128xf32, #tpu.memory_space<vmem>>, vector<8x128xf32>
    tpu.vector_store %arg6[%c0_69, %c0_70], %218 {strides = array<i32>} : memref<8x128xf32, #tpu.memory_space<vmem>>, vector<8x128xf32>,
    %c0_71 = arith.constant 0 : index
    %c0_72 = arith.constant 0 : index
    %222 = vector.load %arg7[%c0_71, %c0_72] : memref<8x128xf32, #tpu.memory_space<vmem>>, vector<8x128xf32>
    tpu.vector_store %arg7[%c0_71, %c0_72], %216 {strides = array<i32>} : memref<8x128xf32, #tpu.memory_space<vmem>>, vector<8x128xf32>,
    return
  }
  func.func @transform_0(%arg0: i32) -> (i32, i32) {
    %c0_i32 = arith.constant 0 : i32
    %c0_i32_0 = arith.constant 0 : i32
    return %arg0, %c0_i32 : i32, i32
  }
  func.func @transform_1(%arg0: i32) -> (i32, i32) {
    %c0_i32 = arith.constant 0 : i32
    %c0_i32_0 = arith.constant 0 : i32
    %c0_i32_1 = arith.constant 0 : i32
    return %c0_i32, %c0_i32_0 : i32, i32
  }
  func.func @transform_2(%arg0: i32) -> (i32, i32) {
    %c0_i32 = arith.constant 0 : i32
    %c0_i32_0 = arith.constant 0 : i32
    %c0_i32_1 = arith.constant 0 : i32
    return %c0_i32, %c0_i32_0 : i32, i32
  }
  func.func @transform_3(%arg0: i32) -> (i32, i32) {
    %c0_i32 = arith.constant 0 : i32
    %c0_i32_0 = arith.constant 0 : i32
    %c0_i32_1 = arith.constant 0 : i32
    return %c0_i32, %c0_i32_0 : i32, i32
  }
  func.func @transform_4(%arg0: i32) -> (i32, i32) {
    %c0_i32 = arith.constant 0 : i32
    %c0_i32_0 = arith.constant 0 : i32
    return %arg0, %c0_i32 : i32, i32
  }
}

</mosaic_0001>

<llo_original>
// kernel: lstm_forward.3
$region0: #{lstm_forward.3}
  #allocation0 [shape = 'u32[]', space=smem, size = 0x4, offset = 0x4, fixed_abs, tag = 'smem constant byte address 0x4 - core index']
  #allocation1 [shape = 'u32[144,128]{1,0:T(1,128)}', space=vmem, size = 0x12000, scoped, tag = 'internal scratch']
  #allocation2 [shape = 'f32[8,128]{1,0:T(8,128)}', space=vmem, size = 0x1000, scoped, tag = 'scratch operand']
  #allocation3 [shape = 'f32[8,128]{1,0:T(8,128)}', space=vmem, size = 0x1000, scoped, tag = 'scratch operand']
  #allocation4 [shape = 'f32[64,512]{1,0:T(8,128)}', space=vmem, size = 0x20000, scoped, tag = 'scratch operand']
  %s0 = inlined_call_operand.vmem [shape: f32[64,128], index: 0, kind: input, shape index: {}]
  %s1 = inlined_call_operand.vmem [shape: bf16[128,512], index: 1, kind: input, shape index: {}]
  %s2 = inlined_call_operand.vmem [shape: bf16[128,512], index: 2, kind: input, shape index: {}]
  %s3 = inlined_call_operand.vmem [shape: f32[1,512], index: 3, kind: input, shape index: {}]
  %s4 = inlined_call_operand.hbm [shape: bf16[128,128], index: 4, kind: input, shape index: {}]
  %s5 = inlined_call_operand.vmem [shape: f32[1,128], index: 5, kind: input, shape index: {}]
  %s6 = inlined_call_operand.vmem [shape: f32[8,128], index: 6, kind: output, shape index: {}]
  %s7 = sld [smem:[#allocation0]]
  $region46: #{lstm_forward.3} parent=0
    _
  %s9 = ssub.s32 1, %s7
  %s10 = scalar_select 0, %s9, %s7
  $region1: #{lstm_forward.3} parent=0
    #allocation5 [shape = 'u8[32768]{0}', space=vmem, size = 0x8000, scoped, tag = 'input window, operand 4, single buffered']
    #allocation6 [shape = 's32[1]{0}', space=sflag, size = 0x4, scoped, tag = 'scoped memory for lstm_forward.3']
    %11 = vsyncpa [#allocation6], 0
    // Predicated region
    $region2: #{lstm_forward.3} parent=1 // pred_check
      _
    $region3: #{lstm_forward.3} parent=1 // pred_check_branch
      %13 = sbr.rel (0) target = $region5
    $region4: #{lstm_forward.3} parent=1 // pred_region
      _
    $region5: #{lstm_forward.3} parent=1 // pred_fallthru
      _
    // Predicated region
    $region6: #{lstm_forward.3} parent=1 // pred_check
      _
    $region7: #{lstm_forward.3} parent=1 // pred_check_branch
      %15 = sbr.rel (0) target = $region9
    $region8: #{lstm_forward.3} parent=1 // pred_region
      _
    $region9: #{lstm_forward.3} parent=1 // pred_fallthru
      _
    // Predicated region
    $region10: #{lstm_forward.3} parent=1 // pred_check
      _
    $region11: #{lstm_forward.3} parent=1 // pred_check_branch
      %17 = sbr.rel (0) target = $region13
    $region12: #{lstm_forward.3} parent=1 // pred_region
      _
    $region13: #{lstm_forward.3} parent=1 // pred_fallthru
      _
    // Predicated region
    $region14: #{lstm_forward.3} parent=1 // pred_check
      _
    $region15: #{lstm_forward.3} parent=1 // pred_check_branch
      %19 = sbr.rel (0) target = $region17
    $region16: #{lstm_forward.3} parent=1 // pred_region
      _
    $region17: #{lstm_forward.3} parent=1 // pred_fallthru
      _
    // Predicated region
    $region18: #{lstm_forward.3} parent=1 // pred_check
      _
    $region19: #{lstm_forward.3} parent=1 // pred_check_branch
      %21 = sbr.rel (0) target = $region21
    $region20: #{lstm_forward.3} parent=1 // pred_region
      %s23 = ssub.s32 1024, 1024
      %24 = vsyncadd [#allocation6], %s23
      %s25 = sshll.u32 [#allocation5], 4
      %s26 = int_to_ptr.vmem [resolvable:$true] %s25
      %31 = dma.hbm_to_vmem [thread:$0]  %s4, 1024, %s26, [#allocation6], 64, 64, 4
    $region21: #{lstm_forward.3} parent=1 // pred_fallthru
      _
    // Predicated region
    $region22: #{lstm_forward.3} parent=1 // pred_check
      _
    $region23: #{lstm_forward.3} parent=1 // pred_check_branch
      %33 = sbr.rel (0) target = $region25
    $region24: #{lstm_forward.3} parent=1 // pred_region
      _
    $region25: #{lstm_forward.3} parent=1 // pred_fallthru
      _
    // Predicated region
    $region26: #{lstm_forward.3} parent=1 // pred_check
      _
    $region27: #{lstm_forward.3} parent=1 // pred_check_branch
      %35 = sbr.rel (0) target = $region29
    $region28: #{lstm_forward.3} parent=1 // pred_region
      %36 = dma.done [#allocation6], 1024
    $region29: #{lstm_forward.3} parent=1 // pred_fallthru
      _
    %p38 = scmp.eq.s32.totalorder 0, 0
    // Predicated region
    $region30: #{lstm_forward.3} parent=1 // pred_check
      %p39 = pneg %p38
    $region31: #{lstm_forward.3} parent=1 // pred_check_branch
      %41 = sbr.rel (%p39) target = $region33
    $region32: #{lstm_forward.3} parent=1 // pred_region
      %42 = vst [vmem:[#allocation2] sm:$0xff] 0.0
      %43 = vst [vmem:[#allocation3] sm:$0xff] 0.0
    $region33: #{lstm_forward.3} parent=1 // pred_fallthru
      _
    %v44 = vld [vmem:[%s0] sm:$0xff]
    %v45 = vld [vmem:[%s0 + $0x8] sm:$0xff]
    %v46 = vld [vmem:[%s0 + $0x10] sm:$0xff]
    %v47 = vld [vmem:[%s0 + $0x18] sm:$0xff]
    %v48 = vld [vmem:[%s0 + $0x20] sm:$0xff]
    %v49 = vld [vmem:[%s0 + $0x28] sm:$0xff]
    %v50 = vld [vmem:[%s0 + $0x30] sm:$0xff]
    %v51 = vld [vmem:[%s0 + $0x38] sm:$0xff]
    %v52 = vpack.c.bf16 %v45, %v44
    %v53 = vpack.c.bf16 %v47, %v46
    %v54 = vpack.c.bf16 %v49, %v48
    %v55 = vpack.c.bf16 %v51, %v50
    %v56 = vld [vmem:[%s1] sm:$0xff]
    %v57 = vld [vmem:[%s1 + $0x8] sm:$0xff]
    %v58 = vld [vmem:[%s1 + $0x10] sm:$0xff]
    %v59 = vld [vmem:[%s1 + $0x18] sm:$0xff]
    %v60 = vld [vmem:[%s1 + $0x20] sm:$0xff]
    %v61 = vld [vmem:[%s1 + $0x28] sm:$0xff]
    %v62 = vld [vmem:[%s1 + $0x30] sm:$0xff]
    %v63 = vld [vmem:[%s1 + $0x38] sm:$0xff]
    %v64 = vld [vmem:[%s1 + $0x40] sm:$0xff]
    %v65 = vld [vmem:[%s1 + $0x48] sm:$0xff]
    %v66 = vld [vmem:[%s1 + $0x50] sm:$0xff]
    %v67 = vld [vmem:[%s1 + $0x58] sm:$0xff]
    %v68 = vld [vmem:[%s1 + $0x60] sm:$0xff]
    %v69 = vld [vmem:[%s1 + $0x68] sm:$0xff]
    %v70 = vld [vmem:[%s1 + $0x70] sm:$0xff]
    %v71 = vld [vmem:[%s1 + $0x78] sm:$0xff]
    %v72 = vld [vmem:[%s1 + $0x80] sm:$0xff]
    %v73 = vld [vmem:[%s1 + $0x88] sm:$0xff]
    %v74 = vld [vmem:[%s1 + $0x90] sm:$0xff]
    %v75 = vld [vmem:[%s1 + $0x98] sm:$0xff]
    %v76 = vld [vmem:[%s1 + $0xa0] sm:$0xff]
    %v77 = vld [vmem:[%s1 + $0xa8] sm:$0xff]
    %v78 = vld [vmem:[%s1 + $0xb0] sm:$0xff]
    %v79 = vld [vmem:[%s1 + $0xb8] sm:$0xff]
    %v80 = vld [vmem:[%s1 + $0xc0] sm:$0xff]
    %v81 = vld [vmem:[%s1 + $0xc8] sm:$0xff]
    %v82 = vld [vmem:[%s1 + $0xd0] sm:$0xff]
    %v83 = vld [vmem:[%s1 + $0xd8] sm:$0xff]
    %v84 = vld [vmem:[%s1 + $0xe0] sm:$0xff]
    %v85 = vld [vmem:[%s1 + $0xe8] sm:$0xff]
    %v86 = vld [vmem:[%s1 + $0xf0] sm:$0xff]
    %v87 = vld [vmem:[%s1 + $0xf8] sm:$0xff]
    %v88 = vld [vmem:[%s3] sm:$0xf]
    %v90 = vlaneseq
    %v91 = vshrl.u32 %v90, 7
    %v92 = vsub.s32 0, %v91
    %v93 = vrot.slane %v88, %v92
    %v94 = vlaneseq
    %v95 = vshrl.u32 %v94, 7
    %v96 = vsub.s32 1, %v95
    %v97 = vrot.slane %v88, %v96
    %v98 = vlaneseq
    %v99 = vshrl.u32 %v98, 7
    %v100 = vsub.s32 2, %v99
    %v101 = vrot.slane %v88, %v100
    %v102 = vlaneseq
    %v103 = vshrl.u32 %v102, 7
    %v104 = vsub.s32 3, %v103
    %v105 = vrot.slane %v88, %v104
    %v142 = vunpack.c.l.b16 %v56
    %v143 = vunpack.c.h.b16 %v56
    %v144 = vunpack.c.l.b16 %v57
    %v145 = vunpack.c.h.b16 %v57
    %v146 = vunpack.c.l.b16 %v58
    %v147 = vunpack.c.h.b16 %v58
    %v148 = vunpack.c.l.b16 %v59
    %v149 = vunpack.c.h.b16 %v59
    %v150 = vunpack.c.l.b16 %v60
    %v151 = vunpack.c.h.b16 %v60
    %v152 = vunpack.c.l.b16 %v61
    %v153 = vunpack.c.h.b16 %v61
    %v154 = vunpack.c.l.b16 %v62
    %v155 = vunpack.c.h.b16 %v62
    %v156 = vunpack.c.l.b16 %v63
    %v157 = vunpack.c.h.b16 %v63
    %v158 = vunpack.c.l.b16 %v64
    %v159 = vunpack.c.h.b16 %v64
    %v160 = vunpack.c.l.b16 %v65
    %v161 = vunpack.c.h.b16 %v65
    %v162 = vunpack.c.l.b16 %v66
    %v163 = vunpack.c.h.b16 %v66
    %v164 = vunpack.c.l.b16 %v67
    %v165 = vunpack.c.h.b16 %v67
    %v166 = vunpack.c.l.b16 %v68
    %v167 = vunpack.c.h.b16 %v68
    %v168 = vunpack.c.l.b16 %v69
    %v169 = vunpack.c.h.b16 %v69
    %v170 = vunpack.c.l.b16 %v70
    %v171 = vunpack.c.h.b16 %v70
    %v172 = vunpack.c.l.b16 %v71
    %v173 = vunpack.c.h.b16 %v71
    %v174 = vunpack.c.l.b16 %v72
    %v175 = vunpack.c.h.b16 %v72
    %v176 = vunpack.c.l.b16 %v73
    %v177 = vunpack.c.h.b16 %v73
    %v178 = vunpack.c.l.b16 %v74
    %v179 = vunpack.c.h.b16 %v74
    %v180 = vunpack.c.l.b16 %v75
    %v181 = vunpack.c.h.b16 %v75
    %v182 = vunpack.c.l.b16 %v76
    %v183 = vunpack.c.h.b16 %v76
    %v184 = vunpack.c.l.b16 %v77
    %v185 = vunpack.c.h.b16 %v77
    %v186 = vunpack.c.l.b16 %v78
    %v187 = vunpack.c.h.b16 %v78
    %v188 = vunpack.c.l.b16 %v79
    %v189 = vunpack.c.h.b16 %v79
    %v190 = vunpack.c.l.b16 %v80
    %v191 = vunpack.c.h.b16 %v80
    %v192 = vunpack.c.l.b16 %v81
    %v193 = vunpack.c.h.b16 %v81
    %v194 = vunpack.c.l.b16 %v82
    %v195 = vunpack.c.h.b16 %v82
    %v196 = vunpack.c.l.b16 %v83
    %v197 = vunpack.c.h.b16 %v83
    %v198 = vunpack.c.l.b16 %v84
    %v199 = vunpack.c.h.b16 %v84
    %v200 = vunpack.c.l.b16 %v85
    %v201 = vunpack.c.h.b16 %v85
    %v202 = vunpack.c.l.b16 %v86
    %v203 = vunpack.c.h.b16 %v86
    %v204 = vunpack.c.l.b16 %v87
    %v205 = vunpack.c.h.b16 %v87
    %v206 = vpack.c.b16 %v146, %v142
    %v207 = vpack.c.b16 %v147, %v143
    %v208 = vpack.c.b16 %v148, %v144
    %v209 = vpack.c.b16 %v149, %v145
    %v210 = vpack.c.b16 %v154, %v150
    %v211 = vpack.c.b16 %v155, %v151
    %v212 = vpack.c.b16 %v156, %v152
    %v213 = vpack.c.b16 %v157, %v153
    %v214 = vpack.c.b16 %v162, %v158
    %v215 = vpack.c.b16 %v163, %v159
    %v216 = vpack.c.b16 %v164, %v160
    %v217 = vpack.c.b16 %v165, %v161
    %v218 = vpack.c.b16 %v170, %v166
    %v219 = vpack.c.b16 %v171, %v167
    %v220 = vpack.c.b16 %v172, %v168
    %v221 = vpack.c.b16 %v173, %v169
    %v222 = vpack.c.b16 %v178, %v174
    %v223 = vpack.c.b16 %v179, %v175
    %v224 = vpack.c.b16 %v180, %v176
    %v225 = vpack.c.b16 %v181, %v177
    %v226 = vpack.c.b16 %v186, %v182
    %v227 = vpack.c.b16 %v187, %v183
    %v228 = vpack.c.b16 %v188, %v184
    %v229 = vpack.c.b16 %v189, %v185
    %v230 = vpack.c.b16 %v194, %v190
    %v231 = vpack.c.b16 %v195, %v191
    %v232 = vpack.c.b16 %v196, %v192
    %v233 = vpack.c.b16 %v197, %v193
    %v234 = vpack.c.b16 %v202, %v198
    %v235 = vpack.c.b16 %v203, %v199
    %v236 = vpack.c.b16 %v204, %v200
    %v237 = vpack.c.b16 %v205, %v201
    %270 = vmatprep.subr.bf16.mxu0 %v235
    %271 = vmatpush1.bf16.msra.mxu0 %v234
    %272 = vmatprep.subr.bf16.mxu0 %v231
    %273 = vmatpush1.bf16.msra.mxu0 %v230
    %274 = vmatprep.subr.bf16.mxu0 %v227
    %275 = vmatpush1.bf16.msra.mxu0 %v226
    %276 = vmatprep.subr.bf16.mxu0 %v223
    %277 = vmatpush1.bf16.msra.mxu0 %v222
    %278 = vmatprep.subr.bf16.mxu0 %v219
    %279 = vmatpush1.bf16.msra.mxu0 %v218
    %280 = vmatprep.subr.bf16.mxu0 %v215
    %281 = vmatpush1.bf16.msra.mxu0 %v214
    %282 = vmatprep.subr.bf16.mxu0 %v211
    %283 = vmatpush1.bf16.msra.mxu0 %v210
    %284 = vmatprep.subr.bf16.mxu0 %v207
    %285 = vmatpush1.bf16.msra.mxu0 %v206
    %286 = vmatprep.subr.bf16.mxu0 0
    %287 = vmatpush2.bf16.msra.mxu0 0
    %288 = vmatprep.subr.bf16.mxu0 0
    %289 = vmatpush2.bf16.msra.mxu0 0
    %290 = vmatprep.subr.bf16.mxu0 0
    %291 = vmatpush2.bf16.msra.mxu0 0
    %292 = vmatprep.subr.bf16.mxu0 0
    %293 = vmatpush2.bf16.msra.mxu0 0
    %294 = vmatprep.subr.bf16.mxu0 0
    %295 = vmatpush2.bf16.msra.mxu0 0
    %296 = vmatprep.subr.bf16.mxu0 0
    %297 = vmatpush2.bf16.msra.mxu0 0
    %298 = vmatprep.subr.bf16.mxu0 0
    %299 = vmatpush2.bf16.msra.mxu0 0
    %300 = vmatprep.subr.bf16.mxu0 0
    %301 = vmatpush2.bf16.msra.mxu0 0
    %302 = vmatprep.mubr.bf16.mxu0 0
    %303 = vmatmul.mubr.bf16.gmra.mxu0 %v52
    %v304 = vpop.f32.mrf.mxu0
    %v305 = vadd.f32 %v93, %v304
    %v306 = vpop.f32.mrf.mxu0
    %v307 = vadd.f32 %v97, %v306
    %v308 = vpop.f32.mrf.mxu0
    %v309 = vadd.f32 %v93, %v308
    %v310 = vpop.f32.mrf.mxu0
    %v311 = vadd.f32 %v97, %v310
    %312 = vmatprep.mubr.bf16.mxu0 0
    %313 = vmatmul.mubr.bf16.gmra.mxu0 %v53
    %v314 = vpop.f32.mrf.mxu0
    %v315 = vadd.f32 %v93, %v314
    %v316 = vpop.f32.mrf.mxu0
    %v317 = vadd.f32 %v97, %v316
    %v318 = vpop.f32.mrf.mxu0
    %v319 = vadd.f32 %v93, %v318
    %v320 = vpop.f32.mrf.mxu0
    %v321 = vadd.f32 %v97, %v320
    %322 = vmatprep.mubr.bf16.mxu0 0
    %323 = vmatmul.mubr.bf16.gmra.mxu0 %v54
    %v324 = vpop.f32.mrf.mxu0
    %v325 = vadd.f32 %v93, %v324
    %v326 = vpop.f32.mrf.mxu0
    %v327 = vadd.f32 %v97, %v326
    %v328 = vpop.f32.mrf.mxu0
    %v329 = vadd.f32 %v93, %v328
    %v330 = vpop.f32.mrf.mxu0
    %v331 = vadd.f32 %v97, %v330
    %332 = vmatprep.mubr.bf16.mxu0 0
    %333 = vmatmul.mubr.bf16.gmra.mxu0 %v55
    %v334 = vpop.f32.mrf.mxu0
    %v335 = vadd.f32 %v93, %v334
    %v336 = vpop.f32.mrf.mxu0
    %v337 = vadd.f32 %v97, %v336
    %v338 = vpop.f32.mrf.mxu0
    %v339 = vadd.f32 %v93, %v338
    %v340 = vpop.f32.mrf.mxu0
    %v341 = vadd.f32 %v97, %v340
    %342 = vdwg.mxu0
    %343 = vmatprep.subr.bf16.mxu0 %v237
    %344 = vmatpush1.bf16.msra.mxu0 %v236
    %345 = vmatprep.subr.bf16.mxu0 %v233
    %346 = vmatpush1.bf16.msra.mxu0 %v232
    %347 = vmatprep.subr.bf16.mxu0 %v229
    %348 = vmatpush1.bf16.msra.mxu0 %v228
    %349 = vmatprep.subr.bf16.mxu0 %v225
    %350 = vmatpush1.bf16.msra.mxu0 %v224
    %351 = vmatprep.subr.bf16.mxu0 %v221
    %352 = vmatpush1.bf16.msra.mxu0 %v220
    %353 = vmatprep.subr.bf16.mxu0 %v217
    %354 = vmatpush1.bf16.msra.mxu0 %v216
    %355 = vmatprep.subr.bf16.mxu0 %v213
    %356 = vmatpush1.bf16.msra.mxu0 %v212
    %357 = vmatprep.subr.bf16.mxu0 %v209
    %358 = vmatpush1.bf16.msra.mxu0 %v208
    %359 = vmatprep.subr.bf16.mxu0 0
    %360 = vmatpush2.bf16.msra.mxu0 0
    %361 = vmatprep.subr.bf16.mxu0 0
    %362 = vmatpush2.bf16.msra.mxu0 0
    %363 = vmatprep.subr.bf16.mxu0 0
    %364 = vmatpush2.bf16.msra.mxu0 0
    %365 = vmatprep.subr.bf16.mxu0 0
    %366 = vmatpush2.bf16.msra.mxu0 0
    %367 = vmatprep.subr.bf16.mxu0 0
    %368 = vmatpush2.bf16.msra.mxu0 0
    %369 = vmatprep.subr.bf16.mxu0 0
    %370 = vmatpush2.bf16.msra.mxu0 0
    %371 = vmatprep.subr.bf16.mxu0 0
    %372 = vmatpush2.bf16.msra.mxu0 0
    %373 = vmatprep.subr.bf16.mxu0 0
    %374 = vmatpush2.bf16.msra.mxu0 0
    %375 = vmatprep.mubr.bf16.mxu0 0
    %376 = vmatmul.mubr.bf16.gmra.mxu0 %v52
    %v377 = vpop.f32.mrf.mxu0
    %v378 = vadd.f32 %v101, %v377
    %v379 = vpop.f32.mrf.mxu0
    %v380 = vadd.f32 %v105, %v379
    %v381 = vpop.f32.mrf.mxu0
    %v382 = vadd.f32 %v101, %v381
    %v383 = vpop.f32.mrf.mxu0
    %v384 = vadd.f32 %v105, %v383
    %385 = vmatprep.mubr.bf16.mxu0 0
    %386 = vmatmul.mubr.bf16.gmra.mxu0 %v53
    %v387 = vpop.f32.mrf.mxu0
    %v388 = vadd.f32 %v101, %v387
    %v389 = vpop.f32.mrf.mxu0
    %v390 = vadd.f32 %v105, %v389
    %v391 = vpop.f32.mrf.mxu0
    %v392 = vadd.f32 %v101, %v391
    %v393 = vpop.f32.mrf.mxu0
    %v394 = vadd.f32 %v105, %v393
    %395 = vmatprep.mubr.bf16.mxu0 0
    %396 = vmatmul.mubr.bf16.gmra.mxu0 %v54
    %v397 = vpop.f32.mrf.mxu0
    %v398 = vadd.f32 %v101, %v397
    %v399 = vpop.f32.mrf.mxu0
    %v400 = vadd.f32 %v105, %v399
    %v401 = vpop.f32.mrf.mxu0
    %v402 = vadd.f32 %v101, %v401
    %v403 = vpop.f32.mrf.mxu0
    %v404 = vadd.f32 %v105, %v403
    %405 = vmatprep.mubr.bf16.mxu0 0
    %406 = vmatmul.mubr.bf16.gmra.mxu0 %v55
    %v407 = vpop.f32.mrf.mxu0
    %v408 = vadd.f32 %v101, %v407
    %v409 = vpop.f32.mrf.mxu0
    %v410 = vadd.f32 %v105, %v409
    %v411 = vpop.f32.mrf.mxu0
    %v412 = vadd.f32 %v101, %v411
    %v413 = vpop.f32.mrf.mxu0
    %v414 = vadd.f32 %v105, %v413
    %415 = vdwg.mxu0
    %416 = vst [vmem:[#allocation4] sm:$0xff] %v305
    %417 = vst [vmem:[#allocation4 + $0x8] sm:$0xff] %v307
    %418 = vst [vmem:[#allocation4 + $0x10] sm:$0xff] %v378
    %419 = vst [vmem:[#allocation4 + $0x18] sm:$0xff] %v380
    %420 = vst [vmem:[#allocation4 + $0x20] sm:$0xff] %v309
    %421 = vst [vmem:[#allocation4 + $0x28] sm:$0xff] %v311
    %422 = vst [vmem:[#allocation4 + $0x30] sm:$0xff] %v382
    %423 = vst [vmem:[#allocation4 + $0x38] sm:$0xff] %v384
    %424 = vst [vmem:[#allocation4 + $0x40] sm:$0xff] %v315
    %425 = vst [vmem:[#allocation4 + $0x48] sm:$0xff] %v317
    %426 = vst [vmem:[#allocation4 + $0x50] sm:$0xff] %v388
    %427 = vst [vmem:[#allocation4 + $0x58] sm:$0xff] %v390
    %428 = vst [vmem:[#allocation4 + $0x60] sm:$0xff] %v319
    %429 = vst [vmem:[#allocation4 + $0x68] sm:$0xff] %v321
    %430 = vst [vmem:[#allocation4 + $0x70] sm:$0xff] %v392
    %431 = vst [vmem:[#allocation4 + $0x78] sm:$0xff] %v394
    %432 = vst [vmem:[#allocation4 + $0x80] sm:$0xff] %v325
    %433 = vst [vmem:[#allocation4 + $0x88] sm:$0xff] %v327
    %434 = vst [vmem:[#allocation4 + $0x90] sm:$0xff] %v398
    %435 = vst [vmem:[#allocation4 + $0x98] sm:$0xff] %v400
    %436 = vst [vmem:[#allocation4 + $0xa0] sm:$0xff] %v329
    %437 = vst [vmem:[#allocation4 + $0xa8] sm:$0xff] %v331
    %438 = vst [vmem:[#allocation4 + $0xb0] sm:$0xff] %v402
    %439 = vst [vmem:[#allocation4 + $0xb8] sm:$0xff] %v404
    %440 = vst [vmem:[#allocation4 + $0xc0] sm:$0xff] %v335
    %441 = vst [vmem:[#allocation4 + $0xc8] sm:$0xff] %v337
    %442 = vst [vmem:[#allocation4 + $0xd0] sm:$0xff] %v408
    %443 = vst [vmem:[#allocation4 + $0xd8] sm:$0xff] %v410
    %444 = vst [vmem:[#allocation4 + $0xe0] sm:$0xff] %v339
    %445 = vst [vmem:[#allocation4 + $0xe8] sm:$0xff] %v341
    %446 = vst [vmem:[#allocation4 + $0xf0] sm:$0xff] %v412
    %447 = vst [vmem:[#allocation4 + $0xf8] sm:$0xff] %v414
    %v448 = vld [vmem:[#allocation2] sm:$0xff]
    %v449 = vld [vmem:[#allocation3] sm:$0xff]
    %s450 = smul.u32 0, 4
    %s451 = smul.addr %s450, 8
    %s452 = scalar_lea.vmem [#allocation4], %s451
    %v453 = vld [vmem:[%s452] sm:$0xff]
    %v454 = vld [vmem:[%s452 + $0x8] sm:$0xff]
    %v455 = vld [vmem:[%s452 + $0x10] sm:$0xff]
    %v456 = vld [vmem:[%s452 + $0x18] sm:$0xff]
    %v457 = vpack.c.bf16 %v448, %v448
    %v458 = vld [vmem:[%s2] sm:$0xff]
    %v459 = vld [vmem:[%s2 + $0x8] sm:$0xff]
    %v460 = vld [vmem:[%s2 + $0x10] sm:$0xff]
    %v461 = vld [vmem:[%s2 + $0x18] sm:$0xff]
    %v462 = vld [vmem:[%s2 + $0x20] sm:$0xff]
    %v463 = vld [vmem:[%s2 + $0x28] sm:$0xff]
    %v464 = vld [vmem:[%s2 + $0x30] sm:$0xff]
    %v465 = vld [vmem:[%s2 + $0x38] sm:$0xff]
    %v466 = vld [vmem:[%s2 + $0x40] sm:$0xff]
    %v467 = vld [vmem:[%s2 + $0x48] sm:$0xff]
    %v468 = vld [vmem:[%s2 + $0x50] sm:$0xff]
    %v469 = vld [vmem:[%s2 + $0x58] sm:$0xff]
    %v470 = vld [vmem:[%s2 + $0x60] sm:$0xff]
    %v471 = vld [vmem:[%s2 + $0x68] sm:$0xff]
    %v472 = vld [vmem:[%s2 + $0x70] sm:$0xff]
    %v473 = vld [vmem:[%s2 + $0x78] sm:$0xff]
    %v474 = vld [vmem:[%s2 + $0x80] sm:$0xff]
    %v475 = vld [vmem:[%s2 + $0x88] sm:$0xff]
    %v476 = vld [vmem:[%s2 + $0x90] sm:$0xff]
    %v477 = vld [vmem:[%s2 + $0x98] sm:$0xff]
    %v478 = vld [vmem:[%s2 + $0xa0] sm:$0xff]
    %v479 = vld [vmem:[%s2 + $0xa8] sm:$0xff]
    %v480 = vld [vmem:[%s2 + $0xb0] sm:$0xff]
    %v481 = vld [vmem:[%s2 + $0xb8] sm:$0xff]
    %v482 = vld [vmem:[%s2 + $0xc0] sm:$0xff]
    %v483 = vld [vmem:[%s2 + $0xc8] sm:$0xff]
    %v484 = vld [vmem:[%s2 + $0xd0] sm:$0xff]
    %v485 = vld [vmem:[%s2 + $0xd8] sm:$0xff]
    %v486 = vld [vmem:[%s2 + $0xe0] sm:$0xff]
    %v487 = vld [vmem:[%s2 + $0xe8] sm:$0xff]
    %v488 = vld [vmem:[%s2 + $0xf0] sm:$0xff]
    %v489 = vld [vmem:[%s2 + $0xf8] sm:$0xff]
    %v522 = vunpack.c.l.b16 %v458
    %v523 = vunpack.c.h.b16 %v458
    %v524 = vunpack.c.l.b16 %v459
    %v525 = vunpack.c.h.b16 %v459
    %v526 = vunpack.c.l.b16 %v460
    %v527 = vunpack.c.h.b16 %v460
    %v528 = vunpack.c.l.b16 %v461
    %v529 = vunpack.c.h.b16 %v461
    %v530 = vunpack.c.l.b16 %v462
    %v531 = vunpack.c.h.b16 %v462
    %v532 = vunpack.c.l.b16 %v463
    %v533 = vunpack.c.h.b16 %v463
    %v534 = vunpack.c.l.b16 %v464
    %v535 = vunpack.c.h.b16 %v464
    %v536 = vunpack.c.l.b16 %v465
    %v537 = vunpack.c.h.b16 %v465
    %v538 = vunpack.c.l.b16 %v466
    %v539 = vunpack.c.h.b16 %v466
    %v540 = vunpack.c.l.b16 %v467
    %v541 = vunpack.c.h.b16 %v467
    %v542 = vunpack.c.l.b16 %v468
    %v543 = vunpack.c.h.b16 %v468
    %v544 = vunpack.c.l.b16 %v469
    %v545 = vunpack.c.h.b16 %v469
    %v546 = vunpack.c.l.b16 %v470
    %v547 = vunpack.c.h.b16 %v470
    %v548 = vunpack.c.l.b16 %v471
    %v549 = vunpack.c.h.b16 %v471
    %v550 = vunpack.c.l.b16 %v472
    %v551 = vunpack.c.h.b16 %v472
    %v552 = vunpack.c.l.b16 %v473
    %v553 = vunpack.c.h.b16 %v473
    %v554 = vunpack.c.l.b16 %v474
    %v555 = vunpack.c.h.b16 %v474
    %v556 = vunpack.c.l.b16 %v475
    %v557 = vunpack.c.h.b16 %v475
    %v558 = vunpack.c.l.b16 %v476
    %v559 = vunpack.c.h.b16 %v476
    %v560 = vunpack.c.l.b16 %v477
    %v561 = vunpack.c.h.b16 %v477
    %v562 = vunpack.c.l.b16 %v478
    %v563 = vunpack.c.h.b16 %v478
    %v564 = vunpack.c.l.b16 %v479
    %v565 = vunpack.c.h.b16 %v479
    %v566 = vunpack.c.l.b16 %v480
    %v567 = vunpack.c.h.b16 %v480
    %v568 = vunpack.c.l.b16 %v481
    %v569 = vunpack.c.h.b16 %v481
    %v570 = vunpack.c.l.b16 %v482
    %v571 = vunpack.c.h.b16 %v482
    %v572 = vunpack.c.l.b16 %v483
    %v573 = vunpack.c.h.b16 %v483
    %v574 = vunpack.c.l.b16 %v484
    %v575 = vunpack.c.h.b16 %v484
    %v576 = vunpack.c.l.b16 %v485
    %v577 = vunpack.c.h.b16 %v485
    %v578 = vunpack.c.l.b16 %v486
    %v579 = vunpack.c.h.b16 %v486
    %v580 = vunpack.c.l.b16 %v487
    %v581 = vunpack.c.h.b16 %v487
    %v582 = vunpack.c.l.b16 %v488
    %v583 = vunpack.c.h.b16 %v488
    %v584 = vunpack.c.l.b16 %v489
    %v585 = vunpack.c.h.b16 %v489
    %v586 = vpack.c.b16 %v526, %v522
    %v587 = vpack.c.b16 %v527, %v523
    %v588 = vpack.c.b16 %v528, %v524
    %v589 = vpack.c.b16 %v529, %v525
    %v590 = vpack.c.b16 %v534, %v530
    %v591 = vpack.c.b16 %v535, %v531
    %v592 = vpack.c.b16 %v536, %v532
    %v593 = vpack.c.b16 %v537, %v533
    %v594 = vpack.c.b16 %v542, %v538
    %v595 = vpack.c.b16 %v543, %v539
    %v596 = vpack.c.b16 %v544, %v540
    %v597 = vpack.c.b16 %v545, %v541
    %v598 = vpack.c.b16 %v550, %v546
    %v599 = vpack.c.b16 %v551, %v547
    %v600 = vpack.c.b16 %v552, %v548
    %v601 = vpack.c.b16 %v553, %v549
    %v602 = vpack.c.b16 %v558, %v554
    %v603 = vpack.c.b16 %v559, %v555
    %v604 = vpack.c.b16 %v560, %v556
    %v605 = vpack.c.b16 %v561, %v557
    %v606 = vpack.c.b16 %v566, %v562
    %v607 = vpack.c.b16 %v567, %v563
    %v608 = vpack.c.b16 %v568, %v564
    %v609 = vpack.c.b16 %v569, %v565
    %v610 = vpack.c.b16 %v574, %v570
    %v611 = vpack.c.b16 %v575, %v571
    %v612 = vpack.c.b16 %v576, %v572
    %v613 = vpack.c.b16 %v577, %v573
    %v614 = vpack.c.b16 %v582, %v578
    %v615 = vpack.c.b16 %v583, %v579
    %v616 = vpack.c.b16 %v584, %v580
    %v617 = vpack.c.b16 %v585, %v581
    %650 = vmatprep.subr.bf16.mxu0 %v615
    %651 = vmatpush1.bf16.msra.mxu0 %v614
    %652 = vmatprep.subr.bf16.mxu0 %v611
    %653 = vmatpush1.bf16.msra.mxu0 %v610
    %654 = vmatprep.subr.bf16.mxu0 %v607
    %655 = vmatpush1.bf16.msra.mxu0 %v606
    %656 = vmatprep.subr.bf16.mxu0 %v603
    %657 = vmatpush1.bf16.msra.mxu0 %v602
    %658 = vmatprep.subr.bf16.mxu0 %v599
    %659 = vmatpush1.bf16.msra.mxu0 %v598
    %660 = vmatprep.subr.bf16.mxu0 %v595
    %661 = vmatpush1.bf16.msra.mxu0 %v594
    %662 = vmatprep.subr.bf16.mxu0 %v591
    %663 = vmatpush1.bf16.msra.mxu0 %v590
    %664 = vmatprep.subr.bf16.mxu0 %v587
    %665 = vmatpush1.bf16.msra.mxu0 %v586
    %666 = vmatprep.subr.bf16.mxu0 0
    %667 = vmatpush2.bf16.msra.mxu0 0
    %668 = vmatprep.subr.bf16.mxu0 0
    %669 = vmatpush2.bf16.msra.mxu0 0
    %670 = vmatprep.subr.bf16.mxu0 0
    %671 = vmatpush2.bf16.msra.mxu0 0
    %672 = vmatprep.subr.bf16.mxu0 0
    %673 = vmatpush2.bf16.msra.mxu0 0
    %674 = vmatprep.subr.bf16.mxu0 0
    %675 = vmatpush2.bf16.msra.mxu0 0
    %676 = vmatprep.subr.bf16.mxu0 0
    %677 = vmatpush2.bf16.msra.mxu0 0
    %678 = vmatprep.subr.bf16.mxu0 0
    %679 = vmatpush2.bf16.msra.mxu0 0
    %680 = vmatprep.subr.bf16.mxu0 0
    %681 = vmatpush2.bf16.msra.mxu0 0
    %682 = vmatprep.mubr.bf16.mxu0 0
    %683 = vmatmul.mubr.bf16.gmra.mxu0 %v457
    %v684 = vpop.f32.mrf.mxu0
    %v685 = vadd.f32 0.0, %v684
    %v686 = vpop.f32.mrf.mxu0
    %v687 = vadd.f32 0.0, %v686
    %v688 = vpop.f32.mrf.mxu0
    %v689 = vpop.f32.mrf.mxu0
    %690 = vdwg.mxu0
    %691 = vmatprep.subr.bf16.mxu0 %v617
    %692 = vmatpush1.bf16.msra.mxu0 %v616
    %693 = vmatprep.subr.bf16.mxu0 %v613
    %694 = vmatpush1.bf16.msra.mxu0 %v612
    %695 = vmatprep.subr.bf16.mxu0 %v609
    %696 = vmatpush1.bf16.msra.mxu0 %v608
    %697 = vmatprep.subr.bf16.mxu0 %v605
    %698 = vmatpush1.bf16.msra.mxu0 %v604
    %699 = vmatprep.subr.bf16.mxu0 %v601
    %700 = vmatpush1.bf16.msra.mxu0 %v600
    %701 = vmatprep.subr.bf16.mxu0 %v597
    %702 = vmatpush1.bf16.msra.mxu0 %v596
    %703 = vmatprep.subr.bf16.mxu0 %v593
    %704 = vmatpush1.bf16.msra.mxu0 %v592
    %705 = vmatprep.subr.bf16.mxu0 %v589
    %706 = vmatpush1.bf16.msra.mxu0 %v588
    %707 = vmatprep.subr.bf16.mxu0 0
    %708 = vmatpush2.bf16.msra.mxu0 0
    %709 = vmatprep.subr.bf16.mxu0 0
    %710 = vmatpush2.bf16.msra.mxu0 0
    %711 = vmatprep.subr.bf16.mxu0 0
    %712 = vmatpush2.bf16.msra.mxu0 0
    %713 = vmatprep.subr.bf16.mxu0 0
    %714 = vmatpush2.bf16.msra.mxu0 0
    %715 = vmatprep.subr.bf16.mxu0 0
    %716 = vmatpush2.bf16.msra.mxu0 0
    %717 = vmatprep.subr.bf16.mxu0 0
    %718 = vmatpush2.bf16.msra.mxu0 0
    %719 = vmatprep.subr.bf16.mxu0 0
    %720 = vmatpush2.bf16.msra.mxu0 0
    %721 = vmatprep.subr.bf16.mxu0 0
    %722 = vmatpush2.bf16.msra.mxu0 0
    %723 = vmatprep.mubr.bf16.mxu0 0
    %724 = vmatmul.mubr.bf16.gmra.mxu0 %v457
    %v725 = vpop.f32.mrf.mxu0
    %v726 = vadd.f32 0.0, %v725
    %v727 = vpop.f32.mrf.mxu0
    %v728 = vadd.f32 0.0, %v727
    %v729 = vpop.f32.mrf.mxu0
    %v730 = vpop.f32.mrf.mxu0
    %731 = vdwg.mxu0
    %v732 = vadd.f32 %v453, %v685
    %v733 = vadd.f32 %v454, %v687
    %v734 = vadd.f32 %v455, %v726
    %v735 = vadd.f32 %v456, %v728
    %v736 = vxor.u32 %v732, 2147483648
    %v737 = vxor.u32 %v733, 2147483648
    %v738 = vxor.u32 %v734, 2147483648
    %v739 = vmul.f32 %v736, 1.442695
    %v740 = vpow.pop %v739
    %v741 = vmul.f32 %v737, 1.442695
    %v742 = vpow.pop %v741
    %v743 = vmul.f32 %v738, 1.442695
    %v744 = vpow.pop %v743
    %v745 = vadd.f32 %v740, 1.0
    %v746 = vadd.f32 %v742, 1.0
    %v747 = vadd.f32 %v744, 1.0
    %v748 = vrcp.pop %v745
    %v749 = vmul.f32 1.0, %v748
    %v750 = vrcp.pop %v746
    %v751 = vmul.f32 1.0, %v750
    %v752 = vrcp.pop %v747
    %v753 = vmul.f32 1.0, %v752
    %v754 = vtanh.pop %v735
    %v755 = vmul.f32 %v751, %v449
    %v756 = vmul.f32 %v749, %v754
    %v757 = vadd.f32 %v755, %v756
    %v758 = vtanh.pop %v757
    %v759 = vmul.f32 %v753, %v758
    %s760 = smul.u32 1, 4
    %s761 = smul.addr %s760, 8
    %s762 = scalar_lea.vmem [#allocation4], %s761
    %v763 = vld [vmem:[%s762] sm:$0xff]
    %v764 = vld [vmem:[%s762 + $0x8] sm:$0xff]
    %v765 = vld [vmem:[%s762 + $0x10] sm:$0xff]
    %v766 = vld [vmem:[%s762 + $0x18] sm:$0xff]
    %v767 = vpack.c.bf16 %v759, %v759
    %768 = vmatprep.subr.bf16.mxu0 %v615
    %769 = vmatpush1.bf16.msra.mxu0 %v614
    %770 = vmatprep.subr.bf16.mxu0 %v611
    %771 = vmatpush1.bf16.msra.mxu0 %v610
    %772 = vmatprep.subr.bf16.mxu0 %v607
    %773 = vmatpush1.bf16.msra.mxu0 %v606
    %774 = vmatprep.subr.bf16.mxu0 %v603
    %775 = vmatpush1.bf16.msra.mxu0 %v602
    %776 = vmatprep.subr.bf16.mxu0 %v599
    %777 = vmatpush1.bf16.msra.mxu0 %v598
    %778 = vmatprep.subr.bf16.mxu0 %v595
    %779 = vmatpush1.bf16.msra.mxu0 %v594
    %780 = vmatprep.subr.bf16.mxu0 %v591
    %781 = vmatpush1.bf16.msra.mxu0 %v590
    %782 = vmatprep.subr.bf16.mxu0 %v587
    %783 = vmatpush1.bf16.msra.mxu0 %v586
    %784 = vmatprep.subr.bf16.mxu0 0
    %785 = vmatpush2.bf16.msra.mxu0 0
    %786 = vmatprep.subr.bf16.mxu0 0
    %787 = vmatpush2.bf16.msra.mxu0 0
    %788 = vmatprep.subr.bf16.mxu0 0
    %789 = vmatpush2.bf16.msra.mxu0 0
    %790 = vmatprep.subr.bf16.mxu0 0
    %791 = vmatpush2.bf16.msra.mxu0 0
    %792 = vmatprep.subr.bf16.mxu0 0
    %793 = vmatpush2.bf16.msra.mxu0 0
    %794 = vmatprep.subr.bf16.mxu0 0
    %795 = vmatpush2.bf16.msra.mxu0 0
    %796 = vmatprep.subr.bf16.mxu0 0
    %797 = vmatpush2.bf16.msra.mxu0 0
    %798 = vmatprep.subr.bf16.mxu0 0
    %799 = vmatpush2.bf16.msra.mxu0 0
    %800 = vmatprep.mubr.bf16.mxu0 0
    %801 = vmatmul.mubr.bf16.gmra.mxu0 %v767
    %v802 = vpop.f32.mrf.mxu0
    %v803 = vadd.f32 0.0, %v802
    %v804 = vpop.f32.mrf.mxu0
    %v805 = vadd.f32 0.0, %v804
    %v806 = vpop.f32.mrf.mxu0
    %v807 = vpop.f32.mrf.mxu0
    %808 = vdwg.mxu0
    %809 = vmatprep.subr.bf16.mxu0 %v617
    %810 = vmatpush1.bf16.msra.mxu0 %v616
    %811 = vmatprep.subr.bf16.mxu0 %v613
    %812 = vmatpush1.bf16.msra.mxu0 %v612
    %813 = vmatprep.subr.bf16.mxu0 %v609
    %814 = vmatpush1.bf16.msra.mxu0 %v608
    %815 = vmatprep.subr.bf16.mxu0 %v605
    %816 = vmatpush1.bf16.msra.mxu0 %v604
    %817 = vmatprep.subr.bf16.mxu0 %v601
    %818 = vmatpush1.bf16.msra.mxu0 %v600
    %819 = vmatprep.subr.bf16.mxu0 %v597
    %820 = vmatpush1.bf16.msra.mxu0 %v596
    %821 = vmatprep.subr.bf16.mxu0 %v593
    %822 = vmatpush1.bf16.msra.mxu0 %v592
    %823 = vmatprep.subr.bf16.mxu0 %v589
    %824 = vmatpush1.bf16.msra.mxu0 %v588
    %825 = vmatprep.subr.bf16.mxu0 0
    %826 = vmatpush2.bf16.msra.mxu0 0
    %827 = vmatprep.subr.bf16.mxu0 0
    %828 = vmatpush2.bf16.msra.mxu0 0
    %829 = vmatprep.subr.bf16.mxu0 0
    %830 = vmatpush2.bf16.msra.mxu0 0
    %831 = vmatprep.subr.bf16.mxu0 0
    %832 = vmatpush2.bf16.msra.mxu0 0
    %833 = vmatprep.subr.bf16.mxu0 0
    %834 = vmatpush2.bf16.msra.mxu0 0
    %835 = vmatprep.subr.bf16.mxu0 0
    %836 = vmatpush2.bf16.msra.mxu0 0
    %837 = vmatprep.subr.bf16.mxu0 0
    %838 = vmatpush2.bf16.msra.mxu0 0
    %839 = vmatprep.subr.bf16.mxu0 0
    %840 = vmatpush2.bf16.msra.mxu0 0
    %841 = vmatprep.mubr.bf16.mxu0 0
    %842 = vmatmul.mubr.bf16.gmra.mxu0 %v767
    %v843 = vpop.f32.mrf.mxu0
    %v844 = vadd.f32 0.0, %v843
    %v845 = vpop.f32.mrf.mxu0
    %v846 = vadd.f32 0.0, %v845
    %v847 = vpop.f32.mrf.mxu0
    %v848 = vpop.f32.mrf.mxu0
    %849 = vdwg.mxu0
    %v850 = vadd.f32 %v763, %v803
    %v851 = vadd.f32 %v764, %v805
    %v852 = vadd.f32 %v765, %v844
    %v853 = vadd.f32 %v766, %v846
    %v854 = vxor.u32 %v850, 2147483648
    %v855 = vxor.u32 %v851, 2147483648
    %v856 = vxor.u32 %v852, 2147483648
    %v857 = vmul.f32 %v854, 1.442695
    %v858 = vpow.pop %v857
    %v859 = vmul.f32 %v855, 1.442695
    %v860 = vpow.pop %v859
    %v861 = vmul.f32 %v856, 1.442695
    %v862 = vpow.pop %v861
    %v863 = vadd.f32 %v858, 1.0
    %v864 = vadd.f32 %v860, 1.0
    %v865 = vadd.f32 %v862, 1.0
    %v866 = vrcp.pop %v863
    %v867 = vmul.f32 1.0, %v866
    %v868 = vrcp.pop %v864
    %v869 = vmul.f32 1.0, %v868
    %v870 = vrcp.pop %v865
    %v871 = vmul.f32 1.0, %v870
    %v872 = vtanh.pop %v853
    %v873 = vmul.f32 %v869, %v757
    %v874 = vmul.f32 %v867, %v872
    %v875 = vadd.f32 %v873, %v874
    %v876 = vtanh.pop %v875
    %v877 = vmul.f32 %v871, %v876
    %s878 = smul.u32 2, 4
    %s879 = smul.addr %s878, 8
    %s880 = scalar_lea.vmem [#allocation4], %s879
    %v881 = vld [vmem:[%s880] sm:$0xff]
    %v882 = vld [vmem:[%s880 + $0x8] sm:$0xff]
    %v883 = vld [vmem:[%s880 + $0x10] sm:$0xff]
    %v884 = vld [vmem:[%s880 + $0x18] sm:$0xff]
    %v885 = vpack.c.bf16 %v877, %v877
    %886 = vmatprep.subr.bf16.mxu0 %v615
    %887 = vmatpush1.bf16.msra.mxu0 %v614
    %888 = vmatprep.subr.bf16.mxu0 %v611
    %889 = vmatpush1.bf16.msra.mxu0 %v610
    %890 = vmatprep.subr.bf16.mxu0 %v607
    %891 = vmatpush1.bf16.msra.mxu0 %v606
    %892 = vmatprep.subr.bf16.mxu0 %v603
    %893 = vmatpush1.bf16.msra.mxu0 %v602
    %894 = vmatprep.subr.bf16.mxu0 %v599
    %895 = vmatpush1.bf16.msra.mxu0 %v598
    %896 = vmatprep.subr.bf16.mxu0 %v595
    %897 = vmatpush1.bf16.msra.mxu0 %v594
    %898 = vmatprep.subr.bf16.mxu0 %v591
    %899 = vmatpush1.bf16.msra.mxu0 %v590
    %900 = vmatprep.subr.bf16.mxu0 %v587
    %901 = vmatpush1.bf16.msra.mxu0 %v586
    %902 = vmatprep.subr.bf16.mxu0 0
    %903 = vmatpush2.bf16.msra.mxu0 0
    %904 = vmatprep.subr.bf16.mxu0 0
    %905 = vmatpush2.bf16.msra.mxu0 0
    %906 = vmatprep.subr.bf16.mxu0 0
    %907 = vmatpush2.bf16.msra.mxu0 0
    %908 = vmatprep.subr.bf16.mxu0 0
    %909 = vmatpush2.bf16.msra.mxu0 0
    %910 = vmatprep.subr.bf16.mxu0 0
    %911 = vmatpush2.bf16.msra.mxu0 0
    %912 = vmatprep.subr.bf16.mxu0 0
    %913 = vmatpush2.bf16.msra.mxu0 0
    %914 = vmatprep.subr.bf16.mxu0 0
    %915 = vmatpush2.bf16.msra.mxu0 0
    %916 = vmatprep.subr.bf16.mxu0 0
    %917 = vmatpush2.bf16.msra.mxu0 0
    %918 = vmatprep.mubr.bf16.mxu0 0
    %919 = vmatmul.mubr.bf16.gmra.mxu0 %v885
    %v920 = vpop.f32.mrf.mxu0
    %v921 = vadd.f32 0.0, %v920
    %v922 = vpop.f32.mrf.mxu0
    %v923 = vadd.f32 0.0, %v922
    %v924 = vpop.f32.mrf.mxu0
    %v925 = vpop.f32.mrf.mxu0
    %926 = vdwg.mxu0
    %927 = vmatprep.subr.bf16.mxu0 %v617
    %928 = vmatpush1.bf16.msra.mxu0 %v616
    %929 = vmatprep.subr.bf16.mxu0 %v613
    %930 = vmatpush1.bf16.msra.mxu0 %v612
    %931 = vmatprep.subr.bf16.mxu0 %v609
    %932 = vmatpush1.bf16.msra.mxu0 %v608
    %933 = vmatprep.subr.bf16.mxu0 %v605
    %934 = vmatpush1.bf16.msra.mxu0 %v604
    %935 = vmatprep.subr.bf16.mxu0 %v601
    %936 = vmatpush1.bf16.msra.mxu0 %v600
    %937 = vmatprep.subr.bf16.mxu0 %v597
    %938 = vmatpush1.bf16.msra.mxu0 %v596
    %939 = vmatprep.subr.bf16.mxu0 %v593
    %940 = vmatpush1.bf16.msra.mxu0 %v592
    %941 = vmatprep.subr.bf16.mxu0 %v589
    %942 = vmatpush1.bf16.msra.mxu0 %v588
    %943 = vmatprep.subr.bf16.mxu0 0
    %944 = vmatpush2.bf16.msra.mxu0 0
    %945 = vmatprep.subr.bf16.mxu0 0
    %946 = vmatpush2.bf16.msra.mxu0 0
    %947 = vmatprep.subr.bf16.mxu0 0
    %948 = vmatpush2.bf16.msra.mxu0 0
    %949 = vmatprep.subr.bf16.mxu0 0
    %950 = vmatpush2.bf16.msra.mxu0 0
    %951 = vmatprep.subr.bf16.mxu0 0
    %952 = vmatpush2.bf16.msra.mxu0 0
    %953 = vmatprep.subr.bf16.mxu0 0
    %954 = vmatpush2.bf16.msra.mxu0 0
    %955 = vmatprep.subr.bf16.mxu0 0
    %956 = vmatpush2.bf16.msra.mxu0 0
    %957 = vmatprep.subr.bf16.mxu0 0
    %958 = vmatpush2.bf16.msra.mxu0 0
    %959 = vmatprep.mubr.bf16.mxu0 0
    %960 = vmatmul.mubr.bf16.gmra.mxu0 %v885
    %v961 = vpop.f32.mrf.mxu0
    %v962 = vadd.f32 0.0, %v961
    %v963 = vpop.f32.mrf.mxu0
    %v964 = vadd.f32 0.0, %v963
    %v965 = vpop.f32.mrf.mxu0
    %v966 = vpop.f32.mrf.mxu0
    %967 = vdwg.mxu0
    %v968 = vadd.f32 %v881, %v921
    %v969 = vadd.f32 %v882, %v923
    %v970 = vadd.f32 %v883, %v962
    %v971 = vadd.f32 %v884, %v964
    %v972 = vxor.u32 %v968, 2147483648
    %v973 = vxor.u32 %v969, 2147483648
    %v974 = vxor.u32 %v970, 2147483648
    %v975 = vmul.f32 %v972, 1.442695
    %v976 = vpow.pop %v975
    %v977 = vmul.f32 %v973, 1.442695
    %v978 = vpow.pop %v977
    %v979 = vmul.f32 %v974, 1.442695
    %v980 = vpow.pop %v979
    %v981 = vadd.f32 %v976, 1.0
    %v982 = vadd.f32 %v978, 1.0
    %v983 = vadd.f32 %v980, 1.0
    %v984 = vrcp.pop %v981
    %v985 = vmul.f32 1.0, %v984
    %v986 = vrcp.pop %v982
    %v987 = vmul.f32 1.0, %v986
    %v988 = vrcp.pop %v983
    %v989 = vmul.f32 1.0, %v988
    %v990 = vtanh.pop %v971
    %v991 = vmul.f32 %v987, %v875
    %v992 = vmul.f32 %v985, %v990
    %v993 = vadd.f32 %v991, %v992
    %v994 = vtanh.pop %v993
    %v995 = vmul.f32 %v989, %v994
    %s996 = smul.u32 3, 4
    %s997 = smul.addr %s996, 8
    %s998 = scalar_lea.vmem [#allocation4], %s997
    %v999 = vld [vmem:[%s998] sm:$0xff]
    %v1000 = vld [vmem:[%s998 + $0x8] sm:$0xff]
    %v1001 = vld [vmem:[%s998 + $0x10] sm:$0xff]
    %v1002 = vld [vmem:[%s998 + $0x18] sm:$0xff]
    %v1003 = vpack.c.bf16 %v995, %v995
    %1004 = vmatprep.subr.bf16.mxu0 %v615
    %1005 = vmatpush1.bf16.msra.mxu0 %v614
    %1006 = vmatprep.subr.bf16.mxu0 %v611
    %1007 = vmatpush1.bf16.msra.mxu0 %v610
    %1008 = vmatprep.subr.bf16.mxu0 %v607
    %1009 = vmatpush1.bf16.msra.mxu0 %v606
    %1010 = vmatprep.subr.bf16.mxu0 %v603
    %1011 = vmatpush1.bf16.msra.mxu0 %v602
    %1012 = vmatprep.subr.bf16.mxu0 %v599
    %1013 = vmatpush1.bf16.msra.mxu0 %v598
    %1014 = vmatprep.subr.bf16.mxu0 %v595
    %1015 = vmatpush1.bf16.msra.mxu0 %v594
    %1016 = vmatprep.subr.bf16.mxu0 %v591
    %1017 = vmatpush1.bf16.msra.mxu0 %v590
    %1018 = vmatprep.subr.bf16.mxu0 %v587
    %1019 = vmatpush1.bf16.msra.mxu0 %v586
    %1020 = vmatprep.subr.bf16.mxu0 0
    %1021 = vmatpush2.bf16.msra.mxu0 0
    %1022 = vmatprep.subr.bf16.mxu0 0
    %1023 = vmatpush2.bf16.msra.mxu0 0
    %1024 = vmatprep.subr.bf16.mxu0 0
    %1025 = vmatpush2.bf16.msra.mxu0 0
    %1026 = vmatprep.subr.bf16.mxu0 0
    %1027 = vmatpush2.bf16.msra.mxu0 0
    %1028 = vmatprep.subr.bf16.mxu0 0
    %1029 = vmatpush2.bf16.msra.mxu0 0
    %1030 = vmatprep.subr.bf16.mxu0 0
    %1031 = vmatpush2.bf16.msra.mxu0 0
    %1032 = vmatprep.subr.bf16.mxu0 0
    %1033 = vmatpush2.bf16.msra.mxu0 0
    %1034 = vmatprep.subr.bf16.mxu0 0
    %1035 = vmatpush2.bf16.msra.mxu0 0
    %1036 = vmatprep.mubr.bf16.mxu0 0
    %1037 = vmatmul.mubr.bf16.gmra.mxu0 %v1003
    %v1038 = vpop.f32.mrf.mxu0
    %v1039 = vadd.f32 0.0, %v1038
    %v1040 = vpop.f32.mrf.mxu0
    %v1041 = vadd.f32 0.0, %v1040
    %v1042 = vpop.f32.mrf.mxu0
    %v1043 = vpop.f32.mrf.mxu0
    %1044 = vdwg.mxu0
    %1045 = vmatprep.subr.bf16.mxu0 %v617
    %1046 = vmatpush1.bf16.msra.mxu0 %v616
    %1047 = vmatprep.subr.bf16.mxu0 %v613
    %1048 = vmatpush1.bf16.msra.mxu0 %v612
    %1049 = vmatprep.subr.bf16.mxu0 %v609
    %1050 = vmatpush1.bf16.msra.mxu0 %v608
    %1051 = vmatprep.subr.bf16.mxu0 %v605
    %1052 = vmatpush1.bf16.msra.mxu0 %v604
    %1053 = vmatprep.subr.bf16.mxu0 %v601
    %1054 = vmatpush1.bf16.msra.mxu0 %v600
    %1055 = vmatprep.subr.bf16.mxu0 %v597
    %1056 = vmatpush1.bf16.msra.mxu0 %v596
    %1057 = vmatprep.subr.bf16.mxu0 %v593
    %1058 = vmatpush1.bf16.msra.mxu0 %v592
    %1059 = vmatprep.subr.bf16.mxu0 %v589
    %1060 = vmatpush1.bf16.msra.mxu0 %v588
    %1061 = vmatprep.subr.bf16.mxu0 0
    %1062 = vmatpush2.bf16.msra.mxu0 0
    %1063 = vmatprep.subr.bf16.mxu0 0
    %1064 = vmatpush2.bf16.msra.mxu0 0
    %1065 = vmatprep.subr.bf16.mxu0 0
    %1066 = vmatpush2.bf16.msra.mxu0 0
    %1067 = vmatprep.subr.bf16.mxu0 0
    %1068 = vmatpush2.bf16.msra.mxu0 0
    %1069 = vmatprep.subr.bf16.mxu0 0
    %1070 = vmatpush2.bf16.msra.mxu0 0
    %1071 = vmatprep.subr.bf16.mxu0 0
    %1072 = vmatpush2.bf16.msra.mxu0 0
    %1073 = vmatprep.subr.bf16.mxu0 0
    %1074 = vmatpush2.bf16.msra.mxu0 0
    %1075 = vmatprep.subr.bf16.mxu0 0
    %1076 = vmatpush2.bf16.msra.mxu0 0
    %1077 = vmatprep.mubr.bf16.mxu0 0
    %1078 = vmatmul.mubr.bf16.gmra.mxu0 %v1003
    %v1079 = vpop.f32.mrf.mxu0
    %v1080 = vadd.f32 0.0, %v1079
    %v1081 = vpop.f32.mrf.mxu0
    %v1082 = vadd.f32 0.0, %v1081
    %v1083 = vpop.f32.mrf.mxu0
    %v1084 = vpop.f32.mrf.mxu0
    %1085 = vdwg.mxu0
    %v1086 = vadd.f32 %v999, %v1039
    %v1087 = vadd.f32 %v1000, %v1041
    %v1088 = vadd.f32 %v1001, %v1080
    %v1089 = vadd.f32 %v1002, %v1082
    %v1090 = vxor.u32 %v1086, 2147483648
    %v1091 = vxor.u32 %v1087, 2147483648
    %v1092 = vxor.u32 %v1088, 2147483648
    %v1093 = vmul.f32 %v1090, 1.442695
    %v1094 = vpow.pop %v1093
    %v1095 = vmul.f32 %v1091, 1.442695
    %v1096 = vpow.pop %v1095
    %v1097 = vmul.f32 %v1092, 1.442695
    %v1098 = vpow.pop %v1097
    %v1099 = vadd.f32 %v1094, 1.0
    %v1100 = vadd.f32 %v1096, 1.0
    %v1101 = vadd.f32 %v1098, 1.0
    %v1102 = vrcp.pop %v1099
    %v1103 = vmul.f32 1.0, %v1102
    %v1104 = vrcp.pop %v1100
    %v1105 = vmul.f32 1.0, %v1104
    %v1106 = vrcp.pop %v1101
    %v1107 = vmul.f32 1.0, %v1106
    %v1108 = vtanh.pop %v1089
    %v1109 = vmul.f32 %v1105, %v993
    %v1110 = vmul.f32 %v1103, %v1108
    %v1111 = vadd.f32 %v1109, %v1110
    %v1112 = vtanh.pop %v1111
    %v1113 = vmul.f32 %v1107, %v1112
    %s1114 = smul.u32 4, 4
    %s1115 = smul.addr %s1114, 8
    %s1116 = scalar_lea.vmem [#allocation4], %s1115
    %v1117 = vld [vmem:[%s1116] sm:$0xff]
    %v1118 = vld [vmem:[%s1116 + $0x8] sm:$0xff]
    %v1119 = vld [vmem:[%s1116 + $0x10] sm:$0xff]
    %v1120 = vld [vmem:[%s1116 + $0x18] sm:$0xff]
    %v1121 = vpack.c.bf16 %v1113, %v1113
    %1122 = vmatprep.subr.bf16.mxu0 %v615
    %1123 = vmatpush1.bf16.msra.mxu0 %v614
    %1124 = vmatprep.subr.bf16.mxu0 %v611
    %1125 = vmatpush1.bf16.msra.mxu0 %v610
    %1126 = vmatprep.subr.bf16.mxu0 %v607
    %1127 = vmatpush1.bf16.msra.mxu0 %v606
    %1128 = vmatprep.subr.bf16.mxu0 %v603
    %1129 = vmatpush1.bf16.msra.mxu0 %v602
    %1130 = vmatprep.subr.bf16.mxu0 %v599
    %1131 = vmatpush1.bf16.msra.mxu0 %v598
    %1132 = vmatprep.subr.bf16.mxu0 %v595
    %1133 = vmatpush1.bf16.msra.mxu0 %v594
    %1134 = vmatprep.subr.bf16.mxu0 %v591
    %1135 = vmatpush1.bf16.msra.mxu0 %v590
    %1136 = vmatprep.subr.bf16.mxu0 %v587
    %1137 = vmatpush1.bf16.msra.mxu0 %v586
    %1138 = vmatprep.subr.bf16.mxu0 0
    %1139 = vmatpush2.bf16.msra.mxu0 0
    %1140 = vmatprep.subr.bf16.mxu0 0
    %1141 = vmatpush2.bf16.msra.mxu0 0
    %1142 = vmatprep.subr.bf16.mxu0 0
    %1143 = vmatpush2.bf16.msra.mxu0 0
    %1144 = vmatprep.subr.bf16.mxu0 0
    %1145 = vmatpush2.bf16.msra.mxu0 0
    %1146 = vmatprep.subr.bf16.mxu0 0
    %1147 = vmatpush2.bf16.msra.mxu0 0
    %1148 = vmatprep.subr.bf16.mxu0 0
    %1149 = vmatpush2.bf16.msra.mxu0 0
    %1150 = vmatprep.subr.bf16.mxu0 0
    %1151 = vmatpush2.bf16.msra.mxu0 0
    %1152 = vmatprep.subr.bf16.mxu0 0
    %1153 = vmatpush2.bf16.msra.mxu0 0
    %1154 = vmatprep.mubr.bf16.mxu0 0
    %1155 = vmatmul.mubr.bf16.gmra.mxu0 %v1121
    %v1156 = vpop.f32.mrf.mxu0
    %v1157 = vadd.f32 0.0, %v1156
    %v1158 = vpop.f32.mrf.mxu0
    %v1159 = vadd.f32 0.0, %v1158
    %v1160 = vpop.f32.mrf.mxu0
    %v1161 = vpop.f32.mrf.mxu0
    %1162 = vdwg.mxu0
    %1163 = vmatprep.subr.bf16.mxu0 %v617
    %1164 = vmatpush1.bf16.msra.mxu0 %v616
    %1165 = vmatprep.subr.bf16.mxu0 %v613
    %1166 = vmatpush1.bf16.msra.mxu0 %v612
    %1167 = vmatprep.subr.bf16.mxu0 %v609
    %1168 = vmatpush1.bf16.msra.mxu0 %v608
    %1169 = vmatprep.subr.bf16.mxu0 %v605
    %1170 = vmatpush1.bf16.msra.mxu0 %v604
    %1171 = vmatprep.subr.bf16.mxu0 %v601
    %1172 = vmatpush1.bf16.msra.mxu0 %v600
    %1173 = vmatprep.subr.bf16.mxu0 %v597
    %1174 = vmatpush1.bf16.msra.mxu0 %v596
    %1175 = vmatprep.subr.bf16.mxu0 %v593
    %1176 = vmatpush1.bf16.msra.mxu0 %v592
    %1177 = vmatprep.subr.bf16.mxu0 %v589
    %1178 = vmatpush1.bf16.msra.mxu0 %v588
    %1179 = vmatprep.subr.bf16.mxu0 0
    %1180 = vmatpush2.bf16.msra.mxu0 0
    %1181 = vmatprep.subr.bf16.mxu0 0
    %1182 = vmatpush2.bf16.msra.mxu0 0
    %1183 = vmatprep.subr.bf16.mxu0 0
    %1184 = vmatpush2.bf16.msra.mxu0 0
    %1185 = vmatprep.subr.bf16.mxu0 0
    %1186 = vmatpush2.bf16.msra.mxu0 0
    %1187 = vmatprep.subr.bf16.mxu0 0
    %1188 = vmatpush2.bf16.msra.mxu0 0
    %1189 = vmatprep.subr.bf16.mxu0 0
    %1190 = vmatpush2.bf16.msra.mxu0 0
    %1191 = vmatprep.subr.bf16.mxu0 0
    %1192 = vmatpush2.bf16.msra.mxu0 0
    %1193 = vmatprep.subr.bf16.mxu0 0
    %1194 = vmatpush2.bf16.msra.mxu0 0
    %1195 = vmatprep.mubr.bf16.mxu0 0
    %1196 = vmatmul.mubr.bf16.gmra.mxu0 %v1121
    %v1197 = vpop.f32.mrf.mxu0
    %v1198 = vadd.f32 0.0, %v1197
    %v1199 = vpop.f32.mrf.mxu0
    %v1200 = vadd.f32 0.0, %v1199
    %v1201 = vpop.f32.mrf.mxu0
    %v1202 = vpop.f32.mrf.mxu0
    %1203 = vdwg.mxu0
    %v1204 = vadd.f32 %v1117, %v1157
    %v1205 = vadd.f32 %v1118, %v1159
    %v1206 = vadd.f32 %v1119, %v1198
    %v1207 = vadd.f32 %v1120, %v1200
    %v1208 = vxor.u32 %v1204, 2147483648
    %v1209 = vxor.u32 %v1205, 2147483648
    %v1210 = vxor.u32 %v1206, 2147483648
    %v1211 = vmul.f32 %v1208, 1.442695
    %v1212 = vpow.pop %v1211
    %v1213 = vmul.f32 %v1209, 1.442695
    %v1214 = vpow.pop %v1213
    %v1215 = vmul.f32 %v1210, 1.442695
    %v1216 = vpow.pop %v1215
    %v1217 = vadd.f32 %v1212, 1.0
    %v1218 = vadd.f32 %v1214, 1.0
    %v1219 = vadd.f32 %v1216, 1.0
    %v1220 = vrcp.pop %v1217
    %v1221 = vmul.f32 1.0, %v1220
    %v1222 = vrcp.pop %v1218
    %v1223 = vmul.f32 1.0, %v1222
    %v1224 = vrcp.pop %v1219
    %v1225 = vmul.f32 1.0, %v1224
    %v1226 = vtanh.pop %v1207
    %v1227 = vmul.f32 %v1223, %v1111
    %v1228 = vmul.f32 %v1221, %v1226
    %v1229 = vadd.f32 %v1227, %v1228
    %v1230 = vtanh.pop %v1229
    %v1231 = vmul.f32 %v1225, %v1230
    %s1232 = smul.u32 5, 4
    %s1233 = smul.addr %s1232, 8
    %s1234 = scalar_lea.vmem [#allocation4], %s1233
    %v1235 = vld [vmem:[%s1234] sm:$0xff]
    %v1236 = vld [vmem:[%s1234 + $0x8] sm:$0xff]
    %v1237 = vld [vmem:[%s1234 + $0x10] sm:$0xff]
    %v1238 = vld [vmem:[%s1234 + $0x18] sm:$0xff]
    %v1239 = vpack.c.bf16 %v1231, %v1231
    %1240 = vmatprep.subr.bf16.mxu0 %v615
    %1241 = vmatpush1.bf16.msra.mxu0 %v614
    %1242 = vmatprep.subr.bf16.mxu0 %v611
    %1243 = vmatpush1.bf16.msra.mxu0 %v610
    %1244 = vmatprep.subr.bf16.mxu0 %v607
    %1245 = vmatpush1.bf16.msra.mxu0 %v606
    %1246 = vmatprep.subr.bf16.mxu0 %v603
    %1247 = vmatpush1.bf16.msra.mxu0 %v602
    %1248 = vmatprep.subr.bf16.mxu0 %v599
    %1249 = vmatpush1.bf16.msra.mxu0 %v598
    %1250 = vmatprep.subr.bf16.mxu0 %v595
    %1251 = vmatpush1.bf16.msra.mxu0 %v594
    %1252 = vmatprep.subr.bf16.mxu0 %v591
    %1253 = vmatpush1.bf16.msra.mxu0 %v590
    %1254 = vmatprep.subr.bf16.mxu0 %v587
    %1255 = vmatpush1.bf16.msra.mxu0 %v586
    %1256 = vmatprep.subr.bf16.mxu0 0
    %1257 = vmatpush2.bf16.msra.mxu0 0
    %1258 = vmatprep.subr.bf16.mxu0 0
    %1259 = vmatpush2.bf16.msra.mxu0 0
    %1260 = vmatprep.subr.bf16.mxu0 0
    %1261 = vmatpush2.bf16.msra.mxu0 0
    %1262 = vmatprep.subr.bf16.mxu0 0
    %1263 = vmatpush2.bf16.msra.mxu0 0
    %1264 = vmatprep.subr.bf16.mxu0 0
    %1265 = vmatpush2.bf16.msra.mxu0 0
    %1266 = vmatprep.subr.bf16.mxu0 0
    %1267 = vmatpush2.bf16.msra.mxu0 0
    %1268 = vmatprep.subr.bf16.mxu0 0
    %1269 = vmatpush2.bf16.msra.mxu0 0
    %1270 = vmatprep.subr.bf16.mxu0 0
    %1271 = vmatpush2.bf16.msra.mxu0 0
    %1272 = vmatprep.mubr.bf16.mxu0 0
    %1273 = vmatmul.mubr.bf16.gmra.mxu0 %v1239
    %v1274 = vpop.f32.mrf.mxu0
    %v1275 = vadd.f32 0.0, %v1274
    %v1276 = vpop.f32.mrf.mxu0
    %v1277 = vadd.f32 0.0, %v1276
    %v1278 = vpop.f32.mrf.mxu0
    %v1279 = vpop.f32.mrf.mxu0
    %1280 = vdwg.mxu0
    %1281 = vmatprep.subr.bf16.mxu0 %v617
    %1282 = vmatpush1.bf16.msra.mxu0 %v616
    %1283 = vmatprep.subr.bf16.mxu0 %v613
    %1284 = vmatpush1.bf16.msra.mxu0 %v612
    %1285 = vmatprep.subr.bf16.mxu0 %v609
    %1286 = vmatpush1.bf16.msra.mxu0 %v608
    %1287 = vmatprep.subr.bf16.mxu0 %v605
    %1288 = vmatpush1.bf16.msra.mxu0 %v604
    %1289 = vmatprep.subr.bf16.mxu0 %v601
    %1290 = vmatpush1.bf16.msra.mxu0 %v600
    %1291 = vmatprep.subr.bf16.mxu0 %v597
    %1292 = vmatpush1.bf16.msra.mxu0 %v596
    %1293 = vmatprep.subr.bf16.mxu0 %v593
    %1294 = vmatpush1.bf16.msra.mxu0 %v592
    %1295 = vmatprep.subr.bf16.mxu0 %v589
    %1296 = vmatpush1.bf16.msra.mxu0 %v588
    %1297 = vmatprep.subr.bf16.mxu0 0
    %1298 = vmatpush2.bf16.msra.mxu0 0
    %1299 = vmatprep.subr.bf16.mxu0 0
    %1300 = vmatpush2.bf16.msra.mxu0 0
    %1301 = vmatprep.subr.bf16.mxu0 0
    %1302 = vmatpush2.bf16.msra.mxu0 0
    %1303 = vmatprep.subr.bf16.mxu0 0
    %1304 = vmatpush2.bf16.msra.mxu0 0
    %1305 = vmatprep.subr.bf16.mxu0 0
    %1306 = vmatpush2.bf16.msra.mxu0 0
    %1307 = vmatprep.subr.bf16.mxu0 0
    %1308 = vmatpush2.bf16.msra.mxu0 0
    %1309 = vmatprep.subr.bf16.mxu0 0
    %1310 = vmatpush2.bf16.msra.mxu0 0
    %1311 = vmatprep.subr.bf16.mxu0 0
    %1312 = vmatpush2.bf16.msra.mxu0 0
    %1313 = vmatprep.mubr.bf16.mxu0 0
    %1314 = vmatmul.mubr.bf16.gmra.mxu0 %v1239
    %v1315 = vpop.f32.mrf.mxu0
    %v1316 = vadd.f32 0.0, %v1315
    %v1317 = vpop.f32.mrf.mxu0
    %v1318 = vadd.f32 0.0, %v1317
    %v1319 = vpop.f32.mrf.mxu0
    %v1320 = vpop.f32.mrf.mxu0
    %1321 = vdwg.mxu0
    %v1322 = vadd.f32 %v1235, %v1275
    %v1323 = vadd.f32 %v1236, %v1277
    %v1324 = vadd.f32 %v1237, %v1316
    %v1325 = vadd.f32 %v1238, %v1318
    %v1326 = vxor.u32 %v1322, 2147483648
    %v1327 = vxor.u32 %v1323, 2147483648
    %v1328 = vxor.u32 %v1324, 2147483648
    %v1329 = vmul.f32 %v1326, 1.442695
    %v1330 = vpow.pop %v1329
    %v1331 = vmul.f32 %v1327, 1.442695
    %v1332 = vpow.pop %v1331
    %v1333 = vmul.f32 %v1328, 1.442695
    %v1334 = vpow.pop %v1333
    %v1335 = vadd.f32 %v1330, 1.0
    %v1336 = vadd.f32 %v1332, 1.0
    %v1337 = vadd.f32 %v1334, 1.0
    %v1338 = vrcp.pop %v1335
    %v1339 = vmul.f32 1.0, %v1338
    %v1340 = vrcp.pop %v1336
    %v1341 = vmul.f32 1.0, %v1340
    %v1342 = vrcp.pop %v1337
    %v1343 = vmul.f32 1.0, %v1342
    %v1344 = vtanh.pop %v1325
    %v1345 = vmul.f32 %v1341, %v1229
    %v1346 = vmul.f32 %v1339, %v1344
    %v1347 = vadd.f32 %v1345, %v1346
    %v1348 = vtanh.pop %v1347
    %v1349 = vmul.f32 %v1343, %v1348
    %s1350 = smul.u32 6, 4
    %s1351 = smul.addr %s1350, 8
    %s1352 = scalar_lea.vmem [#allocation4], %s1351
    %v1353 = vld [vmem:[%s1352] sm:$0xff]
    %v1354 = vld [vmem:[%s1352 + $0x8] sm:$0xff]
    %v1355 = vld [vmem:[%s1352 + $0x10] sm:$0xff]
    %v1356 = vld [vmem:[%s1352 + $0x18] sm:$0xff]
    %v1357 = vpack.c.bf16 %v1349, %v1349
    %1358 = vmatprep.subr.bf16.mxu0 %v615
    %1359 = vmatpush1.bf16.msra.mxu0 %v614
    %1360 = vmatprep.subr.bf16.mxu0 %v611
    %1361 = vmatpush1.bf16.msra.mxu0 %v610
    %1362 = vmatprep.subr.bf16.mxu0 %v607
    %1363 = vmatpush1.bf16.msra.mxu0 %v606
    %1364 = vmatprep.subr.bf16.mxu0 %v603
    %1365 = vmatpush1.bf16.msra.mxu0 %v602
    %1366 = vmatprep.subr.bf16.mxu0 %v599
    %1367 = vmatpush1.bf16.msra.mxu0 %v598
    %1368 = vmatprep.subr.bf16.mxu0 %v595
    %1369 = vmatpush1.bf16.msra.mxu0 %v594
    %1370 = vmatprep.subr.bf16.mxu0 %v591
    %1371 = vmatpush1.bf16.msra.mxu0 %v590
    %1372 = vmatprep.subr.bf16.mxu0 %v587
    %1373 = vmatpush1.bf16.msra.mxu0 %v586
    %1374 = vmatprep.subr.bf16.mxu0 0
    %1375 = vmatpush2.bf16.msra.mxu0 0
    %1376 = vmatprep.subr.bf16.mxu0 0
    %1377 = vmatpush2.bf16.msra.mxu0 0
    %1378 = vmatprep.subr.bf16.mxu0 0
    %1379 = vmatpush2.bf16.msra.mxu0 0
    %1380 = vmatprep.subr.bf16.mxu0 0
    %1381 = vmatpush2.bf16.msra.mxu0 0
    %1382 = vmatprep.subr.bf16.mxu0 0
    %1383 = vmatpush2.bf16.msra.mxu0 0
    %1384 = vmatprep.subr.bf16.mxu0 0
    %1385 = vmatpush2.bf16.msra.mxu0 0
    %1386 = vmatprep.subr.bf16.mxu0 0
    %1387 = vmatpush2.bf16.msra.mxu0 0
    %1388 = vmatprep.subr.bf16.mxu0 0
    %1389 = vmatpush2.bf16.msra.mxu0 0
    %1390 = vmatprep.mubr.bf16.mxu0 0
    %1391 = vmatmul.mubr.bf16.gmra.mxu0 %v1357
    %v1392 = vpop.f32.mrf.mxu0
    %v1393 = vadd.f32 0.0, %v1392
    %v1394 = vpop.f32.mrf.mxu0
    %v1395 = vadd.f32 0.0, %v1394
    %v1396 = vpop.f32.mrf.mxu0
    %v1397 = vpop.f32.mrf.mxu0
    %1398 = vdwg.mxu0
    %1399 = vmatprep.subr.bf16.mxu0 %v617
    %1400 = vmatpush1.bf16.msra.mxu0 %v616
    %1401 = vmatprep.subr.bf16.mxu0 %v613
    %1402 = vmatpush1.bf16.msra.mxu0 %v612
    %1403 = vmatprep.subr.bf16.mxu0 %v609
    %1404 = vmatpush1.bf16.msra.mxu0 %v608
    %1405 = vmatprep.subr.bf16.mxu0 %v605
    %1406 = vmatpush1.bf16.msra.mxu0 %v604
    %1407 = vmatprep.subr.bf16.mxu0 %v601
    %1408 = vmatpush1.bf16.msra.mxu0 %v600
    %1409 = vmatprep.subr.bf16.mxu0 %v597
    %1410 = vmatpush1.bf16.msra.mxu0 %v596
    %1411 = vmatprep.subr.bf16.mxu0 %v593
    %1412 = vmatpush1.bf16.msra.mxu0 %v592
    %1413 = vmatprep.subr.bf16.mxu0 %v589
    %1414 = vmatpush1.bf16.msra.mxu0 %v588
    %1415 = vmatprep.subr.bf16.mxu0 0
    %1416 = vmatpush2.bf16.msra.mxu0 0
    %1417 = vmatprep.subr.bf16.mxu0 0
    %1418 = vmatpush2.bf16.msra.mxu0 0
    %1419 = vmatprep.subr.bf16.mxu0 0
    %1420 = vmatpush2.bf16.msra.mxu0 0
    %1421 = vmatprep.subr.bf16.mxu0 0
    %1422 = vmatpush2.bf16.msra.mxu0 0
    %1423 = vmatprep.subr.bf16.mxu0 0
    %1424 = vmatpush2.bf16.msra.mxu0 0
    %1425 = vmatprep.subr.bf16.mxu0 0
    %1426 = vmatpush2.bf16.msra.mxu0 0
    %1427 = vmatprep.subr.bf16.mxu0 0
    %1428 = vmatpush2.bf16.msra.mxu0 0
    %1429 = vmatprep.subr.bf16.mxu0 0
    %1430 = vmatpush2.bf16.msra.mxu0 0
    %1431 = vmatprep.mubr.bf16.mxu0 0
    %1432 = vmatmul.mubr.bf16.gmra.mxu0 %v1357
    %v1433 = vpop.f32.mrf.mxu0
    %v1434 = vadd.f32 0.0, %v1433
    %v1435 = vpop.f32.mrf.mxu0
    %v1436 = vadd.f32 0.0, %v1435
    %v1437 = vpop.f32.mrf.mxu0
    %v1438 = vpop.f32.mrf.mxu0
    %1439 = vdwg.mxu0
    %v1440 = vadd.f32 %v1353, %v1393
    %v1441 = vadd.f32 %v1354, %v1395
    %v1442 = vadd.f32 %v1355, %v1434
    %v1443 = vadd.f32 %v1356, %v1436
    %v1444 = vxor.u32 %v1440, 2147483648
    %v1445 = vxor.u32 %v1441, 2147483648
    %v1446 = vxor.u32 %v1442, 2147483648
    %v1447 = vmul.f32 %v1444, 1.442695
    %v1448 = vpow.pop %v1447
    %v1449 = vmul.f32 %v1445, 1.442695
    %v1450 = vpow.pop %v1449
    %v1451 = vmul.f32 %v1446, 1.442695
    %v1452 = vpow.pop %v1451
    %v1453 = vadd.f32 %v1448, 1.0
    %v1454 = vadd.f32 %v1450, 1.0
    %v1455 = vadd.f32 %v1452, 1.0
    %v1456 = vrcp.pop %v1453
    %v1457 = vmul.f32 1.0, %v1456
    %v1458 = vrcp.pop %v1454
    %v1459 = vmul.f32 1.0, %v1458
    %v1460 = vrcp.pop %v1455
    %v1461 = vmul.f32 1.0, %v1460
    %v1462 = vtanh.pop %v1443
    %v1463 = vmul.f32 %v1459, %v1347
    %v1464 = vmul.f32 %v1457, %v1462
    %v1465 = vadd.f32 %v1463, %v1464
    %v1466 = vtanh.pop %v1465
    %v1467 = vmul.f32 %v1461, %v1466
    %s1468 = smul.u32 7, 4
    %s1469 = smul.addr %s1468, 8
    %s1470 = scalar_lea.vmem [#allocation4], %s1469
    %v1471 = vld [vmem:[%s1470] sm:$0xff]
    %v1472 = vld [vmem:[%s1470 + $0x8] sm:$0xff]
    %v1473 = vld [vmem:[%s1470 + $0x10] sm:$0xff]
    %v1474 = vld [vmem:[%s1470 + $0x18] sm:$0xff]
    %v1475 = vpack.c.bf16 %v1467, %v1467
    %1476 = vmatprep.subr.bf16.mxu0 %v615
    %1477 = vmatpush1.bf16.msra.mxu0 %v614
    %1478 = vmatprep.subr.bf16.mxu0 %v611
    %1479 = vmatpush1.bf16.msra.mxu0 %v610
    %1480 = vmatprep.subr.bf16.mxu0 %v607
    %1481 = vmatpush1.bf16.msra.mxu0 %v606
    %1482 = vmatprep.subr.bf16.mxu0 %v603
    %1483 = vmatpush1.bf16.msra.mxu0 %v602
    %1484 = vmatprep.subr.bf16.mxu0 %v599
    %1485 = vmatpush1.bf16.msra.mxu0 %v598
    %1486 = vmatprep.subr.bf16.mxu0 %v595
    %1487 = vmatpush1.bf16.msra.mxu0 %v594
    %1488 = vmatprep.subr.bf16.mxu0 %v591
    %1489 = vmatpush1.bf16.msra.mxu0 %v590
    %1490 = vmatprep.subr.bf16.mxu0 %v587
    %1491 = vmatpush1.bf16.msra.mxu0 %v586
    %1492 = vmatprep.subr.bf16.mxu0 0
    %1493 = vmatpush2.bf16.msra.mxu0 0
    %1494 = vmatprep.subr.bf16.mxu0 0
    %1495 = vmatpush2.bf16.msra.mxu0 0
    %1496 = vmatprep.subr.bf16.mxu0 0
    %1497 = vmatpush2.bf16.msra.mxu0 0
    %1498 = vmatprep.subr.bf16.mxu0 0
    %1499 = vmatpush2.bf16.msra.mxu0 0
    %1500 = vmatprep.subr.bf16.mxu0 0
    %1501 = vmatpush2.bf16.msra.mxu0 0
    %1502 = vmatprep.subr.bf16.mxu0 0
    %1503 = vmatpush2.bf16.msra.mxu0 0
    %1504 = vmatprep.subr.bf16.mxu0 0
    %1505 = vmatpush2.bf16.msra.mxu0 0
    %1506 = vmatprep.subr.bf16.mxu0 0
    %1507 = vmatpush2.bf16.msra.mxu0 0
    %1508 = vmatprep.mubr.bf16.mxu0 0
    %1509 = vmatmul.mubr.bf16.gmra.mxu0 %v1475
    %v1510 = vpop.f32.mrf.mxu0
    %v1511 = vadd.f32 0.0, %v1510
    %v1512 = vpop.f32.mrf.mxu0
    %v1513 = vadd.f32 0.0, %v1512
    %v1514 = vpop.f32.mrf.mxu0
    %v1515 = vpop.f32.mrf.mxu0
    %1516 = vdwg.mxu0
    %1517 = vmatprep.subr.bf16.mxu0 %v617
    %1518 = vmatpush1.bf16.msra.mxu0 %v616
    %1519 = vmatprep.subr.bf16.mxu0 %v613
    %1520 = vmatpush1.bf16.msra.mxu0 %v612
    %1521 = vmatprep.subr.bf16.mxu0 %v609
    %1522 = vmatpush1.bf16.msra.mxu0 %v608
    %1523 = vmatprep.subr.bf16.mxu0 %v605
    %1524 = vmatpush1.bf16.msra.mxu0 %v604
    %1525 = vmatprep.subr.bf16.mxu0 %v601
    %1526 = vmatpush1.bf16.msra.mxu0 %v600
    %1527 = vmatprep.subr.bf16.mxu0 %v597
    %1528 = vmatpush1.bf16.msra.mxu0 %v596
    %1529 = vmatprep.subr.bf16.mxu0 %v593
    %1530 = vmatpush1.bf16.msra.mxu0 %v592
    %1531 = vmatprep.subr.bf16.mxu0 %v589
    %1532 = vmatpush1.bf16.msra.mxu0 %v588
    %1533 = vmatprep.subr.bf16.mxu0 0
    %1534 = vmatpush2.bf16.msra.mxu0 0
    %1535 = vmatprep.subr.bf16.mxu0 0
    %1536 = vmatpush2.bf16.msra.mxu0 0
    %1537 = vmatprep.subr.bf16.mxu0 0
    %1538 = vmatpush2.bf16.msra.mxu0 0
    %1539 = vmatprep.subr.bf16.mxu0 0
    %1540 = vmatpush2.bf16.msra.mxu0 0
    %1541 = vmatprep.subr.bf16.mxu0 0
    %1542 = vmatpush2.bf16.msra.mxu0 0
    %1543 = vmatprep.subr.bf16.mxu0 0
    %1544 = vmatpush2.bf16.msra.mxu0 0
    %1545 = vmatprep.subr.bf16.mxu0 0
    %1546 = vmatpush2.bf16.msra.mxu0 0
    %1547 = vmatprep.subr.bf16.mxu0 0
    %1548 = vmatpush2.bf16.msra.mxu0 0
    %1549 = vmatprep.mubr.bf16.mxu0 0
    %1550 = vmatmul.mubr.bf16.gmra.mxu0 %v1475
    %v1551 = vpop.f32.mrf.mxu0
    %v1552 = vadd.f32 0.0, %v1551
    %v1553 = vpop.f32.mrf.mxu0
    %v1554 = vadd.f32 0.0, %v1553
    %v1555 = vpop.f32.mrf.mxu0
    %v1556 = vpop.f32.mrf.mxu0
    %1557 = vdwg.mxu0
    %v1558 = vadd.f32 %v1471, %v1511
    %v1559 = vadd.f32 %v1472, %v1513
    %v1560 = vadd.f32 %v1473, %v1552
    %v1561 = vadd.f32 %v1474, %v1554
    %v1562 = vxor.u32 %v1558, 2147483648
    %v1563 = vxor.u32 %v1559, 2147483648
    %v1564 = vxor.u32 %v1560, 2147483648
    %v1565 = vmul.f32 %v1562, 1.442695
    %v1566 = vpow.pop %v1565
    %v1567 = vmul.f32 %v1563, 1.442695
    %v1568 = vpow.pop %v1567
    %v1569 = vmul.f32 %v1564, 1.442695
    %v1570 = vpow.pop %v1569
    %v1571 = vadd.f32 %v1566, 1.0
    %v1572 = vadd.f32 %v1568, 1.0
    %v1573 = vadd.f32 %v1570, 1.0
    %v1574 = vrcp.pop %v1571
    %v1575 = vmul.f32 1.0, %v1574
    %v1576 = vrcp.pop %v1572
    %v1577 = vmul.f32 1.0, %v1576
    %v1578 = vrcp.pop %v1573
    %v1579 = vmul.f32 1.0, %v1578
    %v1580 = vtanh.pop %v1561
    %v1581 = vmul.f32 %v1577, %v1465
    %v1582 = vmul.f32 %v1575, %v1580
    %v1583 = vadd.f32 %v1581, %v1582
    %v1584 = vtanh.pop %v1583
    %v1585 = vmul.f32 %v1579, %v1584
    %1586 = vst [vmem:[#allocation2] sm:$0xff] %v1585
    %1587 = vst [vmem:[#allocation3] sm:$0xff] %v1583
    // Predicated region
    $region34: #{lstm_forward.3} parent=1 // pred_check
      %p1588 = pneg %p38
    $region35: #{lstm_forward.3} parent=1 // pred_check_branch
      %1590 = sbr.rel (%p1588) target = $region37
    $region36: #{lstm_forward.3} parent=1 // pred_region
      %v1591 = vpack.c.bf16 %v1585, %v1585
      %v1592 = vld [vmem:[#allocation5] sm:$0xf]
      %v1593 = vld [vmem:[#allocation5 + $0x4] sm:$0xf]
      %v1594 = vld [vmem:[#allocation5 + $0x8] sm:$0xf]
      %v1595 = vld [vmem:[#allocation5 + $0xc] sm:$0xf]
      %v1596 = vld [vmem:[#allocation5 + $0x10] sm:$0xf]
      %v1597 = vld [vmem:[#allocation5 + $0x14] sm:$0xf]
      %v1598 = vld [vmem:[#allocation5 + $0x18] sm:$0xf]
      %v1599 = vld [vmem:[#allocation5 + $0x1c] sm:$0xf]
      %v1600 = vld [vmem:[#allocation5 + $0x20] sm:$0xf]
      %v1601 = vld [vmem:[#allocation5 + $0x24] sm:$0xf]
      %v1602 = vld [vmem:[#allocation5 + $0x28] sm:$0xf]
      %v1603 = vld [vmem:[#allocation5 + $0x2c] sm:$0xf]
      %v1604 = vld [vmem:[#allocation5 + $0x30] sm:$0xf]
      %v1605 = vld [vmem:[#allocation5 + $0x34] sm:$0xf]
      %v1606 = vld [vmem:[#allocation5 + $0x38] sm:$0xf]
      %v1607 = vld [vmem:[#allocation5 + $0x3c] sm:$0xf]
      %v1608 = vld [vmem:[%s5] sm:$0x1]
      %v1610 = vlaneseq
      %v1611 = vshrl.u32 %v1610, 7
      %v1612 = vsub.s32 0, %v1611
      %v1613 = vrot.slane %v1608, %v1612
      %v1631 = vunpack.c.l.b16 %v1592
      %v1632 = vunpack.c.l.b16 %v1593
      %v1633 = vunpack.c.l.b16 %v1594
      %v1634 = vunpack.c.l.b16 %v1595
      %v1635 = vunpack.c.l.b16 %v1596
      %v1636 = vunpack.c.l.b16 %v1597
      %v1637 = vunpack.c.l.b16 %v1598
      %v1638 = vunpack.c.l.b16 %v1599
      %v1639 = vunpack.c.l.b16 %v1600
      %v1640 = vunpack.c.l.b16 %v1601
      %v1641 = vunpack.c.l.b16 %v1602
      %v1642 = vunpack.c.l.b16 %v1603
      %v1643 = vunpack.c.l.b16 %v1604
      %v1644 = vunpack.c.l.b16 %v1605
      %v1645 = vunpack.c.l.b16 %v1606
      %v1646 = vunpack.c.l.b16 %v1607
      %v1647 = vpack.c.b16 %v1632, %v1631
      %v1648 = vpack.c.b16 %v1634, %v1633
      %v1649 = vpack.c.b16 %v1636, %v1635
      %v1650 = vpack.c.b16 %v1638, %v1637
      %v1651 = vpack.c.b16 %v1640, %v1639
      %v1652 = vpack.c.b16 %v1642, %v1641
      %v1653 = vpack.c.b16 %v1644, %v1643
      %v1654 = vpack.c.b16 %v1646, %v1645
      %1663 = vmatprep.subr.bf16.mxu0 0
      %1664 = vmatpush1.bf16.msra.mxu0 %v1654
      %1665 = vmatprep.subr.bf16.mxu0 0
      %1666 = vmatpush1.bf16.msra.mxu0 %v1653
      %1667 = vmatprep.subr.bf16.mxu0 0
      %1668 = vmatpush1.bf16.msra.mxu0 %v1652
      %1669 = vmatprep.subr.bf16.mxu0 0
      %1670 = vmatpush1.bf16.msra.mxu0 %v1651
      %1671 = vmatprep.subr.bf16.mxu0 0
      %1672 = vmatpush1.bf16.msra.mxu0 %v1650
      %1673 = vmatprep.subr.bf16.mxu0 0
      %1674 = vmatpush1.bf16.msra.mxu0 %v1649
      %1675 = vmatprep.subr.bf16.mxu0 0
      %1676 = vmatpush1.bf16.msra.mxu0 %v1648
      %1677 = vmatprep.subr.bf16.mxu0 0
      %1678 = vmatpush1.bf16.msra.mxu0 %v1647
      %1679 = vmatprep.subr.bf16.mxu0 0
      %1680 = vmatpush2.bf16.msra.mxu0 0
      %1681 = vmatprep.subr.bf16.mxu0 0
      %1682 = vmatpush2.bf16.msra.mxu0 0
      %1683 = vmatprep.subr.bf16.mxu0 0
      %1684 = vmatpush2.bf16.msra.mxu0 0
      %1685 = vmatprep.subr.bf16.mxu0 0
      %1686 = vmatpush2.bf16.msra.mxu0 0
      %1687 = vmatprep.subr.bf16.mxu0 0
      %1688 = vmatpush2.bf16.msra.mxu0 0
      %1689 = vmatprep.subr.bf16.mxu0 0
      %1690 = vmatpush2.bf16.msra.mxu0 0
      %1691 = vmatprep.subr.bf16.mxu0 0
      %1692 = vmatpush2.bf16.msra.mxu0 0
      %1693 = vmatprep.subr.bf16.mxu0 0
      %1694 = vmatpush2.bf16.msra.mxu0 0
      %1695 = vmatprep.mubr.bf16.mxu0 0
      %1696 = vmatmul.mubr.bf16.gmra.mxu0 %v1591
      %v1697 = vpop.f32.mrf.mxu0
      %v1698 = vadd.f32 %v1613, %v1697
      %v1699 = vpop.f32.mrf.mxu0
      %v1700 = vpop.f32.mrf.mxu0
      %v1701 = vpop.f32.mrf.mxu0
      %1702 = vdwg.mxu0
      %1703 = vst [vmem:[%s6] sm:$0xff] %v1698
    $region37: #{lstm_forward.3} parent=1 // pred_fallthru
      _
    // Predicated region
    $region38: #{lstm_forward.3} parent=1 // pred_check
      _
    $region39: #{lstm_forward.3} parent=1 // pred_check_branch
      %1705 = sbr.rel (0) target = $region41
    $region40: #{lstm_forward.3} parent=1 // pred_region
      _
    $region41: #{lstm_forward.3} parent=1 // pred_fallthru
      _
    // Predicated region
    $region42: #{lstm_forward.3} parent=1 // pred_check
      _
    $region43: #{lstm_forward.3} parent=1 // pred_check_branch
      %1707 = sbr.rel (0) target = $region45
    $region44: #{lstm_forward.3} parent=1 // pred_region
      _
    $region45: #{lstm_forward.3} parent=1 // pred_fallthru
      _
    %1708 = vsyncpa [#allocation6], 1

// kernel: lstm_forward.2
$region0: #{lstm_forward.2}
  #allocation0 [shape = 'u32[]', space=smem, size = 0x4, offset = 0x4, fixed_abs, tag = 'smem constant byte address 0x4 - core index']
  #allocation1 [shape = 'u32[144,128]{1,0:T(1,128)}', space=vmem, size = 0x12000, scoped, tag = 'internal scratch']
  #allocation2 [shape = 'f32[8,128]{1,0:T(8,128)}', space=vmem, size = 0x1000, scoped, tag = 'scratch operand']
  #allocation3 [shape = 'f32[8,128]{1,0:T(8,128)}', space=vmem, size = 0x1000, scoped, tag = 'scratch operand']
  #allocation4 [shape = 'f32[64,512]{1,0:T(8,128)}', space=vmem, size = 0x20000, scoped, tag = 'scratch operand']
  %s0 = inlined_call_operand.vmem [shape: f32[64,16], index: 0, kind: input, shape index: {}]
  %s1 = inlined_call_operand.hbm [shape: bf16[16,512], index: 1, kind: input, shape index: {}]
  %s2 = inlined_call_operand.hbm [shape: bf16[128,512], index: 2, kind: input, shape index: {}]
  %s3 = inlined_call_operand.vmem [shape: f32[1,512], index: 3, kind: input, shape index: {}]
  %s4 = inlined_call_operand.vmem [shape: f32[64,128], index: 4, kind: output, shape index: {}]
  %s5 = sld [smem:[#allocation0]]
  $region38: #{lstm_forward.2} parent=0
    _
  %s7 = ssub.s32 1, %s5
  %s8 = scalar_select 0, %s7, %s5
  $region1: #{lstm_forward.2} parent=0
    #allocation5 [shape = 'u8[16384]{0}', space=vmem, size = 0x4000, scoped, tag = 'input window, operand 1, single buffered']
    #allocation6 [shape = 's32[1]{0}', space=sflag, size = 0x4, scoped, tag = 'scoped memory for lstm_forward.2']
    #allocation7 [shape = 'u8[131072]{0}', space=vmem, size = 0x20000, scoped, tag = 'input window, operand 2, single buffered']
    #allocation8 [shape = 's32[1]{0}', space=sflag, size = 0x4, scoped, tag = 'scoped memory for lstm_forward.2']
    %9 = vsyncpa [#allocation6], 0
    %10 = vsyncpa [#allocation8], 0
    // Predicated region
    $region2: #{lstm_forward.2} parent=1 // pred_check
      _
    $region3: #{lstm_forward.2} parent=1 // pred_check_branch
      %12 = sbr.rel (0) target = $region5
    $region4: #{lstm_forward.2} parent=1 // pred_region
      _
    $region5: #{lstm_forward.2} parent=1 // pred_fallthru
      _
    // Predicated region
    $region6: #{lstm_forward.2} parent=1 // pred_check
      _
    $region7: #{lstm_forward.2} parent=1 // pred_check_branch
      %14 = sbr.rel (0) target = $region9
    $region8: #{lstm_forward.2} parent=1 // pred_region
      %s16 = ssub.s32 512, 512
      %17 = vsyncadd [#allocation6], %s16
      %s18 = sshll.u32 [#allocation5], 4
      %s19 = int_to_ptr.vmem [resolvable:$true] %s18
      %24 = dma.hbm_to_vmem [thread:$0]  %s1, 512, %s19, [#allocation6], 256, 256, 16
    $region9: #{lstm_forward.2} parent=1 // pred_fallthru
      _
    // Predicated region
    $region10: #{lstm_forward.2} parent=1 // pred_check
      _
    $region11: #{lstm_forward.2} parent=1 // pred_check_branch
      %26 = sbr.rel (0) target = $region13
    $region12: #{lstm_forward.2} parent=1 // pred_region
      %s28 = ssub.s32 4096, 4096
      %29 = vsyncadd [#allocation8], %s28
      %s30 = sshll.u32 [#allocation7], 4
      %s31 = int_to_ptr.vmem [resolvable:$true] %s30
      %36 = dma.hbm_to_vmem [thread:$0]  %s2, 4096, %s31, [#allocation8], 256, 256, 16
    $region13: #{lstm_forward.2} parent=1 // pred_fallthru
      _
    // Predicated region
    $region14: #{lstm_forward.2} parent=1 // pred_check
      _
    $region15: #{lstm_forward.2} parent=1 // pred_check_branch
      %38 = sbr.rel (0) target = $region17
    $region16: #{lstm_forward.2} parent=1 // pred_region
      _
    $region17: #{lstm_forward.2} parent=1 // pred_fallthru
      _
    // Predicated region
    $region18: #{lstm_forward.2} parent=1 // pred_check
      _
    $region19: #{lstm_forward.2} parent=1 // pred_check_branch
      %40 = sbr.rel (0) target = $region21
    $region20: #{lstm_forward.2} parent=1 // pred_region
      %41 = dma.done [#allocation6], 512
    $region21: #{lstm_forward.2} parent=1 // pred_fallthru
      _
    // Predicated region
    $region22: #{lstm_forward.2} parent=1 // pred_check
      _
    $region23: #{lstm_forward.2} parent=1 // pred_check_branch
      %43 = sbr.rel (0) target = $region25
    $region24: #{lstm_forward.2} parent=1 // pred_region
      %44 = dma.done [#allocation8], 4096
    $region25: #{lstm_forward.2} parent=1 // pred_fallthru
      _
    %p46 = scmp.eq.s32.totalorder 0, 0
    // Predicated region
    $region26: #{lstm_forward.2} parent=1 // pred_check
      %p47 = pneg %p46
    $region27: #{lstm_forward.2} parent=1 // pred_check_branch
      %49 = sbr.rel (%p47) target = $region29
    $region28: #{lstm_forward.2} parent=1 // pred_region
      %50 = vst [vmem:[#allocation2] sm:$0xff] 0.0
      %51 = vst [vmem:[#allocation3] sm:$0xff] 0.0
    $region29: #{lstm_forward.2} parent=1 // pred_fallthru
      _
    %v52 = vld [vmem:[%s0] sm:$0xff]
    %v53 = vld [vmem:[%s0 + $0x8] sm:$0xff]
    %v54 = vld [vmem:[%s0 + $0x10] sm:$0xff]
    %v55 = vld [vmem:[%s0 + $0x18] sm:$0xff]
    %v56 = vld [vmem:[%s0 + $0x20] sm:$0xff]
    %v57 = vld [vmem:[%s0 + $0x28] sm:$0xff]
    %v58 = vld [vmem:[%s0 + $0x30] sm:$0xff]
    %v59 = vld [vmem:[%s0 + $0x38] sm:$0xff]
    %v60 = vpack.c.bf16 %v53, %v52
    %v61 = vpack.c.bf16 %v55, %v54
    %v62 = vpack.c.bf16 %v57, %v56
    %v63 = vpack.c.bf16 %v59, %v58
    %v64 = vld [vmem:[#allocation5] sm:$0xff]
    %v65 = vld [vmem:[#allocation5 + $0x8] sm:$0xff]
    %v66 = vld [vmem:[#allocation5 + $0x10] sm:$0xff]
    %v67 = vld [vmem:[#allocation5 + $0x18] sm:$0xff]
    %v68 = vld [vmem:[%s3] sm:$0xf]
    %v70 = vlaneseq
    %v71 = vshrl.u32 %v70, 7
    %v72 = vsub.s32 0, %v71
    %v73 = vrot.slane %v68, %v72
    %v74 = vlaneseq
    %v75 = vshrl.u32 %v74, 7
    %v76 = vsub.s32 1, %v75
    %v77 = vrot.slane %v68, %v76
    %v78 = vlaneseq
    %v79 = vshrl.u32 %v78, 7
    %v80 = vsub.s32 2, %v79
    %v81 = vrot.slane %v68, %v80
    %v82 = vlaneseq
    %v83 = vshrl.u32 %v82, 7
    %v84 = vsub.s32 3, %v83
    %v85 = vrot.slane %v68, %v84
    %v94 = vunpack.c.l.b16 %v64
    %v95 = vunpack.c.h.b16 %v64
    %v96 = vunpack.c.l.b16 %v65
    %v97 = vunpack.c.h.b16 %v65
    %v98 = vunpack.c.l.b16 %v66
    %v99 = vunpack.c.h.b16 %v66
    %v100 = vunpack.c.l.b16 %v67
    %v101 = vunpack.c.h.b16 %v67
    %v102 = vpack.c.b16 %v98, %v94
    %v103 = vpack.c.b16 %v99, %v95
    %v104 = vpack.c.b16 %v100, %v96
    %v105 = vpack.c.b16 %v101, %v97
    %vm110 = vcmask 130048
    %v112 = vsel %vm110, %v60, 0
    %v115 = vsel %vm110, %v61, 0
    %v118 = vsel %vm110, %v62, 0
    %v121 = vsel %vm110, %v63, 0
    %123 = vmatprep.subr.bf16.mxu0 0
    %124 = vmatpush1.bf16.msra.mxu0 0
    %125 = vmatprep.subr.bf16.mxu0 0
    %126 = vmatpush1.bf16.msra.mxu0 0
    %127 = vmatprep.subr.bf16.mxu0 0
    %128 = vmatpush1.bf16.msra.mxu0 0
    %129 = vmatprep.subr.bf16.mxu0 0
    %130 = vmatpush1.bf16.msra.mxu0 0
    %131 = vmatprep.subr.bf16.mxu0 0
    %132 = vmatpush1.bf16.msra.mxu0 0
    %133 = vmatprep.subr.bf16.mxu0 0
    %134 = vmatpush1.bf16.msra.mxu0 0
    %135 = vmatprep.subr.bf16.mxu0 0
    %136 = vmatpush1.bf16.msra.mxu0 0
    %137 = vmatprep.subr.bf16.mxu0 %v103
    %138 = vmatpush1.bf16.msra.mxu0 %v102
    %139 = vmatprep.subr.bf16.mxu0 0
    %140 = vmatpush2.bf16.msra.mxu0 0
    %141 = vmatprep.subr.bf16.mxu0 0
    %142 = vmatpush2.bf16.msra.mxu0 0
    %143 = vmatprep.subr.bf16.mxu0 0
    %144 = vmatpush2.bf16.msra.mxu0 0
    %145 = vmatprep.subr.bf16.mxu0 0
    %146 = vmatpush2.bf16.msra.mxu0 0
    %147 = vmatprep.subr.bf16.mxu0 0
    %148 = vmatpush2.bf16.msra.mxu0 0
    %149 = vmatprep.subr.bf16.mxu0 0
    %150 = vmatpush2.bf16.msra.mxu0 0
    %151 = vmatprep.subr.bf16.mxu0 0
    %152 = vmatpush2.bf16.msra.mxu0 0
    %153 = vmatprep.subr.bf16.mxu0 0
    %154 = vmatpush2.bf16.msra.mxu0 0
    %155 = vmatprep.mubr.bf16.mxu0 0
    %156 = vmatmul.mubr.bf16.gmra.mxu0 %v112
    %v157 = vpop.f32.mrf.mxu0
    %v158 = vadd.f32 %v73, %v157
    %v159 = vpop.f32.mrf.mxu0
    %v160 = vadd.f32 %v77, %v159
    %v161 = vpop.f32.mrf.mxu0
    %v162 = vadd.f32 %v73, %v161
    %v163 = vpop.f32.mrf.mxu0
    %v164 = vadd.f32 %v77, %v163
    %165 = vmatprep.mubr.bf16.mxu0 0
    %166 = vmatmul.mubr.bf16.gmra.mxu0 %v115
    %v167 = vpop.f32.mrf.mxu0
    %v168 = vadd.f32 %v73, %v167
    %v169 = vpop.f32.mrf.mxu0
    %v170 = vadd.f32 %v77, %v169
    %v171 = vpop.f32.mrf.mxu0
    %v172 = vadd.f32 %v73, %v171
    %v173 = vpop.f32.mrf.mxu0
    %v174 = vadd.f32 %v77, %v173
    %175 = vmatprep.mubr.bf16.mxu0 0
    %176 = vmatmul.mubr.bf16.gmra.mxu0 %v118
    %v177 = vpop.f32.mrf.mxu0
    %v178 = vadd.f32 %v73, %v177
    %v179 = vpop.f32.mrf.mxu0
    %v180 = vadd.f32 %v77, %v179
    %v181 = vpop.f32.mrf.mxu0
    %v182 = vadd.f32 %v73, %v181
    %v183 = vpop.f32.mrf.mxu0
    %v184 = vadd.f32 %v77, %v183
    %185 = vmatprep.mubr.bf16.mxu0 0
    %186 = vmatmul.mubr.bf16.gmra.mxu0 %v121
    %v187 = vpop.f32.mrf.mxu0
    %v188 = vadd.f32 %v73, %v187
    %v189 = vpop.f32.mrf.mxu0
    %v190 = vadd.f32 %v77, %v189
    %v191 = vpop.f32.mrf.mxu0
    %v192 = vadd.f32 %v73, %v191
    %v193 = vpop.f32.mrf.mxu0
    %v194 = vadd.f32 %v77, %v193
    %195 = vdwg.mxu0
    %196 = vmatprep.subr.bf16.mxu0 0
    %197 = vmatpush1.bf16.msra.mxu0 0
    %198 = vmatprep.subr.bf16.mxu0 0
    %199 = vmatpush1.bf16.msra.mxu0 0
    %200 = vmatprep.subr.bf16.mxu0 0
    %201 = vmatpush1.bf16.msra.mxu0 0
    %202 = vmatprep.subr.bf16.mxu0 0
    %203 = vmatpush1.bf16.msra.mxu0 0
    %204 = vmatprep.subr.bf16.mxu0 0
    %205 = vmatpush1.bf16.msra.mxu0 0
    %206 = vmatprep.subr.bf16.mxu0 0
    %207 = vmatpush1.bf16.msra.mxu0 0
    %208 = vmatprep.subr.bf16.mxu0 0
    %209 = vmatpush1.bf16.msra.mxu0 0
    %210 = vmatprep.subr.bf16.mxu0 %v105
    %211 = vmatpush1.bf16.msra.mxu0 %v104
    %212 = vmatprep.subr.bf16.mxu0 0
    %213 = vmatpush2.bf16.msra.mxu0 0
    %214 = vmatprep.subr.bf16.mxu0 0
    %215 = vmatpush2.bf16.msra.mxu0 0
    %216 = vmatprep.subr.bf16.mxu0 0
    %217 = vmatpush2.bf16.msra.mxu0 0
    %218 = vmatprep.subr.bf16.mxu0 0
    %219 = vmatpush2.bf16.msra.mxu0 0
    %220 = vmatprep.subr.bf16.mxu0 0
    %221 = vmatpush2.bf16.msra.mxu0 0
    %222 = vmatprep.subr.bf16.mxu0 0
    %223 = vmatpush2.bf16.msra.mxu0 0
    %224 = vmatprep.subr.bf16.mxu0 0
    %225 = vmatpush2.bf16.msra.mxu0 0
    %226 = vmatprep.subr.bf16.mxu0 0
    %227 = vmatpush2.bf16.msra.mxu0 0
    %228 = vmatprep.mubr.bf16.mxu0 0
    %229 = vmatmul.mubr.bf16.gmra.mxu0 %v112
    %v230 = vpop.f32.mrf.mxu0
    %v231 = vadd.f32 %v81, %v230
    %v232 = vpop.f32.mrf.mxu0
    %v233 = vadd.f32 %v85, %v232
    %v234 = vpop.f32.mrf.mxu0
    %v235 = vadd.f32 %v81, %v234
    %v236 = vpop.f32.mrf.mxu0
    %v237 = vadd.f32 %v85, %v236
    %238 = vmatprep.mubr.bf16.mxu0 0
    %239 = vmatmul.mubr.bf16.gmra.mxu0 %v115
    %v240 = vpop.f32.mrf.mxu0
    %v241 = vadd.f32 %v81, %v240
    %v242 = vpop.f32.mrf.mxu0
    %v243 = vadd.f32 %v85, %v242
    %v244 = vpop.f32.mrf.mxu0
    %v245 = vadd.f32 %v81, %v244
    %v246 = vpop.f32.mrf.mxu0
    %v247 = vadd.f32 %v85, %v246
    %248 = vmatprep.mubr.bf16.mxu0 0
    %249 = vmatmul.mubr.bf16.gmra.mxu0 %v118
    %v250 = vpop.f32.mrf.mxu0
    %v251 = vadd.f32 %v81, %v250
    %v252 = vpop.f32.mrf.mxu0
    %v253 = vadd.f32 %v85, %v252
    %v254 = vpop.f32.mrf.mxu0
    %v255 = vadd.f32 %v81, %v254
    %v256 = vpop.f32.mrf.mxu0
    %v257 = vadd.f32 %v85, %v256
    %258 = vmatprep.mubr.bf16.mxu0 0
    %259 = vmatmul.mubr.bf16.gmra.mxu0 %v121
    %v260 = vpop.f32.mrf.mxu0
    %v261 = vadd.f32 %v81, %v260
    %v262 = vpop.f32.mrf.mxu0
    %v263 = vadd.f32 %v85, %v262
    %v264 = vpop.f32.mrf.mxu0
    %v265 = vadd.f32 %v81, %v264
    %v266 = vpop.f32.mrf.mxu0
    %v267 = vadd.f32 %v85, %v266
    %268 = vdwg.mxu0
    %269 = vst [vmem:[#allocation4] sm:$0xff] %v158
    %270 = vst [vmem:[#allocation4 + $0x8] sm:$0xff] %v160
    %271 = vst [vmem:[#allocation4 + $0x10] sm:$0xff] %v231
    %272 = vst [vmem:[#allocation4 + $0x18] sm:$0xff] %v233
    %273 = vst [vmem:[#allocation4 + $0x20] sm:$0xff] %v162
    %274 = vst [vmem:[#allocation4 + $0x28] sm:$0xff] %v164
    %275 = vst [vmem:[#allocation4 + $0x30] sm:$0xff] %v235
    %276 = vst [vmem:[#allocation4 + $0x38] sm:$0xff] %v237
    %277 = vst [vmem:[#allocation4 + $0x40] sm:$0xff] %v168
    %278 = vst [vmem:[#allocation4 + $0x48] sm:$0xff] %v170
    %279 = vst [vmem:[#allocation4 + $0x50] sm:$0xff] %v241
    %280 = vst [vmem:[#allocation4 + $0x58] sm:$0xff] %v243
    %281 = vst [vmem:[#allocation4 + $0x60] sm:$0xff] %v172
    %282 = vst [vmem:[#allocation4 + $0x68] sm:$0xff] %v174
    %283 = vst [vmem:[#allocation4 + $0x70] sm:$0xff] %v245
    %284 = vst [vmem:[#allocation4 + $0x78] sm:$0xff] %v247
    %285 = vst [vmem:[#allocation4 + $0x80] sm:$0xff] %v178
    %286 = vst [vmem:[#allocation4 + $0x88] sm:$0xff] %v180
    %287 = vst [vmem:[#allocation4 + $0x90] sm:$0xff] %v251
    %288 = vst [vmem:[#allocation4 + $0x98] sm:$0xff] %v253
    %289 = vst [vmem:[#allocation4 + $0xa0] sm:$0xff] %v182
    %290 = vst [vmem:[#allocation4 + $0xa8] sm:$0xff] %v184
    %291 = vst [vmem:[#allocation4 + $0xb0] sm:$0xff] %v255
    %292 = vst [vmem:[#allocation4 + $0xb8] sm:$0xff] %v257
    %293 = vst [vmem:[#allocation4 + $0xc0] sm:$0xff] %v188
    %294 = vst [vmem:[#allocation4 + $0xc8] sm:$0xff] %v190
    %295 = vst [vmem:[#allocation4 + $0xd0] sm:$0xff] %v261
    %296 = vst [vmem:[#allocation4 + $0xd8] sm:$0xff] %v263
    %297 = vst [vmem:[#allocation4 + $0xe0] sm:$0xff] %v192
    %298 = vst [vmem:[#allocation4 + $0xe8] sm:$0xff] %v194
    %299 = vst [vmem:[#allocation4 + $0xf0] sm:$0xff] %v265
    %300 = vst [vmem:[#allocation4 + $0xf8] sm:$0xff] %v267
    %v301 = vld [vmem:[#allocation2] sm:$0xff]
    %v302 = vld [vmem:[#allocation3] sm:$0xff]
    %s303 = smul.u32 0, 4
    %s304 = smul.addr %s303, 8
    %s305 = scalar_lea.vmem [#allocation4], %s304
    %v306 = vld [vmem:[%s305] sm:$0xff]
    %v307 = vld [vmem:[%s305 + $0x8] sm:$0xff]
    %v308 = vld [vmem:[%s305 + $0x10] sm:$0xff]
    %v309 = vld [vmem:[%s305 + $0x18] sm:$0xff]
    %v310 = vpack.c.bf16 %v301, %v301
    %v311 = vld [vmem:[#allocation7] sm:$0xff]
    %v312 = vld [vmem:[#allocation7 + $0x8] sm:$0xff]
    %v313 = vld [vmem:[#allocation7 + $0x10] sm:$0xff]
    %v314 = vld [vmem:[#allocation7 + $0x18] sm:$0xff]
    %v315 = vld [vmem:[#allocation7 + $0x20] sm:$0xff]
    %v316 = vld [vmem:[#allocation7 + $0x28] sm:$0xff]
    %v317 = vld [vmem:[#allocation7 + $0x30] sm:$0xff]
    %v318 = vld [vmem:[#allocation7 + $0x38] sm:$0xff]
    %v319 = vld [vmem:[#allocation7 + $0x40] sm:$0xff]
    %v320 = vld [vmem:[#allocation7 + $0x48] sm:$0xff]
    %v321 = vld [vmem:[#allocation7 + $0x50] sm:$0xff]
    %v322 = vld [vmem:[#allocation7 + $0x58] sm:$0xff]
    %v323 = vld [vmem:[#allocation7 + $0x60] sm:$0xff]
    %v324 = vld [vmem:[#allocation7 + $0x68] sm:$0xff]
    %v325 = vld [vmem:[#allocation7 + $0x70] sm:$0xff]
    %v326 = vld [vmem:[#allocation7 + $0x78] sm:$0xff]
    %v327 = vld [vmem:[#allocation7 + $0x80] sm:$0xff]
    %v328 = vld [vmem:[#allocation7 + $0x88] sm:$0xff]
    %v329 = vld [vmem:[#allocation7 + $0x90] sm:$0xff]
    %v330 = vld [vmem:[#allocation7 + $0x98] sm:$0xff]
    %v331 = vld [vmem:[#allocation7 + $0xa0] sm:$0xff]
    %v332 = vld [vmem:[#allocation7 + $0xa8] sm:$0xff]
    %v333 = vld [vmem:[#allocation7 + $0xb0] sm:$0xff]
    %v334 = vld [vmem:[#allocation7 + $0xb8] sm:$0xff]
    %v335 = vld [vmem:[#allocation7 + $0xc0] sm:$0xff]
    %v336 = vld [vmem:[#allocation7 + $0xc8] sm:$0xff]
    %v337 = vld [vmem:[#allocation7 + $0xd0] sm:$0xff]
    %v338 = vld [vmem:[#allocation7 + $0xd8] sm:$0xff]
    %v339 = vld [vmem:[#allocation7 + $0xe0] sm:$0xff]
    %v340 = vld [vmem:[#allocation7 + $0xe8] sm:$0xff]
    %v341 = vld [vmem:[#allocation7 + $0xf0] sm:$0xff]
    %v342 = vld [vmem:[#allocation7 + $0xf8] sm:$0xff]
    %v375 = vunpack.c.l.b16 %v311
    %v376 = vunpack.c.h.b16 %v311
    %v377 = vunpack.c.l.b16 %v312
    %v378 = vunpack.c.h.b16 %v312
    %v379 = vunpack.c.l.b16 %v313
    %v380 = vunpack.c.h.b16 %v313
    %v381 = vunpack.c.l.b16 %v314
    %v382 = vunpack.c.h.b16 %v314
    %v383 = vunpack.c.l.b16 %v315
    %v384 = vunpack.c.h.b16 %v315
    %v385 = vunpack.c.l.b16 %v316
    %v386 = vunpack.c.h.b16 %v316
    %v387 = vunpack.c.l.b16 %v317
    %v388 = vunpack.c.h.b16 %v317
    %v389 = vunpack.c.l.b16 %v318
    %v390 = vunpack.c.h.b16 %v318
    %v391 = vunpack.c.l.b16 %v319
    %v392 = vunpack.c.h.b16 %v319
    %v393 = vunpack.c.l.b16 %v320
    %v394 = vunpack.c.h.b16 %v320
    %v395 = vunpack.c.l.b16 %v321
    %v396 = vunpack.c.h.b16 %v321
    %v397 = vunpack.c.l.b16 %v322
    %v398 = vunpack.c.h.b16 %v322
    %v399 = vunpack.c.l.b16 %v323
    %v400 = vunpack.c.h.b16 %v323
    %v401 = vunpack.c.l.b16 %v324
    %v402 = vunpack.c.h.b16 %v324
    %v403 = vunpack.c.l.b16 %v325
    %v404 = vunpack.c.h.b16 %v325
    %v405 = vunpack.c.l.b16 %v326
    %v406 = vunpack.c.h.b16 %v326
    %v407 = vunpack.c.l.b16 %v327
    %v408 = vunpack.c.h.b16 %v327
    %v409 = vunpack.c.l.b16 %v328
    %v410 = vunpack.c.h.b16 %v328
    %v411 = vunpack.c.l.b16 %v329
    %v412 = vunpack.c.h.b16 %v329
    %v413 = vunpack.c.l.b16 %v330
    %v414 = vunpack.c.h.b16 %v330
    %v415 = vunpack.c.l.b16 %v331
    %v416 = vunpack.c.h.b16 %v331
    %v417 = vunpack.c.l.b16 %v332
    %v418 = vunpack.c.h.b16 %v332
    %v419 = vunpack.c.l.b16 %v333
    %v420 = vunpack.c.h.b16 %v333
    %v421 = vunpack.c.l.b16 %v334
    %v422 = vunpack.c.h.b16 %v334
    %v423 = vunpack.c.l.b16 %v335
    %v424 = vunpack.c.h.b16 %v335
    %v425 = vunpack.c.l.b16 %v336
    %v426 = vunpack.c.h.b16 %v336
    %v427 = vunpack.c.l.b16 %v337
    %v428 = vunpack.c.h.b16 %v337
    %v429 = vunpack.c.l.b16 %v338
    %v430 = vunpack.c.h.b16 %v338
    %v431 = vunpack.c.l.b16 %v339
    %v432 = vunpack.c.h.b16 %v339
    %v433 = vunpack.c.l.b16 %v340
    %v434 = vunpack.c.h.b16 %v340
    %v435 = vunpack.c.l.b16 %v341
    %v436 = vunpack.c.h.b16 %v341
    %v437 = vunpack.c.l.b16 %v342
    %v438 = vunpack.c.h.b16 %v342
    %v439 = vpack.c.b16 %v379, %v375
    %v440 = vpack.c.b16 %v380, %v376
    %v441 = vpack.c.b16 %v381, %v377
    %v442 = vpack.c.b16 %v382, %v378
    %v443 = vpack.c.b16 %v387, %v383
    %v444 = vpack.c.b16 %v388, %v384
    %v445 = vpack.c.b16 %v389, %v385
    %v446 = vpack.c.b16 %v390, %v386
    %v447 = vpack.c.b16 %v395, %v391
    %v448 = vpack.c.b16 %v396, %v392
    %v449 = vpack.c.b16 %v397, %v393
    %v450 = vpack.c.b16 %v398, %v394
    %v451 = vpack.c.b16 %v403, %v399
    %v452 = vpack.c.b16 %v404, %v400
    %v453 = vpack.c.b16 %v405, %v401
    %v454 = vpack.c.b16 %v406, %v402
    %v455 = vpack.c.b16 %v411, %v407
    %v456 = vpack.c.b16 %v412, %v408
    %v457 = vpack.c.b16 %v413, %v409
    %v458 = vpack.c.b16 %v414, %v410
    %v459 = vpack.c.b16 %v419, %v415
    %v460 = vpack.c.b16 %v420, %v416
    %v461 = vpack.c.b16 %v421, %v417
    %v462 = vpack.c.b16 %v422, %v418
    %v463 = vpack.c.b16 %v427, %v423
    %v464 = vpack.c.b16 %v428, %v424
    %v465 = vpack.c.b16 %v429, %v425
    %v466 = vpack.c.b16 %v430, %v426
    %v467 = vpack.c.b16 %v435, %v431
    %v468 = vpack.c.b16 %v436, %v432
    %v469 = vpack.c.b16 %v437, %v433
    %v470 = vpack.c.b16 %v438, %v434
    %503 = vmatprep.subr.bf16.mxu0 %v468
    %504 = vmatpush1.bf16.msra.mxu0 %v467
    %505 = vmatprep.subr.bf16.mxu0 %v464
    %506 = vmatpush1.bf16.msra.mxu0 %v463
    %507 = vmatprep.subr.bf16.mxu0 %v460
    %508 = vmatpush1.bf16.msra.mxu0 %v459
    %509 = vmatprep.subr.bf16.mxu0 %v456
    %510 = vmatpush1.bf16.msra.mxu0 %v455
    %511 = vmatprep.subr.bf16.mxu0 %v452
    %512 = vmatpush1.bf16.msra.mxu0 %v451
    %513 = vmatprep.subr.bf16.mxu0 %v448
    %514 = vmatpush1.bf16.msra.mxu0 %v447
    %515 = vmatprep.subr.bf16.mxu0 %v444
    %516 = vmatpush1.bf16.msra.mxu0 %v443
    %517 = vmatprep.subr.bf16.mxu0 %v440
    %518 = vmatpush1.bf16.msra.mxu0 %v439
    %519 = vmatprep.subr.bf16.mxu0 0
    %520 = vmatpush2.bf16.msra.mxu0 0
    %521 = vmatprep.subr.bf16.mxu0 0
    %522 = vmatpush2.bf16.msra.mxu0 0
    %523 = vmatprep.subr.bf16.mxu0 0
    %524 = vmatpush2.bf16.msra.mxu0 0
    %525 = vmatprep.subr.bf16.mxu0 0
    %526 = vmatpush2.bf16.msra.mxu0 0
    %527 = vmatprep.subr.bf16.mxu0 0
    %528 = vmatpush2.bf16.msra.mxu0 0
    %529 = vmatprep.subr.bf16.mxu0 0
    %530 = vmatpush2.bf16.msra.mxu0 0
    %531 = vmatprep.subr.bf16.mxu0 0
    %532 = vmatpush2.bf16.msra.mxu0 0
    %533 = vmatprep.subr.bf16.mxu0 0
    %534 = vmatpush2.bf16.msra.mxu0 0
    %535 = vmatprep.mubr.bf16.mxu0 0
    %536 = vmatmul.mubr.bf16.gmra.mxu0 %v310
    %v537 = vpop.f32.mrf.mxu0
    %v538 = vadd.f32 0.0, %v537
    %v539 = vpop.f32.mrf.mxu0
    %v540 = vadd.f32 0.0, %v539
    %v541 = vpop.f32.mrf.mxu0
    %v542 = vpop.f32.mrf.mxu0
    %543 = vdwg.mxu0
    %544 = vmatprep.subr.bf16.mxu0 %v470
    %545 = vmatpush1.bf16.msra.mxu0 %v469
    %546 = vmatprep.subr.bf16.mxu0 %v466
    %547 = vmatpush1.bf16.msra.mxu0 %v465
    %548 = vmatprep.subr.bf16.mxu0 %v462
    %549 = vmatpush1.bf16.msra.mxu0 %v461
    %550 = vmatprep.subr.bf16.mxu0 %v458
    %551 = vmatpush1.bf16.msra.mxu0 %v457
    %552 = vmatprep.subr.bf16.mxu0 %v454
    %553 = vmatpush1.bf16.msra.mxu0 %v453
    %554 = vmatprep.subr.bf16.mxu0 %v450
    %555 = vmatpush1.bf16.msra.mxu0 %v449
    %556 = vmatprep.subr.bf16.mxu0 %v446
    %557 = vmatpush1.bf16.msra.mxu0 %v445
    %558 = vmatprep.subr.bf16.mxu0 %v442
    %559 = vmatpush1.bf16.msra.mxu0 %v441
    %560 = vmatprep.subr.bf16.mxu0 0
    %561 = vmatpush2.bf16.msra.mxu0 0
    %562 = vmatprep.subr.bf16.mxu0 0
    %563 = vmatpush2.bf16.msra.mxu0 0
    %564 = vmatprep.subr.bf16.mxu0 0
    %565 = vmatpush2.bf16.msra.mxu0 0
    %566 = vmatprep.subr.bf16.mxu0 0
    %567 = vmatpush2.bf16.msra.mxu0 0
    %568 = vmatprep.subr.bf16.mxu0 0
    %569 = vmatpush2.bf16.msra.mxu0 0
    %570 = vmatprep.subr.bf16.mxu0 0
    %571 = vmatpush2.bf16.msra.mxu0 0
    %572 = vmatprep.subr.bf16.mxu0 0
    %573 = vmatpush2.bf16.msra.mxu0 0
    %574 = vmatprep.subr.bf16.mxu0 0
    %575 = vmatpush2.bf16.msra.mxu0 0
    %576 = vmatprep.mubr.bf16.mxu0 0
    %577 = vmatmul.mubr.bf16.gmra.mxu0 %v310
    %v578 = vpop.f32.mrf.mxu0
    %v579 = vadd.f32 0.0, %v578
    %v580 = vpop.f32.mrf.mxu0
    %v581 = vadd.f32 0.0, %v580
    %v582 = vpop.f32.mrf.mxu0
    %v583 = vpop.f32.mrf.mxu0
    %584 = vdwg.mxu0
    %v585 = vadd.f32 %v306, %v538
    %v586 = vadd.f32 %v307, %v540
    %v587 = vadd.f32 %v308, %v579
    %v588 = vadd.f32 %v309, %v581
    %v589 = vxor.u32 %v585, 2147483648
    %v590 = vxor.u32 %v586, 2147483648
    %v591 = vxor.u32 %v587, 2147483648
    %v592 = vmul.f32 %v589, 1.442695
    %v593 = vpow.pop %v592
    %v594 = vmul.f32 %v590, 1.442695
    %v595 = vpow.pop %v594
    %v596 = vmul.f32 %v591, 1.442695
    %v597 = vpow.pop %v596
    %v598 = vadd.f32 %v593, 1.0
    %v599 = vadd.f32 %v595, 1.0
    %v600 = vadd.f32 %v597, 1.0
    %v601 = vrcp.pop %v598
    %v602 = vmul.f32 1.0, %v601
    %v603 = vrcp.pop %v599
    %v604 = vmul.f32 1.0, %v603
    %v605 = vrcp.pop %v600
    %v606 = vmul.f32 1.0, %v605
    %v607 = vtanh.pop %v588
    %v608 = vmul.f32 %v604, %v302
    %v609 = vmul.f32 %v602, %v607
    %v610 = vadd.f32 %v608, %v609
    %v611 = vtanh.pop %v610
    %v612 = vmul.f32 %v606, %v611
    %613 = vst [vmem:[%s4] sm:$0xff] %v612
    %s614 = smul.u32 1, 4
    %s615 = smul.addr %s614, 8
    %s616 = scalar_lea.vmem [#allocation4], %s615
    %v617 = vld [vmem:[%s616] sm:$0xff]
    %v618 = vld [vmem:[%s616 + $0x8] sm:$0xff]
    %v619 = vld [vmem:[%s616 + $0x10] sm:$0xff]
    %v620 = vld [vmem:[%s616 + $0x18] sm:$0xff]
    %v621 = vpack.c.bf16 %v612, %v612
    %v622 = vld [vmem:[#allocation7] sm:$0xff]
    %v623 = vld [vmem:[#allocation7 + $0x8] sm:$0xff]
    %v624 = vld [vmem:[#allocation7 + $0x10] sm:$0xff]
    %v625 = vld [vmem:[#allocation7 + $0x18] sm:$0xff]
    %v626 = vld [vmem:[#allocation7 + $0x20] sm:$0xff]
    %v627 = vld [vmem:[#allocation7 + $0x28] sm:$0xff]
    %v628 = vld [vmem:[#allocation7 + $0x30] sm:$0xff]
    %v629 = vld [vmem:[#allocation7 + $0x38] sm:$0xff]
    %v630 = vld [vmem:[#allocation7 + $0x40] sm:$0xff]
    %v631 = vld [vmem:[#allocation7 + $0x48] sm:$0xff]
    %v632 = vld [vmem:[#allocation7 + $0x50] sm:$0xff]
    %v633 = vld [vmem:[#allocation7 + $0x58] sm:$0xff]
    %v634 = vld [vmem:[#allocation7 + $0x60] sm:$0xff]
    %v635 = vld [vmem:[#allocation7 + $0x68] sm:$0xff]
    %v636 = vld [vmem:[#allocation7 + $0x70] sm:$0xff]
    %v637 = vld [vmem:[#allocation7 + $0x78] sm:$0xff]
    %v638 = vld [vmem:[#allocation7 + $0x80] sm:$0xff]
    %v639 = vld [vmem:[#allocation7 + $0x88] sm:$0xff]
    %v640 = vld [vmem:[#allocation7 + $0x90] sm:$0xff]
    %v641 = vld [vmem:[#allocation7 + $0x98] sm:$0xff]
    %v642 = vld [vmem:[#allocation7 + $0xa0] sm:$0xff]
    %v643 = vld [vmem:[#allocation7 + $0xa8] sm:$0xff]
    %v644 = vld [vmem:[#allocation7 + $0xb0] sm:$0xff]
    %v645 = vld [vmem:[#allocation7 + $0xb8] sm:$0xff]
    %v646 = vld [vmem:[#allocation7 + $0xc0] sm:$0xff]
    %v647 = vld [vmem:[#allocation7 + $0xc8] sm:$0xff]
    %v648 = vld [vmem:[#allocation7 + $0xd0] sm:$0xff]
    %v649 = vld [vmem:[#allocation7 + $0xd8] sm:$0xff]
    %v650 = vld [vmem:[#allocation7 + $0xe0] sm:$0xff]
    %v651 = vld [vmem:[#allocation7 + $0xe8] sm:$0xff]
    %v652 = vld [vmem:[#allocation7 + $0xf0] sm:$0xff]
    %v653 = vld [vmem:[#allocation7 + $0xf8] sm:$0xff]
    %v686 = vunpack.c.l.b16 %v622
    %v687 = vunpack.c.h.b16 %v622
    %v688 = vunpack.c.l.b16 %v623
    %v689 = vunpack.c.h.b16 %v623
    %v690 = vunpack.c.l.b16 %v624
    %v691 = vunpack.c.h.b16 %v624
    %v692 = vunpack.c.l.b16 %v625
    %v693 = vunpack.c.h.b16 %v625
    %v694 = vunpack.c.l.b16 %v626
    %v695 = vunpack.c.h.b16 %v626
    %v696 = vunpack.c.l.b16 %v627
    %v697 = vunpack.c.h.b16 %v627
    %v698 = vunpack.c.l.b16 %v628
    %v699 = vunpack.c.h.b16 %v628
    %v700 = vunpack.c.l.b16 %v629
    %v701 = vunpack.c.h.b16 %v629
    %v702 = vunpack.c.l.b16 %v630
    %v703 = vunpack.c.h.b16 %v630
    %v704 = vunpack.c.l.b16 %v631
    %v705 = vunpack.c.h.b16 %v631
    %v706 = vunpack.c.l.b16 %v632
    %v707 = vunpack.c.h.b16 %v632
    %v708 = vunpack.c.l.b16 %v633
    %v709 = vunpack.c.h.b16 %v633
    %v710 = vunpack.c.l.b16 %v634
    %v711 = vunpack.c.h.b16 %v634
    %v712 = vunpack.c.l.b16 %v635
    %v713 = vunpack.c.h.b16 %v635
    %v714 = vunpack.c.l.b16 %v636
    %v715 = vunpack.c.h.b16 %v636
    %v716 = vunpack.c.l.b16 %v637
    %v717 = vunpack.c.h.b16 %v637
    %v718 = vunpack.c.l.b16 %v638
    %v719 = vunpack.c.h.b16 %v638
    %v720 = vunpack.c.l.b16 %v639
    %v721 = vunpack.c.h.b16 %v639
    %v722 = vunpack.c.l.b16 %v640
    %v723 = vunpack.c.h.b16 %v640
    %v724 = vunpack.c.l.b16 %v641
    %v725 = vunpack.c.h.b16 %v641
    %v726 = vunpack.c.l.b16 %v642
    %v727 = vunpack.c.h.b16 %v642
    %v728 = vunpack.c.l.b16 %v643
    %v729 = vunpack.c.h.b16 %v643
    %v730 = vunpack.c.l.b16 %v644
    %v731 = vunpack.c.h.b16 %v644
    %v732 = vunpack.c.l.b16 %v645
    %v733 = vunpack.c.h.b16 %v645
    %v734 = vunpack.c.l.b16 %v646
    %v735 = vunpack.c.h.b16 %v646
    %v736 = vunpack.c.l.b16 %v647
    %v737 = vunpack.c.h.b16 %v647
    %v738 = vunpack.c.l.b16 %v648
    %v739 = vunpack.c.h.b16 %v648
    %v740 = vunpack.c.l.b16 %v649
    %v741 = vunpack.c.h.b16 %v649
    %v742 = vunpack.c.l.b16 %v650
    %v743 = vunpack.c.h.b16 %v650
    %v744 = vunpack.c.l.b16 %v651
    %v745 = vunpack.c.h.b16 %v651
    %v746 = vunpack.c.l.b16 %v652
    %v747 = vunpack.c.h.b16 %v652
    %v748 = vunpack.c.l.b16 %v653
    %v749 = vunpack.c.h.b16 %v653
    %v750 = vpack.c.b16 %v690, %v686
    %v751 = vpack.c.b16 %v691, %v687
    %v752 = vpack.c.b16 %v692, %v688
    %v753 = vpack.c.b16 %v693, %v689
    %v754 = vpack.c.b16 %v698, %v694
    %v755 = vpack.c.b16 %v699, %v695
    %v756 = vpack.c.b16 %v700, %v696
    %v757 = vpack.c.b16 %v701, %v697
    %v758 = vpack.c.b16 %v706, %v702
    %v759 = vpack.c.b16 %v707, %v703
    %v760 = vpack.c.b16 %v708, %v704
    %v761 = vpack.c.b16 %v709, %v705
    %v762 = vpack.c.b16 %v714, %v710
    %v763 = vpack.c.b16 %v715, %v711
    %v764 = vpack.c.b16 %v716, %v712
    %v765 = vpack.c.b16 %v717, %v713
    %v766 = vpack.c.b16 %v722, %v718
    %v767 = vpack.c.b16 %v723, %v719
    %v768 = vpack.c.b16 %v724, %v720
    %v769 = vpack.c.b16 %v725, %v721
    %v770 = vpack.c.b16 %v730, %v726
    %v771 = vpack.c.b16 %v731, %v727
    %v772 = vpack.c.b16 %v732, %v728
    %v773 = vpack.c.b16 %v733, %v729
    %v774 = vpack.c.b16 %v738, %v734
    %v775 = vpack.c.b16 %v739, %v735
    %v776 = vpack.c.b16 %v740, %v736
    %v777 = vpack.c.b16 %v741, %v737
    %v778 = vpack.c.b16 %v746, %v742
    %v779 = vpack.c.b16 %v747, %v743
    %v780 = vpack.c.b16 %v748, %v744
    %v781 = vpack.c.b16 %v749, %v745
    %814 = vmatprep.subr.bf16.mxu0 %v779
    %815 = vmatpush1.bf16.msra.mxu0 %v778
    %816 = vmatprep.subr.bf16.mxu0 %v775
    %817 = vmatpush1.bf16.msra.mxu0 %v774
    %818 = vmatprep.subr.bf16.mxu0 %v771
    %819 = vmatpush1.bf16.msra.mxu0 %v770
    %820 = vmatprep.subr.bf16.mxu0 %v767
    %821 = vmatpush1.bf16.msra.mxu0 %v766
    %822 = vmatprep.subr.bf16.mxu0 %v763
    %823 = vmatpush1.bf16.msra.mxu0 %v762
    %824 = vmatprep.subr.bf16.mxu0 %v759
    %825 = vmatpush1.bf16.msra.mxu0 %v758
    %826 = vmatprep.subr.bf16.mxu0 %v755
    %827 = vmatpush1.bf16.msra.mxu0 %v754
    %828 = vmatprep.subr.bf16.mxu0 %v751
    %829 = vmatpush1.bf16.msra.mxu0 %v750
    %830 = vmatprep.subr.bf16.mxu0 0
    %831 = vmatpush2.bf16.msra.mxu0 0
    %832 = vmatprep.subr.bf16.mxu0 0
    %833 = vmatpush2.bf16.msra.mxu0 0
    %834 = vmatprep.subr.bf16.mxu0 0
    %835 = vmatpush2.bf16.msra.mxu0 0
    %836 = vmatprep.subr.bf16.mxu0 0
    %837 = vmatpush2.bf16.msra.mxu0 0
    %838 = vmatprep.subr.bf16.mxu0 0
    %839 = vmatpush2.bf16.msra.mxu0 0
    %840 = vmatprep.subr.bf16.mxu0 0
    %841 = vmatpush2.bf16.msra.mxu0 0
    %842 = vmatprep.subr.bf16.mxu0 0
    %843 = vmatpush2.bf16.msra.mxu0 0
    %844 = vmatprep.subr.bf16.mxu0 0
    %845 = vmatpush2.bf16.msra.mxu0 0
    %846 = vmatprep.mubr.bf16.mxu0 0
    %847 = vmatmul.mubr.bf16.gmra.mxu0 %v621
    %v848 = vpop.f32.mrf.mxu0
    %v849 = vadd.f32 0.0, %v848
    %v850 = vpop.f32.mrf.mxu0
    %v851 = vadd.f32 0.0, %v850
    %v852 = vpop.f32.mrf.mxu0
    %v853 = vpop.f32.mrf.mxu0
    %854 = vdwg.mxu0
    %855 = vmatprep.subr.bf16.mxu0 %v781
    %856 = vmatpush1.bf16.msra.mxu0 %v780
    %857 = vmatprep.subr.bf16.mxu0 %v777
    %858 = vmatpush1.bf16.msra.mxu0 %v776
    %859 = vmatprep.subr.bf16.mxu0 %v773
    %860 = vmatpush1.bf16.msra.mxu0 %v772
    %861 = vmatprep.subr.bf16.mxu0 %v769
    %862 = vmatpush1.bf16.msra.mxu0 %v768
    %863 = vmatprep.subr.bf16.mxu0 %v765
    %864 = vmatpush1.bf16.msra.mxu0 %v764
    %865 = vmatprep.subr.bf16.mxu0 %v761
    %866 = vmatpush1.bf16.msra.mxu0 %v760
    %867 = vmatprep.subr.bf16.mxu0 %v757
    %868 = vmatpush1.bf16.msra.mxu0 %v756
    %869 = vmatprep.subr.bf16.mxu0 %v753
    %870 = vmatpush1.bf16.msra.mxu0 %v752
    %871 = vmatprep.subr.bf16.mxu0 0
    %872 = vmatpush2.bf16.msra.mxu0 0
    %873 = vmatprep.subr.bf16.mxu0 0
    %874 = vmatpush2.bf16.msra.mxu0 0
    %875 = vmatprep.subr.bf16.mxu0 0
    %876 = vmatpush2.bf16.msra.mxu0 0
    %877 = vmatprep.subr.bf16.mxu0 0
    %878 = vmatpush2.bf16.msra.mxu0 0
    %879 = vmatprep.subr.bf16.mxu0 0
    %880 = vmatpush2.bf16.msra.mxu0 0
    %881 = vmatprep.subr.bf16.mxu0 0
    %882 = vmatpush2.bf16.msra.mxu0 0
    %883 = vmatprep.subr.bf16.mxu0 0
    %884 = vmatpush2.bf16.msra.mxu0 0
    %885 = vmatprep.subr.bf16.mxu0 0
    %886 = vmatpush2.bf16.msra.mxu0 0
    %887 = vmatprep.mubr.bf16.mxu0 0
    %888 = vmatmul.mubr.bf16.gmra.mxu0 %v621
    %v889 = vpop.f32.mrf.mxu0
    %v890 = vadd.f32 0.0, %v889
    %v891 = vpop.f32.mrf.mxu0
    %v892 = vadd.f32 0.0, %v891
    %v893 = vpop.f32.mrf.mxu0
    %v894 = vpop.f32.mrf.mxu0
    %895 = vdwg.mxu0
    %v896 = vadd.f32 %v617, %v849
    %v897 = vadd.f32 %v618, %v851
    %v898 = vadd.f32 %v619, %v890
    %v899 = vadd.f32 %v620, %v892
    %v900 = vxor.u32 %v896, 2147483648
    %v901 = vxor.u32 %v897, 2147483648
    %v902 = vxor.u32 %v898, 2147483648
    %v903 = vmul.f32 %v900, 1.442695
    %v904 = vpow.pop %v903
    %v905 = vmul.f32 %v901, 1.442695
    %v906 = vpow.pop %v905
    %v907 = vmul.f32 %v902, 1.442695
    %v908 = vpow.pop %v907
    %v909 = vadd.f32 %v904, 1.0
    %v910 = vadd.f32 %v906, 1.0
    %v911 = vadd.f32 %v908, 1.0
    %v912 = vrcp.pop %v909
    %v913 = vmul.f32 1.0, %v912
    %v914 = vrcp.pop %v910
    %v915 = vmul.f32 1.0, %v914
    %v916 = vrcp.pop %v911
    %v917 = vmul.f32 1.0, %v916
    %v918 = vtanh.pop %v899
    %v919 = vmul.f32 %v915, %v610
    %v920 = vmul.f32 %v913, %v918
    %v921 = vadd.f32 %v919, %v920
    %v922 = vtanh.pop %v921
    %v923 = vmul.f32 %v917, %v922
    %s924 = scalar_lea.vmem %s4, 8
    %925 = vst [vmem:[%s924] sm:$0xff] %v923
    %s926 = smul.u32 2, 4
    %s927 = smul.addr %s926, 8
    %s928 = scalar_lea.vmem [#allocation4], %s927
    %v929 = vld [vmem:[%s928] sm:$0xff]
    %v930 = vld [vmem:[%s928 + $0x8] sm:$0xff]
    %v931 = vld [vmem:[%s928 + $0x10] sm:$0xff]
    %v932 = vld [vmem:[%s928 + $0x18] sm:$0xff]
    %v933 = vpack.c.bf16 %v923, %v923
    %v934 = vld [vmem:[#allocation7] sm:$0xff]
    %v935 = vld [vmem:[#allocation7 + $0x8] sm:$0xff]
    %v936 = vld [vmem:[#allocation7 + $0x10] sm:$0xff]
    %v937 = vld [vmem:[#allocation7 + $0x18] sm:$0xff]
    %v938 = vld [vmem:[#allocation7 + $0x20] sm:$0xff]
    %v939 = vld [vmem:[#allocation7 + $0x28] sm:$0xff]
    %v940 = vld [vmem:[#allocation7 + $0x30] sm:$0xff]
    %v941 = vld [vmem:[#allocation7 + $0x38] sm:$0xff]
    %v942 = vld [vmem:[#allocation7 + $0x40] sm:$0xff]
    %v943 = vld [vmem:[#allocation7 + $0x48] sm:$0xff]
    %v944 = vld [vmem:[#allocation7 + $0x50] sm:$0xff]
    %v945 = vld [vmem:[#allocation7 + $0x58] sm:$0xff]
    %v946 = vld [vmem:[#allocation7 + $0x60] sm:$0xff]
    %v947 = vld [vmem:[#allocation7 + $0x68] sm:$0xff]
    %v948 = vld [vmem:[#allocation7 + $0x70] sm:$0xff]
    %v949 = vld [vmem:[#allocation7 + $0x78] sm:$0xff]
    %v950 = vld [vmem:[#allocation7 + $0x80] sm:$0xff]
    %v951 = vld [vmem:[#allocation7 + $0x88] sm:$0xff]
    %v952 = vld [vmem:[#allocation7 + $0x90] sm:$0xff]
    %v953 = vld [vmem:[#allocation7 + $0x98] sm:$0xff]
    %v954 = vld [vmem:[#allocation7 + $0xa0] sm:$0xff]
    %v955 = vld [vmem:[#allocation7 + $0xa8] sm:$0xff]
    %v956 = vld [vmem:[#allocation7 + $0xb0] sm:$0xff]
    %v957 = vld [vmem:[#allocation7 + $0xb8] sm:$0xff]
    %v958 = vld [vmem:[#allocation7 + $0xc0] sm:$0xff]
    %v959 = vld [vmem:[#allocation7 + $0xc8] sm:$0xff]
    %v960 = vld [vmem:[#allocation7 + $0xd0] sm:$0xff]
    %v961 = vld [vmem:[#allocation7 + $0xd8] sm:$0xff]
    %v962 = vld [vmem:[#allocation7 + $0xe0] sm:$0xff]
    %v963 = vld [vmem:[#allocation7 + $0xe8] sm:$0xff]
    %v964 = vld [vmem:[#allocation7 + $0xf0] sm:$0xff]
    %v965 = vld [vmem:[#allocation7 + $0xf8] sm:$0xff]
    %v998 = vunpack.c.l.b16 %v934
    %v999 = vunpack.c.h.b16 %v934
    %v1000 = vunpack.c.l.b16 %v935
    %v1001 = vunpack.c.h.b16 %v935
    %v1002 = vunpack.c.l.b16 %v936
    %v1003 = vunpack.c.h.b16 %v936
    %v1004 = vunpack.c.l.b16 %v937
    %v1005 = vunpack.c.h.b16 %v937
    %v1006 = vunpack.c.l.b16 %v938
    %v1007 = vunpack.c.h.b16 %v938
    %v1008 = vunpack.c.l.b16 %v939
    %v1009 = vunpack.c.h.b16 %v939
    %v1010 = vunpack.c.l.b16 %v940
    %v1011 = vunpack.c.h.b16 %v940
    %v1012 = vunpack.c.l.b16 %v941
    %v1013 = vunpack.c.h.b16 %v941
    %v1014 = vunpack.c.l.b16 %v942
    %v1015 = vunpack.c.h.b16 %v942
    %v1016 = vunpack.c.l.b16 %v943
    %v1017 = vunpack.c.h.b16 %v943
    %v1018 = vunpack.c.l.b16 %v944
    %v1019 = vunpack.c.h.b16 %v944
    %v1020 = vunpack.c.l.b16 %v945
    %v1021 = vunpack.c.h.b16 %v945
    %v1022 = vunpack.c.l.b16 %v946
    %v1023 = vunpack.c.h.b16 %v946
    %v1024 = vunpack.c.l.b16 %v947
    %v1025 = vunpack.c.h.b16 %v947
    %v1026 = vunpack.c.l.b16 %v948
    %v1027 = vunpack.c.h.b16 %v948
    %v1028 = vunpack.c.l.b16 %v949
    %v1029 = vunpack.c.h.b16 %v949
    %v1030 = vunpack.c.l.b16 %v950
    %v1031 = vunpack.c.h.b16 %v950
    %v1032 = vunpack.c.l.b16 %v951
    %v1033 = vunpack.c.h.b16 %v951
    %v1034 = vunpack.c.l.b16 %v952
    %v1035 = vunpack.c.h.b16 %v952
    %v1036 = vunpack.c.l.b16 %v953
    %v1037 = vunpack.c.h.b16 %v953
    %v1038 = vunpack.c.l.b16 %v954
    %v1039 = vunpack.c.h.b16 %v954
    %v1040 = vunpack.c.l.b16 %v955
    %v1041 = vunpack.c.h.b16 %v955
    %v1042 = vunpack.c.l.b16 %v956
    %v1043 = vunpack.c.h.b16 %v956
    %v1044 = vunpack.c.l.b16 %v957
    %v1045 = vunpack.c.h.b16 %v957
    %v1046 = vunpack.c.l.b16 %v958
    %v1047 = vunpack.c.h.b16 %v958
    %v1048 = vunpack.c.l.b16 %v959
    %v1049 = vunpack.c.h.b16 %v959
    %v1050 = vunpack.c.l.b16 %v960
    %v1051 = vunpack.c.h.b16 %v960
    %v1052 = vunpack.c.l.b16 %v961
    %v1053 = vunpack.c.h.b16 %v961
    %v1054 = vunpack.c.l.b16 %v962
    %v1055 = vunpack.c.h.b16 %v962
    %v1056 = vunpack.c.l.b16 %v963
    %v1057 = vunpack.c.h.b16 %v963
    %v1058 = vunpack.c.l.b16 %v964
    %v1059 = vunpack.c.h.b16 %v964
    %v1060 = vunpack.c.l.b16 %v965
    %v1061 = vunpack.c.h.b16 %v965
    %v1062 = vpack.c.b16 %v1002, %v998
    %v1063 = vpack.c.b16 %v1003, %v999
    %v1064 = vpack.c.b16 %v1004, %v1000
    %v1065 = vpack.c.b16 %v1005, %v1001
    %v1066 = vpack.c.b16 %v1010, %v1006
    %v1067 = vpack.c.b16 %v1011, %v1007
    %v1068 = vpack.c.b16 %v1012, %v1008
    %v1069 = vpack.c.b16 %v1013, %v1009
    %v1070 = vpack.c.b16 %v1018, %v1014
    %v1071 = vpack.c.b16 %v1019, %v1015
    %v1072 = vpack.c.b16 %v1020, %v1016
    %v1073 = vpack.c.b16 %v1021, %v1017
    %v1074 = vpack.c.b16 %v1026, %v1022
    %v1075 = vpack.c.b16 %v1027, %v1023
    %v1076 = vpack.c.b16 %v1028, %v1024
    %v1077 = vpack.c.b16 %v1029, %v1025
    %v1078 = vpack.c.b16 %v1034, %v1030
    %v1079 = vpack.c.b16 %v1035, %v1031
    %v1080 = vpack.c.b16 %v1036, %v1032
    %v1081 = vpack.c.b16 %v1037, %v1033
    %v1082 = vpack.c.b16 %v1042, %v1038
    %v1083 = vpack.c.b16 %v1043, %v1039
    %v1084 = vpack.c.b16 %v1044, %v1040
    %v1085 = vpack.c.b16 %v1045, %v1041
    %v1086 = vpack.c.b16 %v1050, %v1046
    %v1087 = vpack.c.b16 %v1051, %v1047
    %v1088 = vpack.c.b16 %v1052, %v1048
    %v1089 = vpack.c.b16 %v1053, %v1049
    %v1090 = vpack.c.b16 %v1058, %v1054
    %v1091 = vpack.c.b16 %v1059, %v1055
    %v1092 = vpack.c.b16 %v1060, %v1056
    %v1093 = vpack.c.b16 %v1061, %v1057
    %1126 = vmatprep.subr.bf16.mxu0 %v1091
    %1127 = vmatpush1.bf16.msra.mxu0 %v1090
    %1128 = vmatprep.subr.bf16.mxu0 %v1087
    %1129 = vmatpush1.bf16.msra.mxu0 %v1086
    %1130 = vmatprep.subr.bf16.mxu0 %v1083
    %1131 = vmatpush1.bf16.msra.mxu0 %v1082
    %1132 = vmatprep.subr.bf16.mxu0 %v1079
    %1133 = vmatpush1.bf16.msra.mxu0 %v1078
    %1134 = vmatprep.subr.bf16.mxu0 %v1075
    %1135 = vmatpush1.bf16.msra.mxu0 %v1074
    %1136 = vmatprep.subr.bf16.mxu0 %v1071
    %1137 = vmatpush1.bf16.msra.mxu0 %v1070
    %1138 = vmatprep.subr.bf16.mxu0 %v1067
    %1139 = vmatpush1.bf16.msra.mxu0 %v1066
    %1140 = vmatprep.subr.bf16.mxu0 %v1063
    %1141 = vmatpush1.bf16.msra.mxu0 %v1062
    %1142 = vmatprep.subr.bf16.mxu0 0
    %1143 = vmatpush2.bf16.msra.mxu0 0
    %1144 = vmatprep.subr.bf16.mxu0 0
    %1145 = vmatpush2.bf16.msra.mxu0 0
    %1146 = vmatprep.subr.bf16.mxu0 0
    %1147 = vmatpush2.bf16.msra.mxu0 0
    %1148 = vmatprep.subr.bf16.mxu0 0
    %1149 = vmatpush2.bf16.msra.mxu0 0
    %1150 = vmatprep.subr.bf16.mxu0 0
    %1151 = vmatpush2.bf16.msra.mxu0 0
    %1152 = vmatprep.subr.bf16.mxu0 0
    %1153 = vmatpush2.bf16.msra.mxu0 0
    %1154 = vmatprep.subr.bf16.mxu0 0
    %1155 = vmatpush2.bf16.msra.mxu0 0
    %1156 = vmatprep.subr.bf16.mxu0 0
    %1157 = vmatpush2.bf16.msra.mxu0 0
    %1158 = vmatprep.mubr.bf16.mxu0 0
    %1159 = vmatmul.mubr.bf16.gmra.mxu0 %v933
    %v1160 = vpop.f32.mrf.mxu0
    %v1161 = vadd.f32 0.0, %v1160
    %v1162 = vpop.f32.mrf.mxu0
    %v1163 = vadd.f32 0.0, %v1162
    %v1164 = vpop.f32.mrf.mxu0
    %v1165 = vpop.f32.mrf.mxu0
    %1166 = vdwg.mxu0
    %1167 = vmatprep.subr.bf16.mxu0 %v1093
    %1168 = vmatpush1.bf16.msra.mxu0 %v1092
    %1169 = vmatprep.subr.bf16.mxu0 %v1089
    %1170 = vmatpush1.bf16.msra.mxu0 %v1088
    %1171 = vmatprep.subr.bf16.mxu0 %v1085
    %1172 = vmatpush1.bf16.msra.mxu0 %v1084
    %1173 = vmatprep.subr.bf16.mxu0 %v1081
    %1174 = vmatpush1.bf16.msra.mxu0 %v1080
    %1175 = vmatprep.subr.bf16.mxu0 %v1077
    %1176 = vmatpush1.bf16.msra.mxu0 %v1076
    %1177 = vmatprep.subr.bf16.mxu0 %v1073
    %1178 = vmatpush1.bf16.msra.mxu0 %v1072
    %1179 = vmatprep.subr.bf16.mxu0 %v1069
    %1180 = vmatpush1.bf16.msra.mxu0 %v1068
    %1181 = vmatprep.subr.bf16.mxu0 %v1065
    %1182 = vmatpush1.bf16.msra.mxu0 %v1064
    %1183 = vmatprep.subr.bf16.mxu0 0
    %1184 = vmatpush2.bf16.msra.mxu0 0
    %1185 = vmatprep.subr.bf16.mxu0 0
    %1186 = vmatpush2.bf16.msra.mxu0 0
    %1187 = vmatprep.subr.bf16.mxu0 0
    %1188 = vmatpush2.bf16.msra.mxu0 0
    %1189 = vmatprep.subr.bf16.mxu0 0
    %1190 = vmatpush2.bf16.msra.mxu0 0
    %1191 = vmatprep.subr.bf16.mxu0 0
    %1192 = vmatpush2.bf16.msra.mxu0 0
    %1193 = vmatprep.subr.bf16.mxu0 0
    %1194 = vmatpush2.bf16.msra.mxu0 0
    %1195 = vmatprep.subr.bf16.mxu0 0
    %1196 = vmatpush2.bf16.msra.mxu0 0
    %1197 = vmatprep.subr.bf16.mxu0 0
    %1198 = vmatpush2.bf16.msra.mxu0 0
    %1199 = vmatprep.mubr.bf16.mxu0 0
    %1200 = vmatmul.mubr.bf16.gmra.mxu0 %v933
    %v1201 = vpop.f32.mrf.mxu0
    %v1202 = vadd.f32 0.0, %v1201
    %v1203 = vpop.f32.mrf.mxu0
    %v1204 = vadd.f32 0.0, %v1203
    %v1205 = vpop.f32.mrf.mxu0
    %v1206 = vpop.f32.mrf.mxu0
    %1207 = vdwg.mxu0
    %v1208 = vadd.f32 %v929, %v1161
    %v1209 = vadd.f32 %v930, %v1163
    %v1210 = vadd.f32 %v931, %v1202
    %v1211 = vadd.f32 %v932, %v1204
    %v1212 = vxor.u32 %v1208, 2147483648
    %v1213 = vxor.u32 %v1209, 2147483648
    %v1214 = vxor.u32 %v1210, 2147483648
    %v1215 = vmul.f32 %v1212, 1.442695
    %v1216 = vpow.pop %v1215
    %v1217 = vmul.f32 %v1213, 1.442695
    %v1218 = vpow.pop %v1217
    %v1219 = vmul.f32 %v1214, 1.442695
    %v1220 = vpow.pop %v1219
    %v1221 = vadd.f32 %v1216, 1.0
    %v1222 = vadd.f32 %v1218, 1.0
    %v1223 = vadd.f32 %v1220, 1.0
    %v1224 = vrcp.pop %v1221
    %v1225 = vmul.f32 1.0, %v1224
    %v1226 = vrcp.pop %v1222
    %v1227 = vmul.f32 1.0, %v1226
    %v1228 = vrcp.pop %v1223
    %v1229 = vmul.f32 1.0, %v1228
    %v1230 = vtanh.pop %v1211
    %v1231 = vmul.f32 %v1227, %v921
    %v1232 = vmul.f32 %v1225, %v1230
    %v1233 = vadd.f32 %v1231, %v1232
    %v1234 = vtanh.pop %v1233
    %v1235 = vmul.f32 %v1229, %v1234
    %s1236 = scalar_lea.vmem %s4, 16
    %1237 = vst [vmem:[%s1236] sm:$0xff] %v1235
    %s1238 = smul.u32 3, 4
    %s1239 = smul.addr %s1238, 8
    %s1240 = scalar_lea.vmem [#allocation4], %s1239
    %v1241 = vld [vmem:[%s1240] sm:$0xff]
    %v1242 = vld [vmem:[%s1240 + $0x8] sm:$0xff]
    %v1243 = vld [vmem:[%s1240 + $0x10] sm:$0xff]
    %v1244 = vld [vmem:[%s1240 + $0x18] sm:$0xff]
    %v1245 = vpack.c.bf16 %v1235, %v1235
    %v1246 = vld [vmem:[#allocation7] sm:$0xff]
    %v1247 = vld [vmem:[#allocation7 + $0x8] sm:$0xff]
    %v1248 = vld [vmem:[#allocation7 + $0x10] sm:$0xff]
    %v1249 = vld [vmem:[#allocation7 + $0x18] sm:$0xff]
    %v1250 = vld [vmem:[#allocation7 + $0x20] sm:$0xff]
    %v1251 = vld [vmem:[#allocation7 + $0x28] sm:$0xff]
    %v1252 = vld [vmem:[#allocation7 + $0x30] sm:$0xff]
    %v1253 = vld [vmem:[#allocation7 + $0x38] sm:$0xff]
    %v1254 = vld [vmem:[#allocation7 + $0x40] sm:$0xff]
    %v1255 = vld [vmem:[#allocation7 + $0x48] sm:$0xff]
    %v1256 = vld [vmem:[#allocation7 + $0x50] sm:$0xff]
    %v1257 = vld [vmem:[#allocation7 + $0x58] sm:$0xff]
    %v1258 = vld [vmem:[#allocation7 + $0x60] sm:$0xff]
    %v1259 = vld [vmem:[#allocation7 + $0x68] sm:$0xff]
    %v1260 = vld [vmem:[#allocation7 + $0x70] sm:$0xff]
    %v1261 = vld [vmem:[#allocation7 + $0x78] sm:$0xff]
    %v1262 = vld [vmem:[#allocation7 + $0x80] sm:$0xff]
    %v1263 = vld [vmem:[#allocation7 + $0x88] sm:$0xff]
    %v1264 = vld [vmem:[#allocation7 + $0x90] sm:$0xff]
    %v1265 = vld [vmem:[#allocation7 + $0x98] sm:$0xff]
    %v1266 = vld [vmem:[#allocation7 + $0xa0] sm:$0xff]
    %v1267 = vld [vmem:[#allocation7 + $0xa8] sm:$0xff]
    %v1268 = vld [vmem:[#allocation7 + $0xb0] sm:$0xff]
    %v1269 = vld [vmem:[#allocation7 + $0xb8] sm:$0xff]
    %v1270 = vld [vmem:[#allocation7 + $0xc0] sm:$0xff]
    %v1271 = vld [vmem:[#allocation7 + $0xc8] sm:$0xff]
    %v1272 = vld [vmem:[#allocation7 + $0xd0] sm:$0xff]
    %v1273 = vld [vmem:[#allocation7 + $0xd8] sm:$0xff]
    %v1274 = vld [vmem:[#allocation7 + $0xe0] sm:$0xff]
    %v1275 = vld [vmem:[#allocation7 + $0xe8] sm:$0xff]
    %v1276 = vld [vmem:[#allocation7 + $0xf0] sm:$0xff]
    %v1277 = vld [vmem:[#allocation7 + $0xf8] sm:$0xff]
    %v1310 = vunpack.c.l.b16 %v1246
    %v1311 = vunpack.c.h.b16 %v1246
    %v1312 = vunpack.c.l.b16 %v1247
    %v1313 = vunpack.c.h.b16 %v1247
    %v1314 = vunpack.c.l.b16 %v1248
    %v1315 = vunpack.c.h.b16 %v1248
    %v1316 = vunpack.c.l.b16 %v1249
    %v1317 = vunpack.c.h.b16 %v1249
    %v1318 = vunpack.c.l.b16 %v1250
    %v1319 = vunpack.c.h.b16 %v1250
    %v1320 = vunpack.c.l.b16 %v1251
    %v1321 = vunpack.c.h.b16 %v1251
    %v1322 = vunpack.c.l.b16 %v1252
    %v1323 = vunpack.c.h.b16 %v1252
    %v1324 = vunpack.c.l.b16 %v1253
    %v1325 = vunpack.c.h.b16 %v1253
    %v1326 = vunpack.c.l.b16 %v1254
    %v1327 = vunpack.c.h.b16 %v1254
    %v1328 = vunpack.c.l.b16 %v1255
    %v1329 = vunpack.c.h.b16 %v1255
    %v1330 = vunpack.c.l.b16 %v1256
    %v1331 = vunpack.c.h.b16 %v1256
    %v1332 = vunpack.c.l.b16 %v1257
    %v1333 = vunpack.c.h.b16 %v1257
    %v1334 = vunpack.c.l.b16 %v1258
    %v1335 = vunpack.c.h.b16 %v1258
    %v1336 = vunpack.c.l.b16 %v1259
    %v1337 = vunpack.c.h.b16 %v1259
    %v1338 = vunpack.c.l.b16 %v1260
    %v1339 = vunpack.c.h.b16 %v1260
    %v1340 = vunpack.c.l.b16 %v1261
    %v1341 = vunpack.c.h.b16 %v1261
    %v1342 = vunpack.c.l.b16 %v1262
    %v1343 = vunpack.c.h.b16 %v1262
    %v1344 = vunpack.c.l.b16 %v1263
    %v1345 = vunpack.c.h.b16 %v1263
    %v1346 = vunpack.c.l.b16 %v1264
    %v1347 = vunpack.c.h.b16 %v1264
    %v1348 = vunpack.c.l.b16 %v1265
    %v1349 = vunpack.c.h.b16 %v1265
    %v1350 = vunpack.c.l.b16 %v1266
    %v1351 = vunpack.c.h.b16 %v1266
    %v1352 = vunpack.c.l.b16 %v1267
    %v1353 = vunpack.c.h.b16 %v1267
    %v1354 = vunpack.c.l.b16 %v1268
    %v1355 = vunpack.c.h.b16 %v1268
    %v1356 = vunpack.c.l.b16 %v1269
    %v1357 = vunpack.c.h.b16 %v1269
    %v1358 = vunpack.c.l.b16 %v1270
    %v1359 = vunpack.c.h.b16 %v1270
    %v1360 = vunpack.c.l.b16 %v1271
    %v1361 = vunpack.c.h.b16 %v1271
    %v1362 = vunpack.c.l.b16 %v1272
    %v1363 = vunpack.c.h.b16 %v1272
    %v1364 = vunpack.c.l.b16 %v1273
    %v1365 = vunpack.c.h.b16 %v1273
    %v1366 = vunpack.c.l.b16 %v1274
    %v1367 = vunpack.c.h.b16 %v1274
    %v1368 = vunpack.c.l.b16 %v1275
    %v1369 = vunpack.c.h.b16 %v1275
    %v1370 = vunpack.c.l.b16 %v1276
    %v1371 = vunpack.c.h.b16 %v1276
    %v1372 = vunpack.c.l.b16 %v1277
    %v1373 = vunpack.c.h.b16 %v1277
    %v1374 = vpack.c.b16 %v1314, %v1310
    %v1375 = vpack.c.b16 %v1315, %v1311
    %v1376 = vpack.c.b16 %v1316, %v1312
    %v1377 = vpack.c.b16 %v1317, %v1313
    %v1378 = vpack.c.b16 %v1322, %v1318
    %v1379 = vpack.c.b16 %v1323, %v1319
    %v1380 = vpack.c.b16 %v1324, %v1320
    %v1381 = vpack.c.b16 %v1325, %v1321
    %v1382 = vpack.c.b16 %v1330, %v1326
    %v1383 = vpack.c.b16 %v1331, %v1327
    %v1384 = vpack.c.b16 %v1332, %v1328
    %v1385 = vpack.c.b16 %v1333, %v1329
    %v1386 = vpack.c.b16 %v1338, %v1334
    %v1387 = vpack.c.b16 %v1339, %v1335
    %v1388 = vpack.c.b16 %v1340, %v1336
    %v1389 = vpack.c.b16 %v1341, %v1337
    %v1390 = vpack.c.b16 %v1346, %v1342
    %v1391 = vpack.c.b16 %v1347, %v1343
    %v1392 = vpack.c.b16 %v1348, %v1344
    %v1393 = vpack.c.b16 %v1349, %v1345
    %v1394 = vpack.c.b16 %v1354, %v1350
    %v1395 = vpack.c.b16 %v1355, %v1351
    %v1396 = vpack.c.b16 %v1356, %v1352
    %v1397 = vpack.c.b16 %v1357, %v1353
    %v1398 = vpack.c.b16 %v1362, %v1358
    %v1399 = vpack.c.b16 %v1363, %v1359
    %v1400 = vpack.c.b16 %v1364, %v1360
    %v1401 = vpack.c.b16 %v1365, %v1361
    %v1402 = vpack.c.b16 %v1370, %v1366
    %v1403 = vpack.c.b16 %v1371, %v1367
    %v1404 = vpack.c.b16 %v1372, %v1368
    %v1405 = vpack.c.b16 %v1373, %v1369
    %1438 = vmatprep.subr.bf16.mxu0 %v1403
    %1439 = vmatpush1.bf16.msra.mxu0 %v1402
    %1440 = vmatprep.subr.bf16.mxu0 %v1399
    %1441 = vmatpush1.bf16.msra.mxu0 %v1398
    %1442 = vmatprep.subr.bf16.mxu0 %v1395
    %1443 = vmatpush1.bf16.msra.mxu0 %v1394
    %1444 = vmatprep.subr.bf16.mxu0 %v1391
    %1445 = vmatpush1.bf16.msra.mxu0 %v1390
    %1446 = vmatprep.subr.bf16.mxu0 %v1387
    %1447 = vmatpush1.bf16.msra.mxu0 %v1386
    %1448 = vmatprep.subr.bf16.mxu0 %v1383
    %1449 = vmatpush1.bf16.msra.mxu0 %v1382
    %1450 = vmatprep.subr.bf16.mxu0 %v1379
    %1451 = vmatpush1.bf16.msra.mxu0 %v1378
    %1452 = vmatprep.subr.bf16.mxu0 %v1375
    %1453 = vmatpush1.bf16.msra.mxu0 %v1374
    %1454 = vmatprep.subr.bf16.mxu0 0
    %1455 = vmatpush2.bf16.msra.mxu0 0
    %1456 = vmatprep.subr.bf16.mxu0 0
    %1457 = vmatpush2.bf16.msra.mxu0 0
    %1458 = vmatprep.subr.bf16.mxu0 0
    %1459 = vmatpush2.bf16.msra.mxu0 0
    %1460 = vmatprep.subr.bf16.mxu0 0
    %1461 = vmatpush2.bf16.msra.mxu0 0
    %1462 = vmatprep.subr.bf16.mxu0 0
    %1463 = vmatpush2.bf16.msra.mxu0 0
    %1464 = vmatprep.subr.bf16.mxu0 0
    %1465 = vmatpush2.bf16.msra.mxu0 0
    %1466 = vmatprep.subr.bf16.mxu0 0
    %1467 = vmatpush2.bf16.msra.mxu0 0
    %1468 = vmatprep.subr.bf16.mxu0 0
    %1469 = vmatpush2.bf16.msra.mxu0 0
    %1470 = vmatprep.mubr.bf16.mxu0 0
    %1471 = vmatmul.mubr.bf16.gmra.mxu0 %v1245
    %v1472 = vpop.f32.mrf.mxu0
    %v1473 = vadd.f32 0.0, %v1472
    %v1474 = vpop.f32.mrf.mxu0
    %v1475 = vadd.f32 0.0, %v1474
    %v1476 = vpop.f32.mrf.mxu0
    %v1477 = vpop.f32.mrf.mxu0
    %1478 = vdwg.mxu0
    %1479 = vmatprep.subr.bf16.mxu0 %v1405
    %1480 = vmatpush1.bf16.msra.mxu0 %v1404
    %1481 = vmatprep.subr.bf16.mxu0 %v1401
    %1482 = vmatpush1.bf16.msra.mxu0 %v1400
    %1483 = vmatprep.subr.bf16.mxu0 %v1397
    %1484 = vmatpush1.bf16.msra.mxu0 %v1396
    %1485 = vmatprep.subr.bf16.mxu0 %v1393
    %1486 = vmatpush1.bf16.msra.mxu0 %v1392
    %1487 = vmatprep.subr.bf16.mxu0 %v1389
    %1488 = vmatpush1.bf16.msra.mxu0 %v1388
    %1489 = vmatprep.subr.bf16.mxu0 %v1385
    %1490 = vmatpush1.bf16.msra.mxu0 %v1384
    %1491 = vmatprep.subr.bf16.mxu0 %v1381
    %1492 = vmatpush1.bf16.msra.mxu0 %v1380
    %1493 = vmatprep.subr.bf16.mxu0 %v1377
    %1494 = vmatpush1.bf16.msra.mxu0 %v1376
    %1495 = vmatprep.subr.bf16.mxu0 0
    %1496 = vmatpush2.bf16.msra.mxu0 0
    %1497 = vmatprep.subr.bf16.mxu0 0
    %1498 = vmatpush2.bf16.msra.mxu0 0
    %1499 = vmatprep.subr.bf16.mxu0 0
    %1500 = vmatpush2.bf16.msra.mxu0 0
    %1501 = vmatprep.subr.bf16.mxu0 0
    %1502 = vmatpush2.bf16.msra.mxu0 0
    %1503 = vmatprep.subr.bf16.mxu0 0
    %1504 = vmatpush2.bf16.msra.mxu0 0
    %1505 = vmatprep.subr.bf16.mxu0 0
    %1506 = vmatpush2.bf16.msra.mxu0 0
    %1507 = vmatprep.subr.bf16.mxu0 0
    %1508 = vmatpush2.bf16.msra.mxu0 0
    %1509 = vmatprep.subr.bf16.mxu0 0
    %1510 = vmatpush2.bf16.msra.mxu0 0
    %1511 = vmatprep.mubr.bf16.mxu0 0
    %1512 = vmatmul.mubr.bf16.gmra.mxu0 %v1245
    %v1513 = vpop.f32.mrf.mxu0
    %v1514 = vadd.f32 0.0, %v1513
    %v1515 = vpop.f32.mrf.mxu0
    %v1516 = vadd.f32 0.0, %v1515
    %v1517 = vpop.f32.mrf.mxu0
    %v1518 = vpop.f32.mrf.mxu0
    %1519 = vdwg.mxu0
    %v1520 = vadd.f32 %v1241, %v1473
    %v1521 = vadd.f32 %v1242, %v1475
    %v1522 = vadd.f32 %v1243, %v1514
    %v1523 = vadd.f32 %v1244, %v1516
    %v1524 = vxor.u32 %v1520, 2147483648
    %v1525 = vxor.u32 %v1521, 2147483648
    %v1526 = vxor.u32 %v1522, 2147483648
    %v1527 = vmul.f32 %v1524, 1.442695
    %v1528 = vpow.pop %v1527
    %v1529 = vmul.f32 %v1525, 1.442695
    %v1530 = vpow.pop %v1529
    %v1531 = vmul.f32 %v1526, 1.442695
    %v1532 = vpow.pop %v1531
    %v1533 = vadd.f32 %v1528, 1.0
    %v1534 = vadd.f32 %v1530, 1.0
    %v1535 = vadd.f32 %v1532, 1.0
    %v1536 = vrcp.pop %v1533
    %v1537 = vmul.f32 1.0, %v1536
    %v1538 = vrcp.pop %v1534
    %v1539 = vmul.f32 1.0, %v1538
    %v1540 = vrcp.pop %v1535
    %v1541 = vmul.f32 1.0, %v1540
    %v1542 = vtanh.pop %v1523
    %v1543 = vmul.f32 %v1539, %v1233
    %v1544 = vmul.f32 %v1537, %v1542
    %v1545 = vadd.f32 %v1543, %v1544
    %v1546 = vtanh.pop %v1545
    %v1547 = vmul.f32 %v1541, %v1546
    %s1548 = scalar_lea.vmem %s4, 24
    %1549 = vst [vmem:[%s1548] sm:$0xff] %v1547
    %s1550 = smul.u32 4, 4
    %s1551 = smul.addr %s1550, 8
    %s1552 = scalar_lea.vmem [#allocation4], %s1551
    %v1553 = vld [vmem:[%s1552] sm:$0xff]
    %v1554 = vld [vmem:[%s1552 + $0x8] sm:$0xff]
    %v1555 = vld [vmem:[%s1552 + $0x10] sm:$0xff]
    %v1556 = vld [vmem:[%s1552 + $0x18] sm:$0xff]
    %v1557 = vpack.c.bf16 %v1547, %v1547
    %v1558 = vld [vmem:[#allocation7] sm:$0xff]
    %v1559 = vld [vmem:[#allocation7 + $0x8] sm:$0xff]
    %v1560 = vld [vmem:[#allocation7 + $0x10] sm:$0xff]
    %v1561 = vld [vmem:[#allocation7 + $0x18] sm:$0xff]
    %v1562 = vld [vmem:[#allocation7 + $0x20] sm:$0xff]
    %v1563 = vld [vmem:[#allocation7 + $0x28] sm:$0xff]
    %v1564 = vld [vmem:[#allocation7 + $0x30] sm:$0xff]
    %v1565 = vld [vmem:[#allocation7 + $0x38] sm:$0xff]
    %v1566 = vld [vmem:[#allocation7 + $0x40] sm:$0xff]
    %v1567 = vld [vmem:[#allocation7 + $0x48] sm:$0xff]
    %v1568 = vld [vmem:[#allocation7 + $0x50] sm:$0xff]
    %v1569 = vld [vmem:[#allocation7 + $0x58] sm:$0xff]
    %v1570 = vld [vmem:[#allocation7 + $0x60] sm:$0xff]
    %v1571 = vld [vmem:[#allocation7 + $0x68] sm:$0xff]
    %v1572 = vld [vmem:[#allocation7 + $0x70] sm:$0xff]
    %v1573 = vld [vmem:[#allocation7 + $0x78] sm:$0xff]
    %v1574 = vld [vmem:[#allocation7 + $0x80] sm:$0xff]
    %v1575 = vld [vmem:[#allocation7 + $0x88] sm:$0xff]
    %v1576 = vld [vmem:[#allocation7 + $0x90] sm:$0xff]
    %v1577 = vld [vmem:[#allocation7 + $0x98] sm:$0xff]
    %v1578 = vld [vmem:[#allocation7 + $0xa0] sm:$0xff]
    %v1579 = vld [vmem:[#allocation7 + $0xa8] sm:$0xff]
    %v1580 = vld [vmem:[#allocation7 + $0xb0] sm:$0xff]
    %v1581 = vld [vmem:[#allocation7 + $0xb8] sm:$0xff]
    %v1582 = vld [vmem:[#allocation7 + $0xc0] sm:$0xff]
    %v1583 = vld [vmem:[#allocation7 + $0xc8] sm:$0xff]
    %v1584 = vld [vmem:[#allocation7 + $0xd0] sm:$0xff]
    %v1585 = vld [vmem:[#allocation7 + $0xd8] sm:$0xff]
    %v1586 = vld [vmem:[#allocation7 + $0xe0] sm:$0xff]
    %v1587 = vld [vmem:[#allocation7 + $0xe8] sm:$0xff]
    %v1588 = vld [vmem:[#allocation7 + $0xf0] sm:$0xff]
    %v1589 = vld [vmem:[#allocation7 + $0xf8] sm:$0xff]
    %v1622 = vunpack.c.l.b16 %v1558
    %v1623 = vunpack.c.h.b16 %v1558
    %v1624 = vunpack.c.l.b16 %v1559
    %v1625 = vunpack.c.h.b16 %v1559
    %v1626 = vunpack.c.l.b16 %v1560
    %v1627 = vunpack.c.h.b16 %v1560
    %v1628 = vunpack.c.l.b16 %v1561
    %v1629 = vunpack.c.h.b16 %v1561
    %v1630 = vunpack.c.l.b16 %v1562
    %v1631 = vunpack.c.h.b16 %v1562
    %v1632 = vunpack.c.l.b16 %v1563
    %v1633 = vunpack.c.h.b16 %v1563
    %v1634 = vunpack.c.l.b16 %v1564
    %v1635 = vunpack.c.h.b16 %v1564
    %v1636 = vunpack.c.l.b16 %v1565
    %v1637 = vunpack.c.h.b16 %v1565
    %v1638 = vunpack.c.l.b16 %v1566
    %v1639 = vunpack.c.h.b16 %v1566
    %v1640 = vunpack.c.l.b16 %v1567
    %v1641 = vunpack.c.h.b16 %v1567
    %v1642 = vunpack.c.l.b16 %v1568
    %v1643 = vunpack.c.h.b16 %v1568
    %v1644 = vunpack.c.l.b16 %v1569
    %v1645 = vunpack.c.h.b16 %v1569
    %v1646 = vunpack.c.l.b16 %v1570
    %v1647 = vunpack.c.h.b16 %v1570
    %v1648 = vunpack.c.l.b16 %v1571
    %v1649 = vunpack.c.h.b16 %v1571
    %v1650 = vunpack.c.l.b16 %v1572
    %v1651 = vunpack.c.h.b16 %v1572
    %v1652 = vunpack.c.l.b16 %v1573
    %v1653 = vunpack.c.h.b16 %v1573
    %v1654 = vunpack.c.l.b16 %v1574
    %v1655 = vunpack.c.h.b16 %v1574
    %v1656 = vunpack.c.l.b16 %v1575
    %v1657 = vunpack.c.h.b16 %v1575
    %v1658 = vunpack.c.l.b16 %v1576
    %v1659 = vunpack.c.h.b16 %v1576
    %v1660 = vunpack.c.l.b16 %v1577
    %v1661 = vunpack.c.h.b16 %v1577
    %v1662 = vunpack.c.l.b16 %v1578
    %v1663 = vunpack.c.h.b16 %v1578
    %v1664 = vunpack.c.l.b16 %v1579
    %v1665 = vunpack.c.h.b16 %v1579
    %v1666 = vunpack.c.l.b16 %v1580
    %v1667 = vunpack.c.h.b16 %v1580
    %v1668 = vunpack.c.l.b16 %v1581
    %v1669 = vunpack.c.h.b16 %v1581
    %v1670 = vunpack.c.l.b16 %v1582
    %v1671 = vunpack.c.h.b16 %v1582
    %v1672 = vunpack.c.l.b16 %v1583
    %v1673 = vunpack.c.h.b16 %v1583
    %v1674 = vunpack.c.l.b16 %v1584
    %v1675 = vunpack.c.h.b16 %v1584
    %v1676 = vunpack.c.l.b16 %v1585
    %v1677 = vunpack.c.h.b16 %v1585
    %v1678 = vunpack.c.l.b16 %v1586
    %v1679 = vunpack.c.h.b16 %v1586
    %v1680 = vunpack.c.l.b16 %v1587
    %v1681 = vunpack.c.h.b16 %v1587
    %v1682 = vunpack.c.l.b16 %v1588
    %v1683 = vunpack.c.h.b16 %v1588
    %v1684 = vunpack.c.l.b16 %v1589
    %v1685 = vunpack.c.h.b16 %v1589
    %v1686 = vpack.c.b16 %v1626, %v1622
    %v1687 = vpack.c.b16 %v1627, %v1623
    %v1688 = vpack.c.b16 %v1628, %v1624
    %v1689 = vpack.c.b16 %v1629, %v1625
    %v1690 = vpack.c.b16 %v1634, %v1630
    %v1691 = vpack.c.b16 %v1635, %v1631
    %v1692 = vpack.c.b16 %v1636, %v1632
    %v1693 = vpack.c.b16 %v1637, %v1633
    %v1694 = vpack.c.b16 %v1642, %v1638
    %v1695 = vpack.c.b16 %v1643, %v1639
    %v1696 = vpack.c.b16 %v1644, %v1640
    %v1697 = vpack.c.b16 %v1645, %v1641
    %v1698 = vpack.c.b16 %v1650, %v1646
    %v1699 = vpack.c.b16 %v1651, %v1647
    %v1700 = vpack.c.b16 %v1652, %v1648
    %v1701 = vpack.c.b16 %v1653, %v1649
    %v1702 = vpack.c.b16 %v1658, %v1654
    %v1703 = vpack.c.b16 %v1659, %v1655
    %v1704 = vpack.c.b16 %v1660, %v1656
    %v1705 = vpack.c.b16 %v1661, %v1657
    %v1706 = vpack.c.b16 %v1666, %v1662
    %v1707 = vpack.c.b16 %v1667, %v1663
    %v1708 = vpack.c.b16 %v1668, %v1664
    %v1709 = vpack.c.b16 %v1669, %v1665
    %v1710 = vpack.c.b16 %v1674, %v1670
    %v1711 = vpack.c.b16 %v1675, %v1671
    %v1712 = vpack.c.b16 %v1676, %v1672
    %v1713 = vpack.c.b16 %v1677, %v1673
    %v1714 = vpack.c.b16 %v1682, %v1678
    %v1715 = vpack.c.b16 %v1683, %v1679
    %v1716 = vpack.c.b16 %v1684, %v1680
    %v1717 = vpack.c.b16 %v1685, %v1681
    %1750 = vmatprep.subr.bf16.mxu0 %v1715
    %1751 = vmatpush1.bf16.msra.mxu0 %v1714
    %1752 = vmatprep.subr.bf16.mxu0 %v1711
    %1753 = vmatpush1.bf16.msra.mxu0 %v1710
    %1754 = vmatprep.subr.bf16.mxu0 %v1707
    %1755 = vmatpush1.bf16.msra.mxu0 %v1706
    %1756 = vmatprep.subr.bf16.mxu0 %v1703
    %1757 = vmatpush1.bf16.msra.mxu0 %v1702
    %1758 = vmatprep.subr.bf16.mxu0 %v1699
    %1759 = vmatpush1.bf16.msra.mxu0 %v1698
    %1760 = vmatprep.subr.bf16.mxu0 %v1695
    %1761 = vmatpush1.bf16.msra.mxu0 %v1694
    %1762 = vmatprep.subr.bf16.mxu0 %v1691
    %1763 = vmatpush1.bf16.msra.mxu0 %v1690
    %1764 = vmatprep.subr.bf16.mxu0 %v1687
    %1765 = vmatpush1.bf16.msra.mxu0 %v1686
    %1766 = vmatprep.subr.bf16.mxu0 0
    %1767 = vmatpush2.bf16.msra.mxu0 0
    %1768 = vmatprep.subr.bf16.mxu0 0
    %1769 = vmatpush2.bf16.msra.mxu0 0
    %1770 = vmatprep.subr.bf16.mxu0 0
    %1771 = vmatpush2.bf16.msra.mxu0 0
    %1772 = vmatprep.subr.bf16.mxu0 0
    %1773 = vmatpush2.bf16.msra.mxu0 0
    %1774 = vmatprep.subr.bf16.mxu0 0
    %1775 = vmatpush2.bf16.msra.mxu0 0
    %1776 = vmatprep.subr.bf16.mxu0 0
    %1777 = vmatpush2.bf16.msra.mxu0 0
    %1778 = vmatprep.subr.bf16.mxu0 0
    %1779 = vmatpush2.bf16.msra.mxu0 0
    %1780 = vmatprep.subr.bf16.mxu0 0
    %1781 = vmatpush2.bf16.msra.mxu0 0
    %1782 = vmatprep.mubr.bf16.mxu0 0
    %1783 = vmatmul.mubr.bf16.gmra.mxu0 %v1557
    %v1784 = vpop.f32.mrf.mxu0
    %v1785 = vadd.f32 0.0, %v1784
    %v1786 = vpop.f32.mrf.mxu0
    %v1787 = vadd.f32 0.0, %v1786
    %v1788 = vpop.f32.mrf.mxu0
    %v1789 = vpop.f32.mrf.mxu0
    %1790 = vdwg.mxu0
    %1791 = vmatprep.subr.bf16.mxu0 %v1717
    %1792 = vmatpush1.bf16.msra.mxu0 %v1716
    %1793 = vmatprep.subr.bf16.mxu0 %v1713
    %1794 = vmatpush1.bf16.msra.mxu0 %v1712
    %1795 = vmatprep.subr.bf16.mxu0 %v1709
    %1796 = vmatpush1.bf16.msra.mxu0 %v1708
    %1797 = vmatprep.subr.bf16.mxu0 %v1705
    %1798 = vmatpush1.bf16.msra.mxu0 %v1704
    %1799 = vmatprep.subr.bf16.mxu0 %v1701
    %1800 = vmatpush1.bf16.msra.mxu0 %v1700
    %1801 = vmatprep.subr.bf16.mxu0 %v1697
    %1802 = vmatpush1.bf16.msra.mxu0 %v1696
    %1803 = vmatprep.subr.bf16.mxu0 %v1693
    %1804 = vmatpush1.bf16.msra.mxu0 %v1692
    %1805 = vmatprep.subr.bf16.mxu0 %v1689
    %1806 = vmatpush1.bf16.msra.mxu0 %v1688
    %1807 = vmatprep.subr.bf16.mxu0 0
    %1808 = vmatpush2.bf16.msra.mxu0 0
    %1809 = vmatprep.subr.bf16.mxu0 0
    %1810 = vmatpush2.bf16.msra.mxu0 0
    %1811 = vmatprep.subr.bf16.mxu0 0
    %1812 = vmatpush2.bf16.msra.mxu0 0
    %1813 = vmatprep.subr.bf16.mxu0 0
    %1814 = vmatpush2.bf16.msra.mxu0 0
    %1815 = vmatprep.subr.bf16.mxu0 0
    %1816 = vmatpush2.bf16.msra.mxu0 0
    %1817 = vmatprep.subr.bf16.mxu0 0
    %1818 = vmatpush2.bf16.msra.mxu0 0
    %1819 = vmatprep.subr.bf16.mxu0 0
    %1820 = vmatpush2.bf16.msra.mxu0 0
    %1821 = vmatprep.subr.bf16.mxu0 0
    %1822 = vmatpush2.bf16.msra.mxu0 0
    %1823 = vmatprep.mubr.bf16.mxu0 0
    %1824 = vmatmul.mubr.bf16.gmra.mxu0 %v1557
    %v1825 = vpop.f32.mrf.mxu0
    %v1826 = vadd.f32 0.0, %v1825
    %v1827 = vpop.f32.mrf.mxu0
    %v1828 = vadd.f32 0.0, %v1827
    %v1829 = vpop.f32.mrf.mxu0
    %v1830 = vpop.f32.mrf.mxu0
    %1831 = vdwg.mxu0
    %v1832 = vadd.f32 %v1553, %v1785
    %v1833 = vadd.f32 %v1554, %v1787
    %v1834 = vadd.f32 %v1555, %v1826
    %v1835 = vadd.f32 %v1556, %v1828
    %v1836 = vxor.u32 %v1832, 2147483648
    %v1837 = vxor.u32 %v1833, 2147483648
    %v1838 = vxor.u32 %v1834, 2147483648
    %v1839 = vmul.f32 %v1836, 1.442695
    %v1840 = vpow.pop %v1839
    %v1841 = vmul.f32 %v1837, 1.442695
    %v1842 = vpow.pop %v1841
    %v1843 = vmul.f32 %v1838, 1.442695
    %v1844 = vpow.pop %v1843
    %v1845 = vadd.f32 %v1840, 1.0
    %v1846 = vadd.f32 %v1842, 1.0
    %v1847 = vadd.f32 %v1844, 1.0
    %v1848 = vrcp.pop %v1845
    %v1849 = vmul.f32 1.0, %v1848
    %v1850 = vrcp.pop %v1846
    %v1851 = vmul.f32 1.0, %v1850
    %v1852 = vrcp.pop %v1847
    %v1853 = vmul.f32 1.0, %v1852
    %v1854 = vtanh.pop %v1835
    %v1855 = vmul.f32 %v1851, %v1545
    %v1856 = vmul.f32 %v1849, %v1854
    %v1857 = vadd.f32 %v1855, %v1856
    %v1858 = vtanh.pop %v1857
    %v1859 = vmul.f32 %v1853, %v1858
    %s1860 = scalar_lea.vmem %s4, 32
    %1861 = vst [vmem:[%s1860] sm:$0xff] %v1859
    %s1862 = smul.u32 5, 4
    %s1863 = smul.addr %s1862, 8
    %s1864 = scalar_lea.vmem [#allocation4], %s1863
    %v1865 = vld [vmem:[%s1864] sm:$0xff]
    %v1866 = vld [vmem:[%s1864 + $0x8] sm:$0xff]
    %v1867 = vld [vmem:[%s1864 + $0x10] sm:$0xff]
    %v1868 = vld [vmem:[%s1864 + $0x18] sm:$0xff]
    %v1869 = vpack.c.bf16 %v1859, %v1859
    %v1870 = vld [vmem:[#allocation7] sm:$0xff]
    %v1871 = vld [vmem:[#allocation7 + $0x8] sm:$0xff]
    %v1872 = vld [vmem:[#allocation7 + $0x10] sm:$0xff]
    %v1873 = vld [vmem:[#allocation7 + $0x18] sm:$0xff]
    %v1874 = vld [vmem:[#allocation7 + $0x20] sm:$0xff]
    %v1875 = vld [vmem:[#allocation7 + $0x28] sm:$0xff]
    %v1876 = vld [vmem:[#allocation7 + $0x30] sm:$0xff]
    %v1877 = vld [vmem:[#allocation7 + $0x38] sm:$0xff]
    %v1878 = vld [vmem:[#allocation7 + $0x40] sm:$0xff]
    %v1879 = vld [vmem:[#allocation7 + $0x48] sm:$0xff]
    %v1880 = vld [vmem:[#allocation7 + $0x50] sm:$0xff]
    %v1881 = vld [vmem:[#allocation7 + $0x58] sm:$0xff]
    %v1882 = vld [vmem:[#allocation7 + $0x60] sm:$0xff]
    %v1883 = vld [vmem:[#allocation7 + $0x68] sm:$0xff]
    %v1884 = vld [vmem:[#allocation7 + $0x70] sm:$0xff]
    %v1885 = vld [vmem:[#allocation7 + $0x78] sm:$0xff]
    %v1886 = vld [vmem:[#allocation7 + $0x80] sm:$0xff]
    %v1887 = vld [vmem:[#allocation7 + $0x88] sm:$0xff]
    %v1888 = vld [vmem:[#allocation7 + $0x90] sm:$0xff]
    %v1889 = vld [vmem:[#allocation7 + $0x98] sm:$0xff]
    %v1890 = vld [vmem:[#allocation7 + $0xa0] sm:$0xff]
    %v1891 = vld [vmem:[#allocation7 + $0xa8] sm:$0xff]
    %v1892 = vld [vmem:[#allocation7 + $0xb0] sm:$0xff]
    %v1893 = vld [vmem:[#allocation7 + $0xb8] sm:$0xff]
    %v1894 = vld [vmem:[#allocation7 + $0xc0] sm:$0xff]
    %v1895 = vld [vmem:[#allocation7 + $0xc8] sm:$0xff]
    %v1896 = vld [vmem:[#allocation7 + $0xd0] sm:$0xff]
    %v1897 = vld [vmem:[#allocation7 + $0xd8] sm:$0xff]
    %v1898 = vld [vmem:[#allocation7 + $0xe0] sm:$0xff]
    %v1899 = vld [vmem:[#allocation7 + $0xe8] sm:$0xff]
    %v1900 = vld [vmem:[#allocation7 + $0xf0] sm:$0xff]
    %v1901 = vld [vmem:[#allocation7 + $0xf8] sm:$0xff]
    %v1934 = vunpack.c.l.b16 %v1870
    %v1935 = vunpack.c.h.b16 %v1870
    %v1936 = vunpack.c.l.b16 %v1871
    %v1937 = vunpack.c.h.b16 %v1871
    %v1938 = vunpack.c.l.b16 %v1872
    %v1939 = vunpack.c.h.b16 %v1872
    %v1940 = vunpack.c.l.b16 %v1873
    %v1941 = vunpack.c.h.b16 %v1873
    %v1942 = vunpack.c.l.b16 %v1874
    %v1943 = vunpack.c.h.b16 %v1874
    %v1944 = vunpack.c.l.b16 %v1875
    %v1945 = vunpack.c.h.b16 %v1875
    %v1946 = vunpack.c.l.b16 %v1876
    %v1947 = vunpack.c.h.b16 %v1876
    %v1948 = vunpack.c.l.b16 %v1877
    %v1949 = vunpack.c.h.b16 %v1877
    %v1950 = vunpack.c.l.b16 %v1878
    %v1951 = vunpack.c.h.b16 %v1878
    %v1952 = vunpack.c.l.b16 %v1879
    %v1953 = vunpack.c.h.b16 %v1879
    %v1954 = vunpack.c.l.b16 %v1880
    %v1955 = vunpack.c.h.b16 %v1880
    %v1956 = vunpack.c.l.b16 %v1881
    %v1957 = vunpack.c.h.b16 %v1881
    %v1958 = vunpack.c.l.b16 %v1882
    %v1959 = vunpack.c.h.b16 %v1882
    %v1960 = vunpack.c.l.b16 %v1883
    %v1961 = vunpack.c.h.b16 %v1883
    %v1962 = vunpack.c.l.b16 %v1884
    %v1963 = vunpack.c.h.b16 %v1884
    %v1964 = vunpack.c.l.b16 %v1885
    %v1965 = vunpack.c.h.b16 %v1885
    %v1966 = vunpack.c.l.b16 %v1886
    %v1967 = vunpack.c.h.b16 %v1886
    %v1968 = vunpack.c.l.b16 %v1887
    %v1969 = vunpack.c.h.b16 %v1887
    %v1970 = vunpack.c.l.b16 %v1888
    %v1971 = vunpack.c.h.b16 %v1888
    %v1972 = vunpack.c.l.b16 %v1889
    %v1973 = vunpack.c.h.b16 %v1889
    %v1974 = vunpack.c.l.b16 %v1890
    %v1975 = vunpack.c.h.b16 %v1890
    %v1976 = vunpack.c.l.b16 %v1891
    %v1977 = vunpack.c.h.b16 %v1891
    %v1978 = vunpack.c.l.b16 %v1892
    %v1979 = vunpack.c.h.b16 %v1892
    %v1980 = vunpack.c.l.b16 %v1893
    %v1981 = vunpack.c.h.b16 %v1893
    %v1982 = vunpack.c.l.b16 %v1894
    %v1983 = vunpack.c.h.b16 %v1894
    %v1984 = vunpack.c.l.b16 %v1895
    %v1985 = vunpack.c.h.b16 %v1895
    %v1986 = vunpack.c.l.b16 %v1896
    %v1987 = vunpack.c.h.b16 %v1896
    %v1988 = vunpack.c.l.b16 %v1897
    %v1989 = vunpack.c.h.b16 %v1897
    %v1990 = vunpack.c.l.b16 %v1898
    %v1991 = vunpack.c.h.b16 %v1898
    %v1992 = vunpack.c.l.b16 %v1899
    %v1993 = vunpack.c.h.b16 %v1899
    %v1994 = vunpack.c.l.b16 %v1900
    %v1995 = vunpack.c.h.b16 %v1900
    %v1996 = vunpack.c.l.b16 %v1901
    %v1997 = vunpack.c.h.b16 %v1901
    %v1998 = vpack.c.b16 %v1938, %v1934
    %v1999 = vpack.c.b16 %v1939, %v1935
    %v2000 = vpack.c.b16 %v1940, %v1936
    %v2001 = vpack.c.b16 %v1941, %v1937
    %v2002 = vpack.c.b16 %v1946, %v1942
    %v2003 = vpack.c.b16 %v1947, %v1943
    %v2004 = vpack.c.b16 %v1948, %v1944
    %v2005 = vpack.c.b16 %v1949, %v1945
    %v2006 = vpack.c.b16 %v1954, %v1950
    %v2007 = vpack.c.b16 %v1955, %v1951
    %v2008 = vpack.c.b16 %v1956, %v1952
    %v2009 = vpack.c.b16 %v1957, %v1953
    %v2010 = vpack.c.b16 %v1962, %v1958
    %v2011 = vpack.c.b16 %v1963, %v1959
    %v2012 = vpack.c.b16 %v1964, %v1960
    %v2013 = vpack.c.b16 %v1965, %v1961
    %v2014 = vpack.c.b16 %v1970, %v1966
    %v2015 = vpack.c.b16 %v1971, %v1967
    %v2016 = vpack.c.b16 %v1972, %v1968
    %v2017 = vpack.c.b16 %v1973, %v1969
    %v2018 = vpack.c.b16 %v1978, %v1974
    %v2019 = vpack.c.b16 %v1979, %v1975
    %v2020 = vpack.c.b16 %v1980, %v1976
    %v2021 = vpack.c.b16 %v1981, %v1977
    %v2022 = vpack.c.b16 %v1986, %v1982
    %v2023 = vpack.c.b16 %v1987, %v1983
    %v2024 = vpack.c.b16 %v1988, %v1984
    %v2025 = vpack.c.b16 %v1989, %v1985
    %v2026 = vpack.c.b16 %v1994, %v1990
    %v2027 = vpack.c.b16 %v1995, %v1991
    %v2028 = vpack.c.b16 %v1996, %v1992
    %v2029 = vpack.c.b16 %v1997, %v1993
    %2062 = vmatprep.subr.bf16.mxu0 %v2027
    %2063 = vmatpush1.bf16.msra.mxu0 %v2026
    %2064 = vmatprep.subr.bf16.mxu0 %v2023
    %2065 = vmatpush1.bf16.msra.mxu0 %v2022
    %2066 = vmatprep.subr.bf16.mxu0 %v2019
    %2067 = vmatpush1.bf16.msra.mxu0 %v2018
    %2068 = vmatprep.subr.bf16.mxu0 %v2015
    %2069 = vmatpush1.bf16.msra.mxu0 %v2014
    %2070 = vmatprep.subr.bf16.mxu0 %v2011
    %2071 = vmatpush1.bf16.msra.mxu0 %v2010
    %2072 = vmatprep.subr.bf16.mxu0 %v2007
    %2073 = vmatpush1.bf16.msra.mxu0 %v2006
    %2074 = vmatprep.subr.bf16.mxu0 %v2003
    %2075 = vmatpush1.bf16.msra.mxu0 %v2002
    %2076 = vmatprep.subr.bf16.mxu0 %v1999
    %2077 = vmatpush1.bf16.msra.mxu0 %v1998
    %2078 = vmatprep.subr.bf16.mxu0 0
    %2079 = vmatpush2.bf16.msra.mxu0 0
    %2080 = vmatprep.subr.bf16.mxu0 0
    %2081 = vmatpush2.bf16.msra.mxu0 0
    %2082 = vmatprep.subr.bf16.mxu0 0
    %2083 = vmatpush2.bf16.msra.mxu0 0
    %2084 = vmatprep.subr.bf16.mxu0 0
    %2085 = vmatpush2.bf16.msra.mxu0 0
    %2086 = vmatprep.subr.bf16.mxu0 0
    %2087 = vmatpush2.bf16.msra.mxu0 0
    %2088 = vmatprep.subr.bf16.mxu0 0
    %2089 = vmatpush2.bf16.msra.mxu0 0
    %2090 = vmatprep.subr.bf16.mxu0 0
    %2091 = vmatpush2.bf16.msra.mxu0 0
    %2092 = vmatprep.subr.bf16.mxu0 0
    %2093 = vmatpush2.bf16.msra.mxu0 0
    %2094 = vmatprep.mubr.bf16.mxu0 0
    %2095 = vmatmul.mubr.bf16.gmra.mxu0 %v1869
    %v2096 = vpop.f32.mrf.mxu0
    %v2097 = vadd.f32 0.0, %v2096
    %v2098 = vpop.f32.mrf.mxu0
    %v2099 = vadd.f32 0.0, %v2098
    %v2100 = vpop.f32.mrf.mxu0
    %v2101 = vpop.f32.mrf.mxu0
    %2102 = vdwg.mxu0
    %2103 = vmatprep.subr.bf16.mxu0 %v2029
    %2104 = vmatpush1.bf16.msra.mxu0 %v2028
    %2105 = vmatprep.subr.bf16.mxu0 %v2025
    %2106 = vmatpush1.bf16.msra.mxu0 %v2024
    %2107 = vmatprep.subr.bf16.mxu0 %v2021
    %2108 = vmatpush1.bf16.msra.mxu0 %v2020
    %2109 = vmatprep.subr.bf16.mxu0 %v2017
    %2110 = vmatpush1.bf16.msra.mxu0 %v2016
    %2111 = vmatprep.subr.bf16.mxu0 %v2013
    %2112 = vmatpush1.bf16.msra.mxu0 %v2012
    %2113 = vmatprep.subr.bf16.mxu0 %v2009
    %2114 = vmatpush1.bf16.msra.mxu0 %v2008
    %2115 = vmatprep.subr.bf16.mxu0 %v2005
    %2116 = vmatpush1.bf16.msra.mxu0 %v2004
    %2117 = vmatprep.subr.bf16.mxu0 %v2001
    %2118 = vmatpush1.bf16.msra.mxu0 %v2000
    %2119 = vmatprep.subr.bf16.mxu0 0
    %2120 = vmatpush2.bf16.msra.mxu0 0
    %2121 = vmatprep.subr.bf16.mxu0 0
    %2122 = vmatpush2.bf16.msra.mxu0 0
    %2123 = vmatprep.subr.bf16.mxu0 0
    %2124 = vmatpush2.bf16.msra.mxu0 0
    %2125 = vmatprep.subr.bf16.mxu0 0
    %2126 = vmatpush2.bf16.msra.mxu0 0
    %2127 = vmatprep.subr.bf16.mxu0 0
    %2128 = vmatpush2.bf16.msra.mxu0 0
    %2129 = vmatprep.subr.bf16.mxu0 0
    %2130 = vmatpush2.bf16.msra.mxu0 0
    %2131 = vmatprep.subr.bf16.mxu0 0
    %2132 = vmatpush2.bf16.msra.mxu0 0
    %2133 = vmatprep.subr.bf16.mxu0 0
    %2134 = vmatpush2.bf16.msra.mxu0 0
    %2135 = vmatprep.mubr.bf16.mxu0 0
    %2136 = vmatmul.mubr.bf16.gmra.mxu0 %v1869
    %v2137 = vpop.f32.mrf.mxu0
    %v2138 = vadd.f32 0.0, %v2137
    %v2139 = vpop.f32.mrf.mxu0
    %v2140 = vadd.f32 0.0, %v2139
    %v2141 = vpop.f32.mrf.mxu0
    %v2142 = vpop.f32.mrf.mxu0
    %2143 = vdwg.mxu0
    %v2144 = vadd.f32 %v1865, %v2097
    %v2145 = vadd.f32 %v1866, %v2099
    %v2146 = vadd.f32 %v1867, %v2138
    %v2147 = vadd.f32 %v1868, %v2140
    %v2148 = vxor.u32 %v2144, 2147483648
    %v2149 = vxor.u32 %v2145, 2147483648
    %v2150 = vxor.u32 %v2146, 2147483648
    %v2151 = vmul.f32 %v2148, 1.442695
    %v2152 = vpow.pop %v2151
    %v2153 = vmul.f32 %v2149, 1.442695
    %v2154 = vpow.pop %v2153
    %v2155 = vmul.f32 %v2150, 1.442695
    %v2156 = vpow.pop %v2155
    %v2157 = vadd.f32 %v2152, 1.0
    %v2158 = vadd.f32 %v2154, 1.0
    %v2159 = vadd.f32 %v2156, 1.0
    %v2160 = vrcp.pop %v2157
    %v2161 = vmul.f32 1.0, %v2160
    %v2162 = vrcp.pop %v2158
    %v2163 = vmul.f32 1.0, %v2162
    %v2164 = vrcp.pop %v2159
    %v2165 = vmul.f32 1.0, %v2164
    %v2166 = vtanh.pop %v2147
    %v2167 = vmul.f32 %v2163, %v1857
    %v2168 = vmul.f32 %v2161, %v2166
    %v2169 = vadd.f32 %v2167, %v2168
    %v2170 = vtanh.pop %v2169
    %v2171 = vmul.f32 %v2165, %v2170
    %s2172 = scalar_lea.vmem %s4, 40
    %2173 = vst [vmem:[%s2172] sm:$0xff] %v2171
    %s2174 = smul.u32 6, 4
    %s2175 = smul.addr %s2174, 8
    %s2176 = scalar_lea.vmem [#allocation4], %s2175
    %v2177 = vld [vmem:[%s2176] sm:$0xff]
    %v2178 = vld [vmem:[%s2176 + $0x8] sm:$0xff]
    %v2179 = vld [vmem:[%s2176 + $0x10] sm:$0xff]
    %v2180 = vld [vmem:[%s2176 + $0x18] sm:$0xff]
    %v2181 = vpack.c.bf16 %v2171, %v2171
    %v2182 = vld [vmem:[#allocation7] sm:$0xff]
    %v2183 = vld [vmem:[#allocation7 + $0x8] sm:$0xff]
    %v2184 = vld [vmem:[#allocation7 + $0x10] sm:$0xff]
    %v2185 = vld [vmem:[#allocation7 + $0x18] sm:$0xff]
    %v2186 = vld [vmem:[#allocation7 + $0x20] sm:$0xff]
    %v2187 = vld [vmem:[#allocation7 + $0x28] sm:$0xff]
    %v2188 = vld [vmem:[#allocation7 + $0x30] sm:$0xff]
    %v2189 = vld [vmem:[#allocation7 + $0x38] sm:$0xff]
    %v2190 = vld [vmem:[#allocation7 + $0x40] sm:$0xff]
    %v2191 = vld [vmem:[#allocation7 + $0x48] sm:$0xff]
    %v2192 = vld [vmem:[#allocation7 + $0x50] sm:$0xff]
    %v2193 = vld [vmem:[#allocation7 + $0x58] sm:$0xff]
    %v2194 = vld [vmem:[#allocation7 + $0x60] sm:$0xff]
    %v2195 = vld [vmem:[#allocation7 + $0x68] sm:$0xff]
    %v2196 = vld [vmem:[#allocation7 + $0x70] sm:$0xff]
    %v2197 = vld [vmem:[#allocation7 + $0x78] sm:$0xff]
    %v2198 = vld [vmem:[#allocation7 + $0x80] sm:$0xff]
    %v2199 = vld [vmem:[#allocation7 + $0x88] sm:$0xff]
    %v2200 = vld [vmem:[#allocation7 + $0x90] sm:$0xff]
    %v2201 = vld [vmem:[#allocation7 + $0x98] sm:$0xff]
    %v2202 = vld [vmem:[#allocation7 + $0xa0] sm:$0xff]
    %v2203 = vld [vmem:[#allocation7 + $0xa8] sm:$0xff]
    %v2204 = vld [vmem:[#allocation7 + $0xb0] sm:$0xff]
    %v2205 = vld [vmem:[#allocation7 + $0xb8] sm:$0xff]
    %v2206 = vld [vmem:[#allocation7 + $0xc0] sm:$0xff]
    %v2207 = vld [vmem:[#allocation7 + $0xc8] sm:$0xff]
    %v2208 = vld [vmem:[#allocation7 + $0xd0] sm:$0xff]
    %v2209 = vld [vmem:[#allocation7 + $0xd8] sm:$0xff]
    %v2210 = vld [vmem:[#allocation7 + $0xe0] sm:$0xff]
    %v2211 = vld [vmem:[#allocation7 + $0xe8] sm:$0xff]
    %v2212 = vld [vmem:[#allocation7 + $0xf0] sm:$0xff]
    %v2213 = vld [vmem:[#allocation7 + $0xf8] sm:$0xff]
    %v2246 = vunpack.c.l.b16 %v2182
    %v2247 = vunpack.c.h.b16 %v2182
    %v2248 = vunpack.c.l.b16 %v2183
    %v2249 = vunpack.c.h.b16 %v2183
    %v2250 = vunpack.c.l.b16 %v2184
    %v2251 = vunpack.c.h.b16 %v2184
    %v2252 = vunpack.c.l.b16 %v2185
    %v2253 = vunpack.c.h.b16 %v2185
    %v2254 = vunpack.c.l.b16 %v2186
    %v2255 = vunpack.c.h.b16 %v2186
    %v2256 = vunpack.c.l.b16 %v2187
    %v2257 = vunpack.c.h.b16 %v2187
    %v2258 = vunpack.c.l.b16 %v2188
    %v2259 = vunpack.c.h.b16 %v2188
    %v2260 = vunpack.c.l.b16 %v2189
    %v2261 = vunpack.c.h.b16 %v2189
    %v2262 = vunpack.c.l.b16 %v2190
    %v2263 = vunpack.c.h.b16 %v2190
    %v2264 = vunpack.c.l.b16 %v2191
    %v2265 = vunpack.c.h.b16 %v2191
    %v2266 = vunpack.c.l.b16 %v2192
    %v2267 = vunpack.c.h.b16 %v2192
    %v2268 = vunpack.c.l.b16 %v2193
    %v2269 = vunpack.c.h.b16 %v2193
    %v2270 = vunpack.c.l.b16 %v2194
    %v2271 = vunpack.c.h.b16 %v2194
    %v2272 = vunpack.c.l.b16 %v2195
    %v2273 = vunpack.c.h.b16 %v2195
    %v2274 = vunpack.c.l.b16 %v2196
    %v2275 = vunpack.c.h.b16 %v2196
    %v2276 = vunpack.c.l.b16 %v2197
    %v2277 = vunpack.c.h.b16 %v2197
    %v2278 = vunpack.c.l.b16 %v2198
    %v2279 = vunpack.c.h.b16 %v2198
    %v2280 = vunpack.c.l.b16 %v2199
    %v2281 = vunpack.c.h.b16 %v2199
    %v2282 = vunpack.c.l.b16 %v2200
    %v2283 = vunpack.c.h.b16 %v2200
    %v2284 = vunpack.c.l.b16 %v2201
    %v2285 = vunpack.c.h.b16 %v2201
    %v2286 = vunpack.c.l.b16 %v2202
    %v2287 = vunpack.c.h.b16 %v2202
    %v2288 = vunpack.c.l.b16 %v2203
    %v2289 = vunpack.c.h.b16 %v2203
    %v2290 = vunpack.c.l.b16 %v2204
    %v2291 = vunpack.c.h.b16 %v2204
    %v2292 = vunpack.c.l.b16 %v2205
    %v2293 = vunpack.c.h.b16 %v2205
    %v2294 = vunpack.c.l.b16 %v2206
    %v2295 = vunpack.c.h.b16 %v2206
    %v2296 = vunpack.c.l.b16 %v2207
    %v2297 = vunpack.c.h.b16 %v2207
    %v2298 = vunpack.c.l.b16 %v2208
    %v2299 = vunpack.c.h.b16 %v2208
    %v2300 = vunpack.c.l.b16 %v2209
    %v2301 = vunpack.c.h.b16 %v2209
    %v2302 = vunpack.c.l.b16 %v2210
    %v2303 = vunpack.c.h.b16 %v2210
    %v2304 = vunpack.c.l.b16 %v2211
    %v2305 = vunpack.c.h.b16 %v2211
    %v2306 = vunpack.c.l.b16 %v2212
    %v2307 = vunpack.c.h.b16 %v2212
    %v2308 = vunpack.c.l.b16 %v2213
    %v2309 = vunpack.c.h.b16 %v2213
    %v2310 = vpack.c.b16 %v2250, %v2246
    %v2311 = vpack.c.b16 %v2251, %v2247
    %v2312 = vpack.c.b16 %v2252, %v2248
    %v2313 = vpack.c.b16 %v2253, %v2249
    %v2314 = vpack.c.b16 %v2258, %v2254
    %v2315 = vpack.c.b16 %v2259, %v2255
    %v2316 = vpack.c.b16 %v2260, %v2256
    %v2317 = vpack.c.b16 %v2261, %v2257
    %v2318 = vpack.c.b16 %v2266, %v2262
    %v2319 = vpack.c.b16 %v2267, %v2263
    %v2320 = vpack.c.b16 %v2268, %v2264
    %v2321 = vpack.c.b16 %v2269, %v2265
    %v2322 = vpack.c.b16 %v2274, %v2270
    %v2323 = vpack.c.b16 %v2275, %v2271
    %v2324 = vpack.c.b16 %v2276, %v2272
    %v2325 = vpack.c.b16 %v2277, %v2273
    %v2326 = vpack.c.b16 %v2282, %v2278
    %v2327 = vpack.c.b16 %v2283, %v2279
    %v2328 = vpack.c.b16 %v2284, %v2280
    %v2329 = vpack.c.b16 %v2285, %v2281
    %v2330 = vpack.c.b16 %v2290, %v2286
    %v2331 = vpack.c.b16 %v2291, %v2287
    %v2332 = vpack.c.b16 %v2292, %v2288
    %v2333 = vpack.c.b16 %v2293, %v2289
    %v2334 = vpack.c.b16 %v2298, %v2294
    %v2335 = vpack.c.b16 %v2299, %v2295
    %v2336 = vpack.c.b16 %v2300, %v2296
    %v2337 = vpack.c.b16 %v2301, %v2297
    %v2338 = vpack.c.b16 %v2306, %v2302
    %v2339 = vpack.c.b16 %v2307, %v2303
    %v2340 = vpack.c.b16 %v2308, %v2304
    %v2341 = vpack.c.b16 %v2309, %v2305
    %2374 = vmatprep.subr.bf16.mxu0 %v2339
    %2375 = vmatpush1.bf16.msra.mxu0 %v2338
    %2376 = vmatprep.subr.bf16.mxu0 %v2335
    %2377 = vmatpush1.bf16.msra.mxu0 %v2334
    %2378 = vmatprep.subr.bf16.mxu0 %v2331
    %2379 = vmatpush1.bf16.msra.mxu0 %v2330
    %2380 = vmatprep.subr.bf16.mxu0 %v2327
    %2381 = vmatpush1.bf16.msra.mxu0 %v2326
    %2382 = vmatprep.subr.bf16.mxu0 %v2323
    %2383 = vmatpush1.bf16.msra.mxu0 %v2322
    %2384 = vmatprep.subr.bf16.mxu0 %v2319
    %2385 = vmatpush1.bf16.msra.mxu0 %v2318
    %2386 = vmatprep.subr.bf16.mxu0 %v2315
    %2387 = vmatpush1.bf16.msra.mxu0 %v2314
    %2388 = vmatprep.subr.bf16.mxu0 %v2311
    %2389 = vmatpush1.bf16.msra.mxu0 %v2310
    %2390 = vmatprep.subr.bf16.mxu0 0
    %2391 = vmatpush2.bf16.msra.mxu0 0
    %2392 = vmatprep.subr.bf16.mxu0 0
    %2393 = vmatpush2.bf16.msra.mxu0 0
    %2394 = vmatprep.subr.bf16.mxu0 0
    %2395 = vmatpush2.bf16.msra.mxu0 0
    %2396 = vmatprep.subr.bf16.mxu0 0
    %2397 = vmatpush2.bf16.msra.mxu0 0
    %2398 = vmatprep.subr.bf16.mxu0 0
    %2399 = vmatpush2.bf16.msra.mxu0 0
    %2400 = vmatprep.subr.bf16.mxu0 0
    %2401 = vmatpush2.bf16.msra.mxu0 0
    %2402 = vmatprep.subr.bf16.mxu0 0
    %2403 = vmatpush2.bf16.msra.mxu0 0
    %2404 = vmatprep.subr.bf16.mxu0 0
    %2405 = vmatpush2.bf16.msra.mxu0 0
    %2406 = vmatprep.mubr.bf16.mxu0 0
    %2407 = vmatmul.mubr.bf16.gmra.mxu0 %v2181
    %v2408 = vpop.f32.mrf.mxu0
    %v2409 = vadd.f32 0.0, %v2408
    %v2410 = vpop.f32.mrf.mxu0
    %v2411 = vadd.f32 0.0, %v2410
    %v2412 = vpop.f32.mrf.mxu0
    %v2413 = vpop.f32.mrf.mxu0
    %2414 = vdwg.mxu0
    %2415 = vmatprep.subr.bf16.mxu0 %v2341
    %2416 = vmatpush1.bf16.msra.mxu0 %v2340
    %2417 = vmatprep.subr.bf16.mxu0 %v2337
    %2418 = vmatpush1.bf16.msra.mxu0 %v2336
    %2419 = vmatprep.subr.bf16.mxu0 %v2333
    %2420 = vmatpush1.bf16.msra.mxu0 %v2332
    %2421 = vmatprep.subr.bf16.mxu0 %v2329
    %2422 = vmatpush1.bf16.msra.mxu0 %v2328
    %2423 = vmatprep.subr.bf16.mxu0 %v2325
    %2424 = vmatpush1.bf16.msra.mxu0 %v2324
    %2425 = vmatprep.subr.bf16.mxu0 %v2321
    %2426 = vmatpush1.bf16.msra.mxu0 %v2320
    %2427 = vmatprep.subr.bf16.mxu0 %v2317
    %2428 = vmatpush1.bf16.msra.mxu0 %v2316
    %2429 = vmatprep.subr.bf16.mxu0 %v2313
    %2430 = vmatpush1.bf16.msra.mxu0 %v2312
    %2431 = vmatprep.subr.bf16.mxu0 0
    %2432 = vmatpush2.bf16.msra.mxu0 0
    %2433 = vmatprep.subr.bf16.mxu0 0
    %2434 = vmatpush2.bf16.msra.mxu0 0
    %2435 = vmatprep.subr.bf16.mxu0 0
    %2436 = vmatpush2.bf16.msra.mxu0 0
    %2437 = vmatprep.subr.bf16.mxu0 0
    %2438 = vmatpush2.bf16.msra.mxu0 0
    %2439 = vmatprep.subr.bf16.mxu0 0
    %2440 = vmatpush2.bf16.msra.mxu0 0
    %2441 = vmatprep.subr.bf16.mxu0 0
    %2442 = vmatpush2.bf16.msra.mxu0 0
    %2443 = vmatprep.subr.bf16.mxu0 0
    %2444 = vmatpush2.bf16.msra.mxu0 0
    %2445 = vmatprep.subr.bf16.mxu0 0
    %2446 = vmatpush2.bf16.msra.mxu0 0
    %2447 = vmatprep.mubr.bf16.mxu0 0
    %2448 = vmatmul.mubr.bf16.gmra.mxu0 %v2181
    %v2449 = vpop.f32.mrf.mxu0
    %v2450 = vadd.f32 0.0, %v2449
    %v2451 = vpop.f32.mrf.mxu0
    %v2452 = vadd.f32 0.0, %v2451
    %v2453 = vpop.f32.mrf.mxu0
    %v2454 = vpop.f32.mrf.mxu0
    %2455 = vdwg.mxu0
    %v2456 = vadd.f32 %v2177, %v2409
    %v2457 = vadd.f32 %v2178, %v2411
    %v2458 = vadd.f32 %v2179, %v2450
    %v2459 = vadd.f32 %v2180, %v2452
    %v2460 = vxor.u32 %v2456, 2147483648
    %v2461 = vxor.u32 %v2457, 2147483648
    %v2462 = vxor.u32 %v2458, 2147483648
    %v2463 = vmul.f32 %v2460, 1.442695
    %v2464 = vpow.pop %v2463
    %v2465 = vmul.f32 %v2461, 1.442695
    %v2466 = vpow.pop %v2465
    %v2467 = vmul.f32 %v2462, 1.442695
    %v2468 = vpow.pop %v2467
    %v2469 = vadd.f32 %v2464, 1.0
    %v2470 = vadd.f32 %v2466, 1.0
    %v2471 = vadd.f32 %v2468, 1.0
    %v2472 = vrcp.pop %v2469
    %v2473 = vmul.f32 1.0, %v2472
    %v2474 = vrcp.pop %v2470
    %v2475 = vmul.f32 1.0, %v2474
    %v2476 = vrcp.pop %v2471
    %v2477 = vmul.f32 1.0, %v2476
    %v2478 = vtanh.pop %v2459
    %v2479 = vmul.f32 %v2475, %v2169
    %v2480 = vmul.f32 %v2473, %v2478
    %v2481 = vadd.f32 %v2479, %v2480
    %v2482 = vtanh.pop %v2481
    %v2483 = vmul.f32 %v2477, %v2482
    %s2484 = scalar_lea.vmem %s4, 48
    %2485 = vst [vmem:[%s2484] sm:$0xff] %v2483
    %s2486 = smul.u32 7, 4
    %s2487 = smul.addr %s2486, 8
    %s2488 = scalar_lea.vmem [#allocation4], %s2487
    %v2489 = vld [vmem:[%s2488] sm:$0xff]
    %v2490 = vld [vmem:[%s2488 + $0x8] sm:$0xff]
    %v2491 = vld [vmem:[%s2488 + $0x10] sm:$0xff]
    %v2492 = vld [vmem:[%s2488 + $0x18] sm:$0xff]
    %v2493 = vpack.c.bf16 %v2483, %v2483
    %v2494 = vld [vmem:[#allocation7] sm:$0xff]
    %v2495 = vld [vmem:[#allocation7 + $0x8] sm:$0xff]
    %v2496 = vld [vmem:[#allocation7 + $0x10] sm:$0xff]
    %v2497 = vld [vmem:[#allocation7 + $0x18] sm:$0xff]
    %v2498 = vld [vmem:[#allocation7 + $0x20] sm:$0xff]
    %v2499 = vld [vmem:[#allocation7 + $0x28] sm:$0xff]
    %v2500 = vld [vmem:[#allocation7 + $0x30] sm:$0xff]
    %v2501 = vld [vmem:[#allocation7 + $0x38] sm:$0xff]
    %v2502 = vld [vmem:[#allocation7 + $0x40] sm:$0xff]
    %v2503 = vld [vmem:[#allocation7 + $0x48] sm:$0xff]
    %v2504 = vld [vmem:[#allocation7 + $0x50] sm:$0xff]
    %v2505 = vld [vmem:[#allocation7 + $0x58] sm:$0xff]
    %v2506 = vld [vmem:[#allocation7 + $0x60] sm:$0xff]
    %v2507 = vld [vmem:[#allocation7 + $0x68] sm:$0xff]
    %v2508 = vld [vmem:[#allocation7 + $0x70] sm:$0xff]
    %v2509 = vld [vmem:[#allocation7 + $0x78] sm:$0xff]
    %v2510 = vld [vmem:[#allocation7 + $0x80] sm:$0xff]
    %v2511 = vld [vmem:[#allocation7 + $0x88] sm:$0xff]
    %v2512 = vld [vmem:[#allocation7 + $0x90] sm:$0xff]
    %v2513 = vld [vmem:[#allocation7 + $0x98] sm:$0xff]
    %v2514 = vld [vmem:[#allocation7 + $0xa0] sm:$0xff]
    %v2515 = vld [vmem:[#allocation7 + $0xa8] sm:$0xff]
    %v2516 = vld [vmem:[#allocation7 + $0xb0] sm:$0xff]
    %v2517 = vld [vmem:[#allocation7 + $0xb8] sm:$0xff]
    %v2518 = vld [vmem:[#allocation7 + $0xc0] sm:$0xff]
    %v2519 = vld [vmem:[#allocation7 + $0xc8] sm:$0xff]
    %v2520 = vld [vmem:[#allocation7 + $0xd0] sm:$0xff]
    %v2521 = vld [vmem:[#allocation7 + $0xd8] sm:$0xff]
    %v2522 = vld [vmem:[#allocation7 + $0xe0] sm:$0xff]
    %v2523 = vld [vmem:[#allocation7 + $0xe8] sm:$0xff]
    %v2524 = vld [vmem:[#allocation7 + $0xf0] sm:$0xff]
    %v2525 = vld [vmem:[#allocation7 + $0xf8] sm:$0xff]
    %v2558 = vunpack.c.l.b16 %v2494
    %v2559 = vunpack.c.h.b16 %v2494
    %v2560 = vunpack.c.l.b16 %v2495
    %v2561 = vunpack.c.h.b16 %v2495
    %v2562 = vunpack.c.l.b16 %v2496
    %v2563 = vunpack.c.h.b16 %v2496
    %v2564 = vunpack.c.l.b16 %v2497
    %v2565 = vunpack.c.h.b16 %v2497
    %v2566 = vunpack.c.l.b16 %v2498
    %v2567 = vunpack.c.h.b16 %v2498
    %v2568 = vunpack.c.l.b16 %v2499
    %v2569 = vunpack.c.h.b16 %v2499
    %v2570 = vunpack.c.l.b16 %v2500
    %v2571 = vunpack.c.h.b16 %v2500
    %v2572 = vunpack.c.l.b16 %v2501
    %v2573 = vunpack.c.h.b16 %v2501
    %v2574 = vunpack.c.l.b16 %v2502
    %v2575 = vunpack.c.h.b16 %v2502
    %v2576 = vunpack.c.l.b16 %v2503
    %v2577 = vunpack.c.h.b16 %v2503
    %v2578 = vunpack.c.l.b16 %v2504
    %v2579 = vunpack.c.h.b16 %v2504
    %v2580 = vunpack.c.l.b16 %v2505
    %v2581 = vunpack.c.h.b16 %v2505
    %v2582 = vunpack.c.l.b16 %v2506
    %v2583 = vunpack.c.h.b16 %v2506
    %v2584 = vunpack.c.l.b16 %v2507
    %v2585 = vunpack.c.h.b16 %v2507
    %v2586 = vunpack.c.l.b16 %v2508
    %v2587 = vunpack.c.h.b16 %v2508
    %v2588 = vunpack.c.l.b16 %v2509
    %v2589 = vunpack.c.h.b16 %v2509
    %v2590 = vunpack.c.l.b16 %v2510
    %v2591 = vunpack.c.h.b16 %v2510
    %v2592 = vunpack.c.l.b16 %v2511
    %v2593 = vunpack.c.h.b16 %v2511
    %v2594 = vunpack.c.l.b16 %v2512
    %v2595 = vunpack.c.h.b16 %v2512
    %v2596 = vunpack.c.l.b16 %v2513
    %v2597 = vunpack.c.h.b16 %v2513
    %v2598 = vunpack.c.l.b16 %v2514
    %v2599 = vunpack.c.h.b16 %v2514
    %v2600 = vunpack.c.l.b16 %v2515
    %v2601 = vunpack.c.h.b16 %v2515
    %v2602 = vunpack.c.l.b16 %v2516
    %v2603 = vunpack.c.h.b16 %v2516
    %v2604 = vunpack.c.l.b16 %v2517
    %v2605 = vunpack.c.h.b16 %v2517
    %v2606 = vunpack.c.l.b16 %v2518
    %v2607 = vunpack.c.h.b16 %v2518
    %v2608 = vunpack.c.l.b16 %v2519
    %v2609 = vunpack.c.h.b16 %v2519
    %v2610 = vunpack.c.l.b16 %v2520
    %v2611 = vunpack.c.h.b16 %v2520
    %v2612 = vunpack.c.l.b16 %v2521
    %v2613 = vunpack.c.h.b16 %v2521
    %v2614 = vunpack.c.l.b16 %v2522
    %v2615 = vunpack.c.h.b16 %v2522
    %v2616 = vunpack.c.l.b16 %v2523
    %v2617 = vunpack.c.h.b16 %v2523
    %v2618 = vunpack.c.l.b16 %v2524
    %v2619 = vunpack.c.h.b16 %v2524
    %v2620 = vunpack.c.l.b16 %v2525
    %v2621 = vunpack.c.h.b16 %v2525
    %v2622 = vpack.c.b16 %v2562, %v2558
    %v2623 = vpack.c.b16 %v2563, %v2559
    %v2624 = vpack.c.b16 %v2564, %v2560
    %v2625 = vpack.c.b16 %v2565, %v2561
    %v2626 = vpack.c.b16 %v2570, %v2566
    %v2627 = vpack.c.b16 %v2571, %v2567
    %v2628 = vpack.c.b16 %v2572, %v2568
    %v2629 = vpack.c.b16 %v2573, %v2569
    %v2630 = vpack.c.b16 %v2578, %v2574
    %v2631 = vpack.c.b16 %v2579, %v2575
    %v2632 = vpack.c.b16 %v2580, %v2576
    %v2633 = vpack.c.b16 %v2581, %v2577
    %v2634 = vpack.c.b16 %v2586, %v2582
    %v2635 = vpack.c.b16 %v2587, %v2583
    %v2636 = vpack.c.b16 %v2588, %v2584
    %v2637 = vpack.c.b16 %v2589, %v2585
    %v2638 = vpack.c.b16 %v2594, %v2590
    %v2639 = vpack.c.b16 %v2595, %v2591
    %v2640 = vpack.c.b16 %v2596, %v2592
    %v2641 = vpack.c.b16 %v2597, %v2593
    %v2642 = vpack.c.b16 %v2602, %v2598
    %v2643 = vpack.c.b16 %v2603, %v2599
    %v2644 = vpack.c.b16 %v2604, %v2600
    %v2645 = vpack.c.b16 %v2605, %v2601
    %v2646 = vpack.c.b16 %v2610, %v2606
    %v2647 = vpack.c.b16 %v2611, %v2607
    %v2648 = vpack.c.b16 %v2612, %v2608
    %v2649 = vpack.c.b16 %v2613, %v2609
    %v2650 = vpack.c.b16 %v2618, %v2614
    %v2651 = vpack.c.b16 %v2619, %v2615
    %v2652 = vpack.c.b16 %v2620, %v2616
    %v2653 = vpack.c.b16 %v2621, %v2617
    %2686 = vmatprep.subr.bf16.mxu0 %v2651
    %2687 = vmatpush1.bf16.msra.mxu0 %v2650
    %2688 = vmatprep.subr.bf16.mxu0 %v2647
    %2689 = vmatpush1.bf16.msra.mxu0 %v2646
    %2690 = vmatprep.subr.bf16.mxu0 %v2643
    %2691 = vmatpush1.bf16.msra.mxu0 %v2642
    %2692 = vmatprep.subr.bf16.mxu0 %v2639
    %2693 = vmatpush1.bf16.msra.mxu0 %v2638
    %2694 = vmatprep.subr.bf16.mxu0 %v2635
    %2695 = vmatpush1.bf16.msra.mxu0 %v2634
    %2696 = vmatprep.subr.bf16.mxu0 %v2631
    %2697 = vmatpush1.bf16.msra.mxu0 %v2630
    %2698 = vmatprep.subr.bf16.mxu0 %v2627
    %2699 = vmatpush1.bf16.msra.mxu0 %v2626
    %2700 = vmatprep.subr.bf16.mxu0 %v2623
    %2701 = vmatpush1.bf16.msra.mxu0 %v2622
    %2702 = vmatprep.subr.bf16.mxu0 0
    %2703 = vmatpush2.bf16.msra.mxu0 0
    %2704 = vmatprep.subr.bf16.mxu0 0
    %2705 = vmatpush2.bf16.msra.mxu0 0
    %2706 = vmatprep.subr.bf16.mxu0 0
    %2707 = vmatpush2.bf16.msra.mxu0 0
    %2708 = vmatprep.subr.bf16.mxu0 0
    %2709 = vmatpush2.bf16.msra.mxu0 0
    %2710 = vmatprep.subr.bf16.mxu0 0
    %2711 = vmatpush2.bf16.msra.mxu0 0
    %2712 = vmatprep.subr.bf16.mxu0 0
    %2713 = vmatpush2.bf16.msra.mxu0 0
    %2714 = vmatprep.subr.bf16.mxu0 0
    %2715 = vmatpush2.bf16.msra.mxu0 0
    %2716 = vmatprep.subr.bf16.mxu0 0
    %2717 = vmatpush2.bf16.msra.mxu0 0
    %2718 = vmatprep.mubr.bf16.mxu0 0
    %2719 = vmatmul.mubr.bf16.gmra.mxu0 %v2493
    %v2720 = vpop.f32.mrf.mxu0
    %v2721 = vadd.f32 0.0, %v2720
    %v2722 = vpop.f32.mrf.mxu0
    %v2723 = vadd.f32 0.0, %v2722
    %v2724 = vpop.f32.mrf.mxu0
    %v2725 = vpop.f32.mrf.mxu0
    %2726 = vdwg.mxu0
    %2727 = vmatprep.subr.bf16.mxu0 %v2653
    %2728 = vmatpush1.bf16.msra.mxu0 %v2652
    %2729 = vmatprep.subr.bf16.mxu0 %v2649
    %2730 = vmatpush1.bf16.msra.mxu0 %v2648
    %2731 = vmatprep.subr.bf16.mxu0 %v2645
    %2732 = vmatpush1.bf16.msra.mxu0 %v2644
    %2733 = vmatprep.subr.bf16.mxu0 %v2641
    %2734 = vmatpush1.bf16.msra.mxu0 %v2640
    %2735 = vmatprep.subr.bf16.mxu0 %v2637
    %2736 = vmatpush1.bf16.msra.mxu0 %v2636
    %2737 = vmatprep.subr.bf16.mxu0 %v2633
    %2738 = vmatpush1.bf16.msra.mxu0 %v2632
    %2739 = vmatprep.subr.bf16.mxu0 %v2629
    %2740 = vmatpush1.bf16.msra.mxu0 %v2628
    %2741 = vmatprep.subr.bf16.mxu0 %v2625
    %2742 = vmatpush1.bf16.msra.mxu0 %v2624
    %2743 = vmatprep.subr.bf16.mxu0 0
    %2744 = vmatpush2.bf16.msra.mxu0 0
    %2745 = vmatprep.subr.bf16.mxu0 0
    %2746 = vmatpush2.bf16.msra.mxu0 0
    %2747 = vmatprep.subr.bf16.mxu0 0
    %2748 = vmatpush2.bf16.msra.mxu0 0
    %2749 = vmatprep.subr.bf16.mxu0 0
    %2750 = vmatpush2.bf16.msra.mxu0 0
    %2751 = vmatprep.subr.bf16.mxu0 0
    %2752 = vmatpush2.bf16.msra.mxu0 0
    %2753 = vmatprep.subr.bf16.mxu0 0
    %2754 = vmatpush2.bf16.msra.mxu0 0
    %2755 = vmatprep.subr.bf16.mxu0 0
    %2756 = vmatpush2.bf16.msra.mxu0 0
    %2757 = vmatprep.subr.bf16.mxu0 0
    %2758 = vmatpush2.bf16.msra.mxu0 0
    %2759 = vmatprep.mubr.bf16.mxu0 0
    %2760 = vmatmul.mubr.bf16.gmra.mxu0 %v2493
    %v2761 = vpop.f32.mrf.mxu0
    %v2762 = vadd.f32 0.0, %v2761
    %v2763 = vpop.f32.mrf.mxu0
    %v2764 = vadd.f32 0.0, %v2763
    %v2765 = vpop.f32.mrf.mxu0
    %v2766 = vpop.f32.mrf.mxu0
    %2767 = vdwg.mxu0
    %v2768 = vadd.f32 %v2489, %v2721
    %v2769 = vadd.f32 %v2490, %v2723
    %v2770 = vadd.f32 %v2491, %v2762
    %v2771 = vadd.f32 %v2492, %v2764
    %v2772 = vxor.u32 %v2768, 2147483648
    %v2773 = vxor.u32 %v2769, 2147483648
    %v2774 = vxor.u32 %v2770, 2147483648
    %v2775 = vmul.f32 %v2772, 1.442695
    %v2776 = vpow.pop %v2775
    %v2777 = vmul.f32 %v2773, 1.442695
    %v2778 = vpow.pop %v2777
    %v2779 = vmul.f32 %v2774, 1.442695
    %v2780 = vpow.pop %v2779
    %v2781 = vadd.f32 %v2776, 1.0
    %v2782 = vadd.f32 %v2778, 1.0
    %v2783 = vadd.f32 %v2780, 1.0
    %v2784 = vrcp.pop %v2781
    %v2785 = vmul.f32 1.0, %v2784
    %v2786 = vrcp.pop %v2782
    %v2787 = vmul.f32 1.0, %v2786
    %v2788 = vrcp.pop %v2783
    %v2789 = vmul.f32 1.0, %v2788
    %v2790 = vtanh.pop %v2771
    %v2791 = vmul.f32 %v2787, %v2481
    %v2792 = vmul.f32 %v2785, %v2790
    %v2793 = vadd.f32 %v2791, %v2792
    %v2794 = vtanh.pop %v2793
    %v2795 = vmul.f32 %v2789, %v2794
    %s2796 = scalar_lea.vmem %s4, 56
    %2797 = vst [vmem:[%s2796] sm:$0xff] %v2795
    %2798 = vst [vmem:[#allocation2] sm:$0xff] %v2795
    %2799 = vst [vmem:[#allocation3] sm:$0xff] %v2793
    // Predicated region
    $region30: #{lstm_forward.2} parent=1 // pred_check
      _
    $region31: #{lstm_forward.2} parent=1 // pred_check_branch
      %2801 = sbr.rel (0) target = $region33
    $region32: #{lstm_forward.2} parent=1 // pred_region
      _
    $region33: #{lstm_forward.2} parent=1 // pred_fallthru
      _
    // Predicated region
    $region34: #{lstm_forward.2} parent=1 // pred_check
      _
    $region35: #{lstm_forward.2} parent=1 // pred_check_branch
      %2803 = sbr.rel (0) target = $region37
    $region36: #{lstm_forward.2} parent=1 // pred_region
      _
    $region37: #{lstm_forward.2} parent=1 // pred_fallthru
      _
    %2804 = vsyncpa [#allocation6], 1
    %2805 = vsyncpa [#allocation8], 1

</llo_original>
